<compile_context>
chip_gen: v7x
topology: tpu7x:2x2x1
jax: 0.10.0
libtpu: 0.0.40
codegen_flags: <defaults>
</compile_context>

<pallas_src>
import math

import jax
import jax.numpy as jnp
import numpy as np
from jax import lax
from jax.experimental import pallas as pl
from jax.experimental.pallas import tpu as pltpu

# ----------------------------- configuration --------------------------------
REGIONS = {
    'right_hand': list(range(0, 21)),
    'left_hand': list(range(21, 42)),
    'lips': list(range(42, 61)),
    'body': list(range(61, 86)),
}
NUM_REGIONS = len(REGIONS)
NUM_JOINTS = 86
GNN_HIDDEN = 8            # gnn_hidden_dim (small synthetic config)
GNN_FEAT = 4              # gnn_feature_dim
REGION_FEAT = 8           # region_feature_dim
NUM_GNN_LAYERS = 2
D_MODEL = REGION_FEAT * NUM_REGIONS          # 32
NUM_ENC_LAYERS = 1
ENC_HEADS = 4
DIM_FF = 64
NUM_DEC_LAYERS = 1
DEC_HEADS = 4
DEC_MLP_RATIO = 2
NUM_CLASSES = 11
CLS_PAD = 128             # lane-dense logits (classes padded 11 -> 128)
MAX_INPUT_LEN = 64
MAX_OUTPUT_LEN = 3
REFINE_ITERS = 1
NEG_INF = -1e30


# ----------------------------- in-kernel helpers -----------------------------
def _relu(x):
    return jnp.maximum(x, 0.0)


def _gelu(x):
    # erf-based GELU (torch nn.GELU default), Abramowitz & Stegun 7.1.26
    # rational approximation (|err| < 1.5e-7): only exp/mul/where needed.
    z = x * 0.7071067811865476
    a = jnp.abs(z)
    t = 1.0 / (1.0 + 0.3275911 * a)
    poly = t * (0.254829592 + t * (-0.284496736 + t * (1.421413741 +
               t * (-1.453152027 + t * 1.061405429))))
    erf_a = 1.0 - poly * jnp.exp(-a * a)
    erf_z = jnp.where(z < 0.0, -erf_a, erf_a)
    return 0.5 * x * (1.0 + erf_z)


def _ln(x, g, b, eps=1e-5):
    mu = jnp.mean(x, axis=-1, keepdims=True)
    var = jnp.mean(jnp.square(x - mu), axis=-1, keepdims=True)
    return (x - mu) * lax.rsqrt(var + eps) * g + b


def _dot(a, b):
    return jnp.dot(a, b, preferred_element_type=jnp.float32)


def _dot_t(a, b):
    # a @ b.T without materializing a transpose.
    return lax.dot_general(a, b, (((1,), (1,)), ((), ())),
                           preferred_element_type=jnp.float32)


def _softmax_last(s):
    s = s - jnp.max(s, axis=-1, keepdims=True)
    p = jnp.exp(s)
    return p / jnp.sum(p, axis=-1, keepdims=True)   # exact: argmax-safe


def _mha(x_q, x_kv, wqkv, bqkv, wo, bo, num_heads, bias=None, same=False):
    """Multi-head attention, packed QKV weights.  Per-head contexts are
    concatenated along lanes and projected with ONE [*, C]x[C, C] matmul."""
    C = wqkv.shape[0]
    Dh = C // num_heads
    scale = 1.0 / math.sqrt(Dh)
    if same:                                         # true self-attention
        qkv = _dot(x_q, wqkv) + bqkv
        q, k, v = qkv[:, :C], qkv[:, C:2 * C], qkv[:, 2 * C:]
    else:
        q = _dot(x_q, wqkv[:, :C]) + bqkv[:, :C]
        kv = _dot(x_kv, wqkv[:, C:]) + bqkv[:, C:]
        k, v = kv[:, :C], kv[:, C:]
    ctxs = []
    for h in range(num_heads):
        sl = slice(h * Dh, (h + 1) * Dh)
        s = _dot_t(q[:, sl], k[:, sl]) * scale
        if bias is not None:
            s = s + bias
        ctxs.append(_dot(_softmax_last(s), v[:, sl]))
    ctx = jnp.concatenate(ctxs, axis=-1)             # [Lq, C]
    return _dot(ctx, wo) + bo


def _argmax_onehot(logits):
    """Row-wise one-hot of the FIRST maximal entry (matches torch argmax)."""
    n = logits.shape[-1]
    idx = lax.broadcasted_iota(jnp.int32, logits.shape, 1).astype(jnp.float32)
    rowmax = jnp.max(logits, axis=-1, keepdims=True)
    cand = jnp.where(logits >= rowmax, idx, float(n))
    first = jnp.min(cand, axis=-1, keepdims=True)
    return (idx == first).astype(jnp.float32)


# ----------------------------- encoder kernel --------------------------------
def _encoder_kernel(x_ref, pe_ref, gmat_ref, attnb_ref,
                    sh1m_ref, sh1p_ref, pool1_ref, sh2m_ref, sh2p_ref, pool2_ref,
                    gnn_w1_ref, gnn_b1_ref, gnn_w2_ref, gnn_b2_ref,
                    proj_w_ref, proj_b_ref, proj_g_ref, proj_beta_ref,
                    enc_wqkv_ref, enc_bqkv_ref, enc_wo_ref, enc_bo_ref,
                    enc_ln_g_ref, enc_ln_b_ref,
                    enc_w1_ref, enc_b1_ref, enc_w2_ref, enc_b2_ref,
                    conv1_w_ref, conv1_b_ref, conv2_w_ref, conv2_b_ref,
                    mlp_w_ref, mlp_b_ref, mem_ref):
    # ---- region GNNs + projections, batch folded into rows ([B*T, ...]) ----
    # TODO(synk): RegionGNN source was not provided; modeled as mean-aggregation
    # GCN over the fully connected per-frame graph, with the per-region mean
    # over joints folded into gnn_w1 (exact under that assumption).
    x = x_ref[...]                                                 # [BT, 172]
    h = _relu(_dot(x, gnn_w1_ref[...]) + gnn_b1_ref[...])          # [BT, 32]
    h = _relu(_dot(h, gnn_w2_ref[...]) + gnn_b2_ref[...])          # [BT, 16]
    h = _dot(h, proj_w_ref[...]) + proj_b_ref[...]                 # [BT, 32]

    # per-region LayerNorm via host-precomputed group-averaging matrix
    gmat = gmat_ref[...]
    mu = _dot(h, gmat)
    d = h - mu
    var = _dot(d * d, gmat)                                        # two-pass
    h = d * lax.rsqrt(var + 1e-5) * proj_g_ref[...] + proj_beta_ref[...]
    x = _gelu(h) + pe_ref[...]                                     # [BT, 32]

    # ---- transformer encoder layer(s): post-norm, ReLU FFN ----
    attnb = attnb_ref[...]                                         # batch-block
    for li in range(NUM_ENC_LAYERS):
        gam = enc_ln_g_ref[li]
        bet = enc_ln_b_ref[li]
        attn = _mha(x, x, enc_wqkv_ref[li], enc_bqkv_ref[li],
                    enc_wo_ref[li], enc_bo_ref[li], ENC_HEADS,
                    bias=attnb, same=True)
        x = _ln(x + attn, gam[0:1], bet[0:1])
        f = _relu(_dot(x, enc_w1_ref[li]) + enc_b1_ref[li])
        f = _dot(f, enc_w2_ref[li]) + enc_b2_ref[li]
        x = _ln(x + f, gam[1:2], bet[1:2])

    # ---- temporal pooling: (Conv1d k3,p1 -> GELU -> AvgPool1d(2)) x 2 ----
    # Shift / pool matrices are host-built, block-diagonal per sample.
    def conv3(xin, shm, shp, w_ref, b_ref):
        y = _dot(xin, w_ref[1])
        y = y + _dot(_dot(shm, xin), w_ref[0])
        y = y + _dot(_dot(shp, xin), w_ref[2])
        return y + b_ref[...]

    x = _dot(pool1_ref[...],
             _gelu(conv3(x, sh1m_ref[...], sh1p_ref[...], conv1_w_ref, conv1_b_ref)))
    x = _dot(pool2_ref[...],
             _gelu(conv3(x, sh2m_ref[...], sh2p_ref[...], conv2_w_ref, conv2_b_ref)))

    # ---- MLP head producing the memory ----
    mem_ref[...] = _gelu(_dot(x, mlp_w_ref[...]) + mlp_b_ref[...])


# ----------------------------- decoder kernel --------------------------------
# One grid step = one batch sample.  Runs the ENTIRE greedy AR loop (in-kernel
# argmax/one-hot, EOS cumsum) plus the refinement iteration(s) in one launch.
def _decoder_kernel(mem_ref, posq_ref, temb_ref, bos_ref, eosoh_ref,
                    ln_g_ref, ln_b_ref,
                    sa_wqkv_ref, sa_bqkv_ref, sa_wo_ref, sa_bo_ref,
                    ca_wqkv_ref, ca_bqkv_ref, ca_wo_ref, ca_bo_ref,
                    ff_w1_ref, ff_b1_ref, ff_w2_ref, ff_b2_ref,
                    fn_g_ref, fn_b_ref, out_w_ref, out_b_ref, out_ref):
    S = posq_ref.shape[0]
    mem = mem_ref[...]                     # [Tm, C]
    posq = posq_ref[...]                   # [S, C]
    temb = temb_ref[...]                   # [CLS_PAD, C]  (already sqrt(C)-scaled)
    bos_row = bos_ref[...]                 # [1, C]        sqrt(C)*emb(bos)
    eos_oh = eosoh_ref[...]                # [1, CLS_PAD]  one-hot of eos id

    def dec_stack(q, cont, q_bias, c_bias):
        c = cont
        for li in range(NUM_DEC_LAYERS):
            gam = ln_g_ref[li]             # rows: norm_q, norm_c, norm1, norm2
            bet = ln_b_ref[li]
            saw, sab = sa_wqkv_ref[li], sa_bqkv_ref[li]
            sao, saob = sa_wo_ref[li], sa_bo_ref[li]
            caw, cab = ca_wqkv_ref[li], ca_bqkv_ref[li]
            cao, caob = ca_wo_ref[li], ca_bo_ref[li]
            w1, b1 = ff_w1_ref[li], ff_b1_ref[li]
            w2, b2 = ff_w2_ref[li], ff_b2_ref[li]

            def stream(t, t_norm, t_kv, bias):
                t = t + _mha(t_norm, t_kv, saw, sab, sao, saob, DEC_HEADS,
                             bias=bias)
                t = t + _mha(_ln(t, gam[2:3], bet[2:3]), mem,
                             caw, cab, cao, caob, DEC_HEADS)
                ffh = _gelu(_dot(_ln(t, gam[3:4], bet[3:4]), w1) + b1)
                return t + _dot(ffh, w2) + b2

            q_norm = _ln(q, gam[0:1], bet[0:1])
            c_norm = _ln(c, gam[1:2], bet[1:2])
            q = stream(q, q_norm, c_norm, q_bias)
            if li < NUM_DEC_LAYERS - 1:
                c = stream(c, c_norm, c_norm, c_bias)   # content-stream update
        return _ln(q, fn_g_ref[...], fn_b_ref[...])

    # ---- greedy AR loop (statically unrolled; per-step query mask is empty) --
    logits_rows = []
    cont_rows = [bos_row]
    for i in range(S):
        cont = (jnp.concatenate(cont_rows, axis=0)
                if len(cont_rows) > 1 else cont_rows[0])            # [i+1, C]
        if NUM_DEC_LAYERS > 1:
            j = i + 1
            rr = lax.broadcasted_iota(jnp.int32, (j, j), 0)
            cc = lax.broadcasted_iota(jnp.int32, (j, j), 1)
            c_bias = jnp.where(cc > rr, NEG_INF, 0.0)
        else:
            c_bias = None
        qh = dec_stack(posq[i:i + 1, :], cont, None, c_bias)        # [1, C]
        row_logits = _dot(qh, out_w_ref[...]) + out_b_ref[...]      # [1, CLS_PAD]
        logits_rows.append(row_logits)
        if i + 1 < S:
            nxt_oh = _argmax_onehot(row_logits)                     # [1, CLS_PAD]
            cont_rows.append(_dot(nxt_oh, temb) + posq[i:i + 1, :])
    logits = (jnp.concatenate(logits_rows, axis=0)
              if len(logits_rows) > 1 else logits_rows[0])          # [S, CLS_PAD]

    # ---- refinement iteration(s): cloze mask (only next position masked) ----
    if REFINE_ITERS:
        rr = lax.broadcasted_iota(jnp.int32, (S, S), 0)
        cc = lax.broadcasted_iota(jnp.int32, (S, S), 1)
        q_struct = jnp.where(cc == rr + 1, NEG_INF, 0.0)
        if S > 1:
            tri = (lax.broadcasted_iota(jnp.int32, (S - 1, S), 0) + 1 <=
                   lax.broadcasted_iota(jnp.int32, (S - 1, S), 1)).astype(jnp.float32)
        for _ in range(REFINE_ITERS):
            if S > 1:
                oh = _argmax_onehot(logits[:S - 1, :])              # [S-1, CLS_PAD]
                cont = jnp.concatenate(
                    [bos_row, _dot(oh, temb) + posq[:S - 1, :]], axis=0)
                eos_hit = _dot_t(eos_oh, oh)                        # [1, S-1]
                cums = _dot(eos_hit, tri)                           # [1, S]
                kpm_row = jnp.where(cums > 0.0, NEG_INF, 0.0)
            else:
                cont = bos_row
                kpm_row = jnp.zeros((1, S), jnp.float32)
            q_bias = q_struct + kpm_row
            c_bias = q_bias if NUM_DEC_LAYERS > 1 else None
            qh = dec_stack(posq, cont, q_bias, c_bias)              # [S, C]
            logits = _dot(qh, out_w_ref[...]) + out_b_ref[...]      # [S, CLS_PAD]

    out_ref[...] = logits


# ----------------------------- pallas_call wrappers ---------------------------
def _full_spec(a):
    nd = a.ndim
    return pl.BlockSpec(tuple(a.shape), lambda b, _nd=nd: (0,) * _nd)


def _encode_impl(packed, poses):
    B, T, J, D2 = poses.shape
    assert T % 4 == 0, "T must be divisible by 4 (two AvgPool1d(2) stages)"
    BT = B * T
    x = poses.reshape(BT, J * D2)                                  # [BT, 172]
    pe_rep = jnp.tile(packed['pe'][:T], (B, 1))                    # [BT, 32]

    # host-built (trace-time) constants; block-diagonal per sample so the
    # batch can live on the row axis without cross-sample leakage.
    samp = np.repeat(np.arange(B), T)
    attnb = np.where(samp[:, None] == samp[None, :], 0.0, NEG_INF).astype(np.float32)

    def shifts(n_per, nb):
        rows = nb * n_per
        sm = np.zeros((rows, rows), np.float32)
        sp = np.zeros((rows, rows), np.float32)
        for i in range(rows):
            if i % n_per != 0:
                sm[i, i - 1] = 1.0            # tap 0 reads x[t-1] (zero at edge)
            if (i + 1) % n_per != 0:
                sp[i, i + 1] = 1.0            # tap 2 reads x[t+1] (zero at edge)
        return sm, sp

    def pool_mat(n):
        p = np.zeros((n // 2, n), np.float32)
        r = np.arange(n // 2)
        p[r, 2 * r] = 0.5
        p[r, 2 * r + 1] = 0.5
        return p

    sh1m, sh1p = shifts(T, B)
    sh2m, sh2p = shifts(T // 2, B)
    pool1 = pool_mat(BT)
    pool2 = pool_mat(BT // 2)

    weights = (packed['gnn_w1'], packed['gnn_b1'], packed['gnn_w2'],
               packed['gnn_b2'], packed['proj_w'], packed['proj_b'],
               packed['proj_g'], packed['proj_beta'],
               packed['enc_wqkv'], packed['enc_bqkv'], packed['enc_wo'],
               packed['enc_bo'], packed['enc_ln_g'], packed['enc_ln_b'],
               packed['enc_w1'], packed['enc_b1'], packed['enc_w2'],
               packed['enc_b2'],
               packed['conv1_w'], packed['conv1_b'], packed['conv2_w'],
               packed['conv2_b'], packed['mlp_w'], packed['mlp_b'])
    args = (x, pe_rep, packed['gmat'], attnb,
            sh1m, sh1p, pool1, sh2m, sh2p, pool2) + weights
    mem = pl.pallas_call(
        _encoder_kernel,
        grid=(1,),
        out_shape=jax.ShapeDtypeStruct((BT // 4, D_MODEL), jnp.float32),
        in_specs=[_full_spec(a) for a in args],
        out_specs=pl.BlockSpec((BT // 4, D_MODEL), lambda b: (0, 0)),
        compiler_params=pltpu.CompilerParams(
            dimension_semantics=("arbitrary",)),
    )(*args)
    return mem.reshape(B, T // 4, D_MODEL)


encode = jax.jit(_encode_impl)


def _decode_impl(packed, memory, num_steps, bos_id, eos_id):
    B, Tm, _ = memory.shape
    posq = packed['pos_queries'][0, :num_steps]                    # [S, 32]
    temb = packed['tok_emb_pad']                                   # [128, 32]
    bos_ctx = temb[bos_id:bos_id + 1, :]                           # [1, 32]
    eos_oh = (jnp.arange(CLS_PAD) == eos_id).astype(jnp.float32)[None, :]

    weights = (packed['dec_ln_g'], packed['dec_ln_b'],
               packed['sa_wqkv'], packed['sa_bqkv'], packed['sa_wo'],
               packed['sa_bo'],
               packed['ca_wqkv'], packed['ca_bqkv'], packed['ca_wo'],
               packed['ca_bo'],
               packed['ff_w1'], packed['ff_b1'], packed['ff_w2'],
               packed['ff_b2'],
               packed['dec_norm_g'], packed['dec_norm_b'],
               packed['out_w_pad'], packed['out_b_pad'])
    in_specs = ([pl.BlockSpec((None, Tm, D_MODEL), lambda b: (b, 0, 0))] +
                [_full_spec(a) for a in (posq, temb, bos_ctx, eos_oh) + weights])
    out = pl.pallas_call(
        _decoder_kernel,
        grid=(B,),
        out_shape=jax.ShapeDtypeStruct((B, num_steps, CLS_PAD), jnp.float32),
        in_specs=in_specs,
        out_specs=pl.BlockSpec((None, num_steps, CLS_PAD), lambda b: (b, 0, 0)),
        compiler_params=pltpu.CompilerParams(
            dimension_semantics=("parallel",)),
    )(memory, posq, temb, bos_ctx, eos_oh, *weights)
    return out[:, :, :NUM_CLASSES]


decode = jax.jit(_decode_impl, static_argnums=(2, 3, 4))


# ----------------------------- full forward -----------------------------------
class Tokenizer:
    def __init__(self, bos_id, eos_id, pad_id):
        self.bos_id, self.eos_id, self.pad_id = bos_id, eos_id, pad_id


def forward(packed, tokenizer, poses, max_length=None):
    # TODO(synk): the PyTorch testing-mode early-exit (break once every sample
    # emitted EOS, which also shortens the refine input) is not replicated;
    # the fused decode always runs all num_steps positions.
    max_length = (MAX_OUTPUT_LEN if max_length is None
                  else min(max_length, MAX_OUTPUT_LEN))
    num_steps = max_length + 1
    memory = encode(packed, poses)                                 # [B, T/4, C]
    return decode(packed, memory, num_steps,
                  int(tokenizer.bos_id), int(tokenizer.eos_id))


# ----------------------------- parameters -------------------------------------
def make_positional_encoding(d_model, max_len):
    pos = jnp.arange(max_len, dtype=jnp.float32)[:, None]
    div = jnp.exp(jnp.arange(0, d_model, 2, dtype=jnp.float32) *
                  (-math.log(10000.0) / d_model))
    pe = jnp.zeros((max_len, d_model), jnp.float32)
    pe = pe.at[:, 0::2].set(jnp.sin(pos * div))
    pe = pe.at[:, 1::2].set(jnp.cos(pos * div))
    return pe[None]


def build_params(key):
    keys = iter(jax.random.split(key, 256))

    def nrm(*shape, scale=0.02):
        return scale * jax.random.normal(next(keys), shape, jnp.float32)

    def zeros(*shape):
        return jnp.zeros(shape, jnp.float32)

    def ones(*shape):
        return jnp.ones(shape, jnp.float32)

    def attn(d):
        return dict(wq=nrm(d, d), wk=nrm(d, d), wv=nrm(d, d), wo=nrm(d, d),
                    bq=zeros(d), bk=zeros(d), bv=zeros(d), bo=zeros(d))

    params = {'region_enc': {}, 'region_proj': {}}
    for name, idxs in REGIONS.items():
        jr = len(idxs)
        dims = [2] + [GNN_HIDDEN] * (NUM_GNN_LAYERS - 1) + [GNN_FEAT]
        params['region_enc'][name] = {
            'layers': [dict(w=nrm(dims[i], dims[i + 1]), b=zeros(dims[i + 1]))
                       for i in range(NUM_GNN_LAYERS)]}
        params['region_proj'][name] = dict(
            w=nrm(jr * GNN_FEAT, REGION_FEAT), b=zeros(REGION_FEAT),
            ln_g=ones(REGION_FEAT), ln_b=zeros(REGION_FEAT))
    params['pe'] = make_positional_encoding(D_MODEL, MAX_INPUT_LEN)
    params['enc_layers'] = [dict(
        attn=attn(D_MODEL),
        ln1_g=ones(D_MODEL), ln1_b=zeros(D_MODEL),
        w1=nrm(D_MODEL, DIM_FF), b1=zeros(DIM_FF),
        w2=nrm(DIM_FF, D_MODEL), b2=zeros(D_MODEL),
        ln2_g=ones(D_MODEL), ln2_b=zeros(D_MODEL)) for _ in range(NUM_ENC_LAYERS)]
    params['pool'] = dict(
        conv1_w=nrm(3, D_MODEL, D_MODEL), conv1_b=zeros(D_MODEL),
        conv2_w=nrm(3, D_MODEL, D_MODEL), conv2_b=zeros(D_MODEL))
    params['mlp_w'] = nrm(D_MODEL, D_MODEL)
    params['mlp_b'] = zeros(D_MODEL)
    params['tok_emb'] = nrm(NUM_CLASSES, D_MODEL, scale=1.0)
    params['dec_layers'] = [dict(
        nq_g=ones(D_MODEL), nq_b=zeros(D_MODEL),
        nc_g=ones(D_MODEL), nc_b=zeros(D_MODEL),
        self_attn=attn(D_MODEL), cross_attn=attn(D_MODEL),
        n1_g=ones(D_MODEL), n1_b=zeros(D_MODEL),
        n2_g=ones(D_MODEL), n2_b=zeros(D_MODEL),
        ff_w1=nrm(D_MODEL, D_MODEL * DEC_MLP_RATIO),
        ff_b1=zeros(D_MODEL * DEC_MLP_RATIO),
        ff_w2=nrm(D_MODEL * DEC_MLP_RATIO, D_MODEL),
        ff_b2=zeros(D_MODEL)) for _ in range(NUM_DEC_LAYERS)]
    params['dec_norm_g'] = ones(D_MODEL)
    params['dec_norm_b'] = zeros(D_MODEL)
    params['out_w'] = nrm(D_MODEL, NUM_CLASSES)
    params['out_b'] = zeros(NUM_CLASSES)
    params['pos_queries'] = nrm(1, MAX_OUTPUT_LEN + 1, D_MODEL, scale=1.0)
    return params


def pack_params(p):
    """Torch-like parameter tree -> packed / block-diagonal / stacked / padded
    layout consumed by the fused kernels (host-side, done once)."""
    assert NUM_GNN_LAYERS == 2

    def row(x):
        return jnp.asarray(x, jnp.float32).reshape(1, -1)

    nr = NUM_REGIONS
    # region-mean-over-joints folding matrix  A: [J*2, 2*nr]
    A = np.zeros((NUM_JOINTS * 2, 2 * nr), np.float32)
    w1 = np.zeros((2 * nr, GNN_HIDDEN * nr), np.float32)
    b1 = np.zeros((GNN_HIDDEN * nr,), np.float32)
    w2 = np.zeros((GNN_HIDDEN * nr, GNN_FEAT * nr), np.float32)
    b2 = np.zeros((GNN_FEAT * nr,), np.float32)
    wp = np.zeros((GNN_FEAT * nr, REGION_FEAT * nr), np.float32)
    bp = np.zeros((REGION_FEAT * nr,), np.float32)
    lng = np.zeros((REGION_FEAT * nr,), np.float32)
    lnb = np.zeros((REGION_FEAT * nr,), np.float32)
    for r, (name, idxs) in enumerate(REGIONS.items()):
        enc = p['region_enc'][name]
        proj = p['region_proj'][name]
        for j in idxs:
            A[2 * j, 2 * r] = 1.0 / len(idxs)
            A[2 * j + 1, 2 * r + 1] = 1.0 / len(idxs)
        w1[2 * r:2 * r + 2, GNN_HIDDEN * r:GNN_HIDDEN * (r + 1)] = \
            np.asarray(enc['layers'][0]['w'])
        b1[GNN_HIDDEN * r:GNN_HIDDEN * (r + 1)] = np.asarray(enc['layers'][0]['b'])
        w2[GNN_HIDDEN * r:GNN_HIDDEN * (r + 1), GNN_FEAT * r:GNN_FEAT * (r + 1)] = \
            np.asarray(enc['layers'][1]['w'])
        b2[GNN_FEAT * r:GNN_FEAT * (r + 1)] = np.asarray(enc['layers'][1]['b'])
        # all joints in a region share the same GNN feature -> projection
        # collapses to the per-joint-block sum of the projection weight.
        jr = len(idxs)
        weff = np.asarray(proj['w']).reshape(jr, GNN_FEAT, REGION_FEAT).sum(axis=0)
        wp[GNN_FEAT * r:GNN_FEAT * (r + 1), REGION_FEAT * r:REGION_FEAT * (r + 1)] = weff
        bp[REGION_FEAT * r:REGION_FEAT * (r + 1)] = np.asarray(proj['b'])
        lng[REGION_FEAT * r:REGION_FEAT * (r + 1)] = np.asarray(proj['ln_g'])
        lnb[REGION_FEAT * r:REGION_FEAT * (r + 1)] = np.asarray(proj['ln_b'])

    # grouped-LayerNorm averaging matrix (per REGION_FEAT-wide lane group)
    gmat = np.zeros((D_MODEL, D_MODEL), np.float32)
    for r in range(nr):
        gmat[REGION_FEAT * r:REGION_FEAT * (r + 1),
             REGION_FEAT * r:REGION_FEAT * (r + 1)] = 1.0 / REGION_FEAT

    packed = dict(
        gnn_w1=jnp.asarray(A @ w1), gnn_b1=row(b1),     # region-mean folded in
        gnn_w2=jnp.asarray(w2), gnn_b2=row(b2),
        proj_w=jnp.asarray(wp), proj_b=row(bp),
        proj_g=row(lng), proj_beta=row(lnb),
        gmat=jnp.asarray(gmat),
        pe=jnp.asarray(p['pe'][0]),
    )

    def pack_attn(a):
        wqkv = jnp.concatenate([a['wq'], a['wk'], a['wv']], axis=1)
        bqkv = jnp.concatenate([a['bq'], a['bk'], a['bv']]).reshape(1, -1)
        return wqkv, bqkv, a['wo'], a['bo'].reshape(1, -1)

    enc = [pack_attn(l['attn']) for l in p['enc_layers']]
    packed['enc_wqkv'] = jnp.stack([e[0] for e in enc])
    packed['enc_bqkv'] = jnp.stack([e[1] for e in enc])
    packed['enc_wo'] = jnp.stack([e[2] for e in enc])
    packed['enc_bo'] = jnp.stack([e[3] for e in enc])
    packed['enc_ln_g'] = jnp.stack(
        [jnp.stack([l['ln1_g'], l['ln2_g']]) for l in p['enc_layers']])
    packed['enc_ln_b'] = jnp.stack(
        [jnp.stack([l['ln1_b'], l['ln2_b']]) for l in p['enc_layers']])
    packed['enc_w1'] = jnp.stack([l['w1'] for l in p['enc_layers']])
    packed['enc_b1'] = jnp.stack([l['b1'].reshape(1, -1) for l in p['enc_layers']])
    packed['enc_w2'] = jnp.stack([l['w2'] for l in p['enc_layers']])
    packed['enc_b2'] = jnp.stack([l['b2'].reshape(1, -1) for l in p['enc_layers']])

    packed['conv1_w'] = p['pool']['conv1_w']
    packed['conv1_b'] = row(p['pool']['conv1_b'])
    packed['conv2_w'] = p['pool']['conv2_w']
    packed['conv2_b'] = row(p['pool']['conv2_b'])
    packed['mlp_w'] = p['mlp_w']
    packed['mlp_b'] = row(p['mlp_b'])

    # token embedding: sqrt(C) scale folded in, padded 11 -> 128 rows
    temb = np.zeros((CLS_PAD, D_MODEL), np.float32)
    temb[:NUM_CLASSES] = np.asarray(p['tok_emb']) * math.sqrt(D_MODEL)
    packed['tok_emb_pad'] = jnp.asarray(temb)
    packed['pos_queries'] = p['pos_queries']

    sa = [pack_attn(l['self_attn']) for l in p['dec_layers']]
    ca = [pack_attn(l['cross_attn']) for l in p['dec_layers']]
    packed['sa_wqkv'] = jnp.stack([e[0] for e in sa])
    packed['sa_bqkv'] = jnp.stack([e[1] for e in sa])
    packed['sa_wo'] = jnp.stack([e[2] for e in sa])
    packed['sa_bo'] = jnp.stack([e[3] for e in sa])
    packed['ca_wqkv'] = jnp.stack([e[0] for e in ca])
    packed['ca_bqkv'] = jnp.stack([e[1] for e in ca])
    packed['ca_wo'] = jnp.stack([e[2] for e in ca])
    packed['ca_bo'] = jnp.stack([e[3] for e in ca])
    packed['dec_ln_g'] = jnp.stack(
        [jnp.stack([l['nq_g'], l['nc_g'], l['n1_g'], l['n2_g']])
         for l in p['dec_layers']])
    packed['dec_ln_b'] = jnp.stack(
        [jnp.stack([l['nq_b'], l['nc_b'], l['n1_b'], l['n2_b']])
         for l in p['dec_layers']])
    packed['ff_w1'] = jnp.stack([l['ff_w1'] for l in p['dec_layers']])
    packed['ff_b1'] = jnp.stack([l['ff_b1'].reshape(1, -1) for l in p['dec_layers']])
    packed['ff_w2'] = jnp.stack([l['ff_w2'] for l in p['dec_layers']])
    packed['ff_b2'] = jnp.stack([l['ff_b2'].reshape(1, -1) for l in p['dec_layers']])
    packed['dec_norm_g'] = row(p['dec_norm_g'])
    packed['dec_norm_b'] = row(p['dec_norm_b'])

    # lane-dense output projection: classes padded 11 -> 128; padded columns get
    # a hugely negative bias so the in-kernel argmax can never select them.
    ow = np.zeros((D_MODEL, CLS_PAD), np.float32)
    ow[:, :NUM_CLASSES] = np.asarray(p['out_w'])
    ob = np.full((1, CLS_PAD), NEG_INF, np.float32)
    ob[0, :NUM_CLASSES] = np.asarray(p['out_b'])
    packed['out_w_pad'] = jnp.asarray(ow)
    packed['out_b_pad'] = jnp.asarray(ob)
    return packed


# ----------------------------- main --------------------------------------------
if __name__ == "__main__":
    root = jax.random.PRNGKey(0)
    pkey, dkey = jax.random.split(root)
    params = build_params(pkey)
    packed = pack_params(params)

    B, T, J, D = 2, 8, 86, 2          # T must be divisible by 4 (two avg-pools)
    poses = jax.random.normal(dkey, (B, T, J, D), jnp.float32)
    tok = Tokenizer(bos_id=NUM_CLASSES - 2, eos_id=0, pad_id=NUM_CLASSES - 1)

    logits = forward(packed, tok, poses, max_length=MAX_OUTPUT_LEN)
    logits = jax.block_until_ready(logits)
    assert logits.shape == (B, MAX_OUTPUT_LEN + 1, NUM_CLASSES)
    assert bool(jnp.all(jnp.isfinite(logits)))
    print("KERNEL_OK")
</pallas_src>

<mosaic_0001>
module attributes {stable_mosaic.version = 11 : i64} {
  func.func @_encoder_kernel(%arg0: i32, %arg1: memref<16x172xf32, #tpu.memory_space<vmem>>, %arg2: memref<16x32xf32, #tpu.memory_space<vmem>>, %arg3: memref<32x32xf32, #tpu.memory_space<vmem>>, %arg4: memref<16x16xf32, #tpu.memory_space<vmem>>, %arg5: memref<16x16xf32, #tpu.memory_space<vmem>>, %arg6: memref<16x16xf32, #tpu.memory_space<vmem>>, %arg7: memref<8x16xf32, #tpu.memory_space<vmem>>, %arg8: memref<8x8xf32, #tpu.memory_space<vmem>>, %arg9: memref<8x8xf32, #tpu.memory_space<vmem>>, %arg10: memref<4x8xf32, #tpu.memory_space<vmem>>, %arg11: memref<172x32xf32, #tpu.memory_space<vmem>>, %arg12: memref<1x32xf32, #tpu.memory_space<vmem>>, %arg13: memref<32x16xf32, #tpu.memory_space<vmem>>, %arg14: memref<1x16xf32, #tpu.memory_space<vmem>>, %arg15: memref<16x32xf32, #tpu.memory_space<vmem>>, %arg16: memref<1x32xf32, #tpu.memory_space<vmem>>, %arg17: memref<1x32xf32, #tpu.memory_space<vmem>>, %arg18: memref<1x32xf32, #tpu.memory_space<vmem>>, %arg19: memref<1x32x96xf32, #tpu.memory_space<vmem>>, %arg20: memref<1x1x96xf32, #tpu.memory_space<vmem>>, %arg21: memref<1x32x32xf32, #tpu.memory_space<vmem>>, %arg22: memref<1x1x32xf32, #tpu.memory_space<vmem>>, %arg23: memref<1x2x32xf32, #tpu.memory_space<vmem>>, %arg24: memref<1x2x32xf32, #tpu.memory_space<vmem>>, %arg25: memref<1x32x64xf32, #tpu.memory_space<vmem>>, %arg26: memref<1x1x64xf32, #tpu.memory_space<vmem>>, %arg27: memref<1x64x32xf32, #tpu.memory_space<vmem>>, %arg28: memref<1x1x32xf32, #tpu.memory_space<vmem>>, %arg29: memref<3x32x32xf32, #tpu.memory_space<vmem>>, %arg30: memref<1x32xf32, #tpu.memory_space<vmem>>, %arg31: memref<3x32x32xf32, #tpu.memory_space<vmem>>, %arg32: memref<1x32xf32, #tpu.memory_space<vmem>>, %arg33: memref<32x32xf32, #tpu.memory_space<vmem>>, %arg34: memref<1x32xf32, #tpu.memory_space<vmem>>, %arg35: memref<4x32xf32, #tpu.memory_space<vmem>>) attributes {dimension_semantics = [#tpu.dimension_semantics<arbitrary>], iteration_bounds = array<i64: 1>, scalar_prefetch = 0 : i64, scratch_operands = 0 : i64, tpu.core_type = #tpu.core_type<tc>, window_params = [{pipeline_mode = #tpu.pipeline_mode<synchronous>, transform_indices = @transform_0, window_bounds = array<i64: 16, 172>}, {pipeline_mode = #tpu.pipeline_mode<synchronous>, transform_indices = @transform_1, window_bounds = array<i64: 16, 32>}, {pipeline_mode = #tpu.pipeline_mode<synchronous>, transform_indices = @transform_2, window_bounds = array<i64: 32, 32>}, {pipeline_mode = #tpu.pipeline_mode<synchronous>, transform_indices = @transform_3, window_bounds = array<i64: 16, 16>}, {pipeline_mode = #tpu.pipeline_mode<synchronous>, transform_indices = @transform_4, window_bounds = array<i64: 16, 16>}, {pipeline_mode = #tpu.pipeline_mode<synchronous>, transform_indices = @transform_5, window_bounds = array<i64: 16, 16>}, {pipeline_mode = #tpu.pipeline_mode<synchronous>, transform_indices = @transform_6, window_bounds = array<i64: 8, 16>}, {pipeline_mode = #tpu.pipeline_mode<synchronous>, transform_indices = @transform_7, window_bounds = array<i64: 8, 8>}, {pipeline_mode = #tpu.pipeline_mode<synchronous>, transform_indices = @transform_8, window_bounds = array<i64: 8, 8>}, {pipeline_mode = #tpu.pipeline_mode<synchronous>, transform_indices = @transform_9, window_bounds = array<i64: 4, 8>}, {pipeline_mode = #tpu.pipeline_mode<synchronous>, transform_indices = @transform_10, window_bounds = array<i64: 172, 32>}, {pipeline_mode = #tpu.pipeline_mode<synchronous>, transform_indices = @transform_11, window_bounds = array<i64: 1, 32>}, {pipeline_mode = #tpu.pipeline_mode<synchronous>, transform_indices = @transform_12, window_bounds = array<i64: 32, 16>}, {pipeline_mode = #tpu.pipeline_mode<synchronous>, transform_indices = @transform_13, window_bounds = array<i64: 1, 16>}, {pipeline_mode = #tpu.pipeline_mode<synchronous>, transform_indices = @transform_14, window_bounds = array<i64: 16, 32>}, {pipeline_mode = #tpu.pipeline_mode<synchronous>, transform_indices = @transform_15, window_bounds = array<i64: 1, 32>}, {pipeline_mode = #tpu.pipeline_mode<synchronous>, transform_indices = @transform_16, window_bounds = array<i64: 1, 32>}, {pipeline_mode = #tpu.pipeline_mode<synchronous>, transform_indices = @transform_17, window_bounds = array<i64: 1, 32>}, {pipeline_mode = #tpu.pipeline_mode<synchronous>, transform_indices = @transform_18, window_bounds = array<i64: 1, 32, 96>}, {pipeline_mode = #tpu.pipeline_mode<synchronous>, transform_indices = @transform_19, window_bounds = array<i64: 1, 1, 96>}, {pipeline_mode = #tpu.pipeline_mode<synchronous>, transform_indices = @transform_20, window_bounds = array<i64: 1, 32, 32>}, {pipeline_mode = #tpu.pipeline_mode<synchronous>, transform_indices = @transform_21, window_bounds = array<i64: 1, 1, 32>}, {pipeline_mode = #tpu.pipeline_mode<synchronous>, transform_indices = @transform_22, window_bounds = array<i64: 1, 2, 32>}, {pipeline_mode = #tpu.pipeline_mode<synchronous>, transform_indices = @transform_23, window_bounds = array<i64: 1, 2, 32>}, {pipeline_mode = #tpu.pipeline_mode<synchronous>, transform_indices = @transform_24, window_bounds = array<i64: 1, 32, 64>}, {pipeline_mode = #tpu.pipeline_mode<synchronous>, transform_indices = @transform_25, window_bounds = array<i64: 1, 1, 64>}, {pipeline_mode = #tpu.pipeline_mode<synchronous>, transform_indices = @transform_26, window_bounds = array<i64: 1, 64, 32>}, {pipeline_mode = #tpu.pipeline_mode<synchronous>, transform_indices = @transform_27, window_bounds = array<i64: 1, 1, 32>}, {pipeline_mode = #tpu.pipeline_mode<synchronous>, transform_indices = @transform_28, window_bounds = array<i64: 3, 32, 32>}, {pipeline_mode = #tpu.pipeline_mode<synchronous>, transform_indices = @transform_29, window_bounds = array<i64: 1, 32>}, {pipeline_mode = #tpu.pipeline_mode<synchronous>, transform_indices = @transform_30, window_bounds = array<i64: 3, 32, 32>}, {pipeline_mode = #tpu.pipeline_mode<synchronous>, transform_indices = @transform_31, window_bounds = array<i64: 1, 32>}, {pipeline_mode = #tpu.pipeline_mode<synchronous>, transform_indices = @transform_32, window_bounds = array<i64: 32, 32>}, {pipeline_mode = #tpu.pipeline_mode<synchronous>, transform_indices = @transform_33, window_bounds = array<i64: 1, 32>}, {pipeline_mode = #tpu.pipeline_mode<synchronous>, transform_indices = @transform_34, window_bounds = array<i64: 4, 32>}]} {
    %c0 = arith.constant 0 : index
    %c0_0 = arith.constant 0 : index
    %0 = vector.load %arg1[%c0, %c0_0] : memref<16x172xf32, #tpu.memory_space<vmem>>, vector<16x172xf32>
    %c0_1 = arith.constant 0 : index
    %c0_2 = arith.constant 0 : index
    %1 = vector.load %arg11[%c0_1, %c0_2] : memref<172x32xf32, #tpu.memory_space<vmem>>, vector<172x32xf32>
    %cst = arith.constant dense<0.000000e+00> : vector<16x32xf32>
    %2 = tpu.matmul %0, %1, %cst {dimension_numbers = #tpu.dot_dimension_numbers<[1], [0], [0], [1], [0, 0, 1, 1], [], []>} : vector<16x172xf32>, vector<172x32xf32>, vector<16x32xf32> -> vector<16x32xf32>
    %c0_3 = arith.constant 0 : index
    %c0_4 = arith.constant 0 : index
    %3 = vector.load %arg12[%c0_3, %c0_4] : memref<1x32xf32, #tpu.memory_space<vmem>>, vector<1x32xf32>
    %4 = vector.broadcast %3 : vector<1x32xf32> to vector<16x32xf32>
    %5 = arith.addf %2, %4 : vector<16x32xf32>
    %cst_5 = arith.constant 0.000000e+00 : f32
    %6 = vector.broadcast %cst_5 : f32 to vector<16x32xf32>
    %7 = arith.maximumf %5, %6 : vector<16x32xf32>
    %c0_6 = arith.constant 0 : index
    %c0_7 = arith.constant 0 : index
    %8 = vector.load %arg13[%c0_6, %c0_7] : memref<32x16xf32, #tpu.memory_space<vmem>>, vector<32x16xf32>
    %cst_8 = arith.constant dense<0.000000e+00> : vector<16x16xf32>
    %9 = tpu.matmul %7, %8, %cst_8 {dimension_numbers = #tpu.dot_dimension_numbers<[1], [0], [0], [1], [0, 0, 1, 1], [], []>} : vector<16x32xf32>, vector<32x16xf32>, vector<16x16xf32> -> vector<16x16xf32>
    %c0_9 = arith.constant 0 : index
    %c0_10 = arith.constant 0 : index
    %10 = vector.load %arg14[%c0_9, %c0_10] : memref<1x16xf32, #tpu.memory_space<vmem>>, vector<1x16xf32>
    %11 = vector.broadcast %10 : vector<1x16xf32> to vector<16x16xf32>
    %12 = arith.addf %9, %11 : vector<16x16xf32>
    %cst_11 = arith.constant 0.000000e+00 : f32
    %13 = vector.broadcast %cst_11 : f32 to vector<16x16xf32>
    %14 = arith.maximumf %12, %13 : vector<16x16xf32>
    %c0_12 = arith.constant 0 : index
    %c0_13 = arith.constant 0 : index
    %15 = vector.load %arg15[%c0_12, %c0_13] : memref<16x32xf32, #tpu.memory_space<vmem>>, vector<16x32xf32>
    %cst_14 = arith.constant dense<0.000000e+00> : vector<16x32xf32>
    %16 = tpu.matmul %14, %15, %cst_14 {dimension_numbers = #tpu.dot_dimension_numbers<[1], [0], [0], [1], [0, 0, 1, 1], [], []>} : vector<16x16xf32>, vector<16x32xf32>, vector<16x32xf32> -> vector<16x32xf32>
    %c0_15 = arith.constant 0 : index
    %c0_16 = arith.constant 0 : index
    %17 = vector.load %arg16[%c0_15, %c0_16] : memref<1x32xf32, #tpu.memory_space<vmem>>, vector<1x32xf32>
    %18 = vector.broadcast %17 : vector<1x32xf32> to vector<16x32xf32>
    %19 = arith.addf %16, %18 : vector<16x32xf32>
    %c0_17 = arith.constant 0 : index
    %c0_18 = arith.constant 0 : index
    %20 = vector.load %arg3[%c0_17, %c0_18] : memref<32x32xf32, #tpu.memory_space<vmem>>, vector<32x32xf32>
    %cst_19 = arith.constant dense<0.000000e+00> : vector<16x32xf32>
    %21 = tpu.matmul %19, %20, %cst_19 {dimension_numbers = #tpu.dot_dimension_numbers<[1], [0], [0], [1], [0, 0, 1, 1], [], []>} : vector<16x32xf32>, vector<32x32xf32>, vector<16x32xf32> -> vector<16x32xf32>
    %22 = arith.subf %19, %21 : vector<16x32xf32>
    %23 = arith.mulf %22, %22 : vector<16x32xf32>
    %cst_20 = arith.constant dense<0.000000e+00> : vector<16x32xf32>
    %24 = tpu.matmul %23, %20, %cst_20 {dimension_numbers = #tpu.dot_dimension_numbers<[1], [0], [0], [1], [0, 0, 1, 1], [], []>} : vector<16x32xf32>, vector<32x32xf32>, vector<16x32xf32> -> vector<16x32xf32>
    %cst_21 = arith.constant 9.99999974E-6 : f32
    %25 = vector.broadcast %cst_21 : f32 to vector<16x32xf32>
    %26 = arith.addf %24, %25 : vector<16x32xf32>
    %27 = math.rsqrt %26 : vector<16x32xf32>
    %28 = arith.mulf %22, %27 : vector<16x32xf32>
    %c0_22 = arith.constant 0 : index
    %c0_23 = arith.constant 0 : index
    %29 = vector.load %arg17[%c0_22, %c0_23] : memref<1x32xf32, #tpu.memory_space<vmem>>, vector<1x32xf32>
    %30 = vector.broadcast %29 : vector<1x32xf32> to vector<16x32xf32>
    %31 = arith.mulf %28, %30 : vector<16x32xf32>
    %c0_24 = arith.constant 0 : index
    %c0_25 = arith.constant 0 : index
    %32 = vector.load %arg18[%c0_24, %c0_25] : memref<1x32xf32, #tpu.memory_space<vmem>>, vector<1x32xf32>
    %33 = vector.broadcast %32 : vector<1x32xf32> to vector<16x32xf32>
    %34 = arith.addf %31, %33 : vector<16x32xf32>
    %cst_26 = arith.constant 0.707106769 : f32
    %35 = vector.broadcast %cst_26 : f32 to vector<16x32xf32>
    %36 = arith.mulf %34, %35 : vector<16x32xf32>
    %37 = math.absf %36 : vector<16x32xf32>
    %cst_27 = arith.constant 0.327591091 : f32
    %38 = vector.broadcast %cst_27 : f32 to vector<16x32xf32>
    %39 = arith.mulf %38, %37 : vector<16x32xf32>
    %cst_28 = arith.constant 1.000000e+00 : f32
    %40 = vector.broadcast %cst_28 : f32 to vector<16x32xf32>
    %41 = arith.addf %40, %39 : vector<16x32xf32>
    %cst_29 = arith.constant 1.000000e+00 : f32
    %42 = vector.broadcast %cst_29 : f32 to vector<16x32xf32>
    %43 = arith.divf %42, %41 : vector<16x32xf32>
    %cst_30 = arith.constant 1.06140542 : f32
    %44 = vector.broadcast %cst_30 : f32 to vector<16x32xf32>
    %45 = arith.mulf %43, %44 : vector<16x32xf32>
    %cst_31 = arith.constant -1.45315206 : f32
    %46 = vector.broadcast %cst_31 : f32 to vector<16x32xf32>
    %47 = arith.addf %46, %45 : vector<16x32xf32>
    %48 = arith.mulf %43, %47 : vector<16x32xf32>
    %cst_32 = arith.constant 1.42141378 : f32
    %49 = vector.broadcast %cst_32 : f32 to vector<16x32xf32>
    %50 = arith.addf %49, %48 : vector<16x32xf32>
    %51 = arith.mulf %43, %50 : vector<16x32xf32>
    %cst_33 = arith.constant -0.284496725 : f32
    %52 = vector.broadcast %cst_33 : f32 to vector<16x32xf32>
    %53 = arith.addf %52, %51 : vector<16x32xf32>
    %54 = arith.mulf %43, %53 : vector<16x32xf32>
    %cst_34 = arith.constant 0.254829586 : f32
    %55 = vector.broadcast %cst_34 : f32 to vector<16x32xf32>
    %56 = arith.addf %55, %54 : vector<16x32xf32>
    %57 = arith.mulf %43, %56 : vector<16x32xf32>
    %cst_35 = arith.constant 0.000000e+00 : f32
    %58 = vector.broadcast %cst_35 : f32 to vector<16x32xf32>
    %59 = arith.subf %58, %37 : vector<16x32xf32>
    %60 = arith.mulf %59, %37 : vector<16x32xf32>
    %61 = math.exp %60 : vector<16x32xf32>
    %62 = arith.mulf %57, %61 : vector<16x32xf32>
    %cst_36 = arith.constant 1.000000e+00 : f32
    %63 = vector.broadcast %cst_36 : f32 to vector<16x32xf32>
    %64 = arith.subf %63, %62 : vector<16x32xf32>
    %cst_37 = arith.constant 0.000000e+00 : f32
    %65 = vector.broadcast %cst_37 : f32 to vector<16x32xf32>
    %66 = arith.cmpf olt, %36, %65 : vector<16x32xf32>
    %cst_38 = arith.constant 0.000000e+00 : f32
    %67 = vector.broadcast %cst_38 : f32 to vector<16x32xf32>
    %68 = arith.subf %67, %64 : vector<16x32xf32>
    %69 = arith.select %66, %68, %64 : vector<16x32xi1>, vector<16x32xf32>
    %cst_39 = arith.constant 5.000000e-01 : f32
    %70 = vector.broadcast %cst_39 : f32 to vector<16x32xf32>
    %71 = arith.mulf %70, %34 : vector<16x32xf32>
    %cst_40 = arith.constant 1.000000e+00 : f32
    %72 = vector.broadcast %cst_40 : f32 to vector<16x32xf32>
    %73 = arith.addf %72, %69 : vector<16x32xf32>
    %74 = arith.mulf %71, %73 : vector<16x32xf32>
    %c0_41 = arith.constant 0 : index
    %c0_42 = arith.constant 0 : index
    %75 = vector.load %arg2[%c0_41, %c0_42] : memref<16x32xf32, #tpu.memory_space<vmem>>, vector<16x32xf32>
    %76 = arith.addf %74, %75 : vector<16x32xf32>
    %c0_43 = arith.constant 0 : index
    %c0_44 = arith.constant 0 : index
    %77 = vector.load %arg4[%c0_43, %c0_44] : memref<16x16xf32, #tpu.memory_space<vmem>>, vector<16x16xf32>
    %c0_45 = arith.constant 0 : index
    %c0_46 = arith.constant 0 : index
    %c0_47 = arith.constant 0 : index
    %78 = vector.load %arg23[%c0_45, %c0_46, %c0_47] : memref<1x2x32xf32, #tpu.memory_space<vmem>>, vector<1x2x32xf32>
    %79 = vector.shape_cast %78 : vector<1x2x32xf32> to vector<2x32xf32>
    %c0_48 = arith.constant 0 : index
    %c0_49 = arith.constant 0 : index
    %c0_50 = arith.constant 0 : index
    %80 = vector.load %arg24[%c0_48, %c0_49, %c0_50] : memref<1x2x32xf32, #tpu.memory_space<vmem>>, vector<1x2x32xf32>
    %81 = vector.shape_cast %80 : vector<1x2x32xf32> to vector<2x32xf32>
    %c0_51 = arith.constant 0 : index
    %c0_52 = arith.constant 0 : index
    %c0_53 = arith.constant 0 : index
    %82 = vector.load %arg19[%c0_51, %c0_52, %c0_53] : memref<1x32x96xf32, #tpu.memory_space<vmem>>, vector<1x32x96xf32>
    %83 = vector.shape_cast %82 : vector<1x32x96xf32> to vector<32x96xf32>
    %c0_54 = arith.constant 0 : index
    %c0_55 = arith.constant 0 : index
    %c0_56 = arith.constant 0 : index
    %84 = vector.load %arg20[%c0_54, %c0_55, %c0_56] : memref<1x1x96xf32, #tpu.memory_space<vmem>>, vector<1x1x96xf32>
    %85 = vector.shape_cast %84 : vector<1x1x96xf32> to vector<1x96xf32>
    %c0_57 = arith.constant 0 : index
    %c0_58 = arith.constant 0 : index
    %c0_59 = arith.constant 0 : index
    %86 = vector.load %arg21[%c0_57, %c0_58, %c0_59] : memref<1x32x32xf32, #tpu.memory_space<vmem>>, vector<1x32x32xf32>
    %87 = vector.shape_cast %86 : vector<1x32x32xf32> to vector<32x32xf32>
    %c0_60 = arith.constant 0 : index
    %c0_61 = arith.constant 0 : index
    %c0_62 = arith.constant 0 : index
    %88 = vector.load %arg22[%c0_60, %c0_61, %c0_62] : memref<1x1x32xf32, #tpu.memory_space<vmem>>, vector<1x1x32xf32>
    %89 = vector.shape_cast %88 : vector<1x1x32xf32> to vector<1x32xf32>
    %cst_63 = arith.constant dense<0.000000e+00> : vector<16x96xf32>
    %90 = tpu.matmul %76, %83, %cst_63 {dimension_numbers = #tpu.dot_dimension_numbers<[1], [0], [0], [1], [0, 0, 1, 1], [], []>} : vector<16x32xf32>, vector<32x96xf32>, vector<16x96xf32> -> vector<16x96xf32>
    %91 = vector.broadcast %85 : vector<1x96xf32> to vector<16x96xf32>
    %92 = arith.addf %90, %91 : vector<16x96xf32>
    %93 = vector.extract_strided_slice %92 {offsets = [0, 0], sizes = [16, 32], strides = [1, 1]} : vector<16x96xf32> to vector<16x32xf32>
    %94 = vector.extract_strided_slice %92 {offsets = [0, 32], sizes = [16, 32], strides = [1, 1]} : vector<16x96xf32> to vector<16x32xf32>
    %95 = vector.extract_strided_slice %92 {offsets = [0, 64], sizes = [16, 32], strides = [1, 1]} : vector<16x96xf32> to vector<16x32xf32>
    %96 = vector.extract_strided_slice %93 {offsets = [0, 0], sizes = [16, 8], strides = [1, 1]} : vector<16x32xf32> to vector<16x8xf32>
    %97 = vector.extract_strided_slice %94 {offsets = [0, 0], sizes = [16, 8], strides = [1, 1]} : vector<16x32xf32> to vector<16x8xf32>
    %cst_64 = arith.constant dense<0.000000e+00> : vector<16x16xf32>
    %98 = tpu.matmul %96, %97, %cst_64 {dimension_numbers = #tpu.dot_dimension_numbers<[1], [1], [0], [0], [0, 0, 1, 0], [], []>} : vector<16x8xf32>, vector<16x8xf32>, vector<16x16xf32> -> vector<16x16xf32>
    %cst_65 = arith.constant 0.353553385 : f32
    %99 = vector.broadcast %cst_65 : f32 to vector<16x16xf32>
    %100 = arith.mulf %98, %99 : vector<16x16xf32>
    %101 = arith.addf %100, %77 : vector<16x16xf32>
    %cst_66 = arith.constant dense<0xFF800000> : vector<16xf32>
    %102 = vector.multi_reduction <maximumf>, %101, %cst_66 [1] : vector<16x16xf32> to vector<16xf32>
    %103 = vector.shape_cast %102 : vector<16xf32> to vector<16x1xf32>
    %104 = vector.broadcast %103 : vector<16x1xf32> to vector<16x16xf32>
    %105 = arith.subf %101, %104 : vector<16x16xf32>
    %106 = math.exp %105 : vector<16x16xf32>
    %cst_67 = arith.constant dense<0.000000e+00> : vector<16xf32>
    %107 = vector.multi_reduction <add>, %106, %cst_67 [1] : vector<16x16xf32> to vector<16xf32>
    %108 = vector.shape_cast %107 : vector<16xf32> to vector<16x1xf32>
    %109 = vector.broadcast %108 : vector<16x1xf32> to vector<16x16xf32>
    %110 = arith.divf %106, %109 : vector<16x16xf32>
    %111 = vector.extract_strided_slice %95 {offsets = [0, 0], sizes = [16, 8], strides = [1, 1]} : vector<16x32xf32> to vector<16x8xf32>
    %cst_68 = arith.constant dense<0.000000e+00> : vector<16x8xf32>
    %112 = tpu.matmul %110, %111, %cst_68 {dimension_numbers = #tpu.dot_dimension_numbers<[1], [0], [0], [1], [0, 0, 1, 1], [], []>} : vector<16x16xf32>, vector<16x8xf32>, vector<16x8xf32> -> vector<16x8xf32>
    %113 = vector.extract_strided_slice %93 {offsets = [0, 8], sizes = [16, 8], strides = [1, 1]} : vector<16x32xf32> to vector<16x8xf32>
    %114 = vector.extract_strided_slice %94 {offsets = [0, 8], sizes = [16, 8], strides = [1, 1]} : vector<16x32xf32> to vector<16x8xf32>
    %cst_69 = arith.constant dense<0.000000e+00> : vector<16x16xf32>
    %115 = tpu.matmul %113, %114, %cst_69 {dimension_numbers = #tpu.dot_dimension_numbers<[1], [1], [0], [0], [0, 0, 1, 0], [], []>} : vector<16x8xf32>, vector<16x8xf32>, vector<16x16xf32> -> vector<16x16xf32>
    %cst_70 = arith.constant 0.353553385 : f32
    %116 = vector.broadcast %cst_70 : f32 to vector<16x16xf32>
    %117 = arith.mulf %115, %116 : vector<16x16xf32>
    %118 = arith.addf %117, %77 : vector<16x16xf32>
    %cst_71 = arith.constant dense<0xFF800000> : vector<16xf32>
    %119 = vector.multi_reduction <maximumf>, %118, %cst_71 [1] : vector<16x16xf32> to vector<16xf32>
    %120 = vector.shape_cast %119 : vector<16xf32> to vector<16x1xf32>
    %121 = vector.broadcast %120 : vector<16x1xf32> to vector<16x16xf32>
    %122 = arith.subf %118, %121 : vector<16x16xf32>
    %123 = math.exp %122 : vector<16x16xf32>
    %cst_72 = arith.constant dense<0.000000e+00> : vector<16xf32>
    %124 = vector.multi_reduction <add>, %123, %cst_72 [1] : vector<16x16xf32> to vector<16xf32>
    %125 = vector.shape_cast %124 : vector<16xf32> to vector<16x1xf32>
    %126 = vector.broadcast %125 : vector<16x1xf32> to vector<16x16xf32>
    %127 = arith.divf %123, %126 : vector<16x16xf32>
    %128 = vector.extract_strided_slice %95 {offsets = [0, 8], sizes = [16, 8], strides = [1, 1]} : vector<16x32xf32> to vector<16x8xf32>
    %cst_73 = arith.constant dense<0.000000e+00> : vector<16x8xf32>
    %129 = tpu.matmul %127, %128, %cst_73 {dimension_numbers = #tpu.dot_dimension_numbers<[1], [0], [0], [1], [0, 0, 1, 1], [], []>} : vector<16x16xf32>, vector<16x8xf32>, vector<16x8xf32> -> vector<16x8xf32>
    %130 = vector.extract_strided_slice %93 {offsets = [0, 16], sizes = [16, 8], strides = [1, 1]} : vector<16x32xf32> to vector<16x8xf32>
    %131 = vector.extract_strided_slice %94 {offsets = [0, 16], sizes = [16, 8], strides = [1, 1]} : vector<16x32xf32> to vector<16x8xf32>
    %cst_74 = arith.constant dense<0.000000e+00> : vector<16x16xf32>
    %132 = tpu.matmul %130, %131, %cst_74 {dimension_numbers = #tpu.dot_dimension_numbers<[1], [1], [0], [0], [0, 0, 1, 0], [], []>} : vector<16x8xf32>, vector<16x8xf32>, vector<16x16xf32> -> vector<16x16xf32>
    %cst_75 = arith.constant 0.353553385 : f32
    %133 = vector.broadcast %cst_75 : f32 to vector<16x16xf32>
    %134 = arith.mulf %132, %133 : vector<16x16xf32>
    %135 = arith.addf %134, %77 : vector<16x16xf32>
    %cst_76 = arith.constant dense<0xFF800000> : vector<16xf32>
    %136 = vector.multi_reduction <maximumf>, %135, %cst_76 [1] : vector<16x16xf32> to vector<16xf32>
    %137 = vector.shape_cast %136 : vector<16xf32> to vector<16x1xf32>
    %138 = vector.broadcast %137 : vector<16x1xf32> to vector<16x16xf32>
    %139 = arith.subf %135, %138 : vector<16x16xf32>
    %140 = math.exp %139 : vector<16x16xf32>
    %cst_77 = arith.constant dense<0.000000e+00> : vector<16xf32>
    %141 = vector.multi_reduction <add>, %140, %cst_77 [1] : vector<16x16xf32> to vector<16xf32>
    %142 = vector.shape_cast %141 : vector<16xf32> to vector<16x1xf32>
    %143 = vector.broadcast %142 : vector<16x1xf32> to vector<16x16xf32>
    %144 = arith.divf %140, %143 : vector<16x16xf32>
    %145 = vector.extract_strided_slice %95 {offsets = [0, 16], sizes = [16, 8], strides = [1, 1]} : vector<16x32xf32> to vector<16x8xf32>
    %cst_78 = arith.constant dense<0.000000e+00> : vector<16x8xf32>
    %146 = tpu.matmul %144, %145, %cst_78 {dimension_numbers = #tpu.dot_dimension_numbers<[1], [0], [0], [1], [0, 0, 1, 1], [], []>} : vector<16x16xf32>, vector<16x8xf32>, vector<16x8xf32> -> vector<16x8xf32>
    %147 = vector.extract_strided_slice %93 {offsets = [0, 24], sizes = [16, 8], strides = [1, 1]} : vector<16x32xf32> to vector<16x8xf32>
    %148 = vector.extract_strided_slice %94 {offsets = [0, 24], sizes = [16, 8], strides = [1, 1]} : vector<16x32xf32> to vector<16x8xf32>
    %cst_79 = arith.constant dense<0.000000e+00> : vector<16x16xf32>
    %149 = tpu.matmul %147, %148, %cst_79 {dimension_numbers = #tpu.dot_dimension_numbers<[1], [1], [0], [0], [0, 0, 1, 0], [], []>} : vector<16x8xf32>, vector<16x8xf32>, vector<16x16xf32> -> vector<16x16xf32>
    %cst_80 = arith.constant 0.353553385 : f32
    %150 = vector.broadcast %cst_80 : f32 to vector<16x16xf32>
    %151 = arith.mulf %149, %150 : vector<16x16xf32>
    %152 = arith.addf %151, %77 : vector<16x16xf32>
    %cst_81 = arith.constant dense<0xFF800000> : vector<16xf32>
    %153 = vector.multi_reduction <maximumf>, %152, %cst_81 [1] : vector<16x16xf32> to vector<16xf32>
    %154 = vector.shape_cast %153 : vector<16xf32> to vector<16x1xf32>
    %155 = vector.broadcast %154 : vector<16x1xf32> to vector<16x16xf32>
    %156 = arith.subf %152, %155 : vector<16x16xf32>
    %157 = math.exp %156 : vector<16x16xf32>
    %cst_82 = arith.constant dense<0.000000e+00> : vector<16xf32>
    %158 = vector.multi_reduction <add>, %157, %cst_82 [1] : vector<16x16xf32> to vector<16xf32>
    %159 = vector.shape_cast %158 : vector<16xf32> to vector<16x1xf32>
    %160 = vector.broadcast %159 : vector<16x1xf32> to vector<16x16xf32>
    %161 = arith.divf %157, %160 : vector<16x16xf32>
    %162 = vector.extract_strided_slice %95 {offsets = [0, 24], sizes = [16, 8], strides = [1, 1]} : vector<16x32xf32> to vector<16x8xf32>
    %cst_83 = arith.constant dense<0.000000e+00> : vector<16x8xf32>
    %163 = tpu.matmul %161, %162, %cst_83 {dimension_numbers = #tpu.dot_dimension_numbers<[1], [0], [0], [1], [0, 0, 1, 1], [], []>} : vector<16x16xf32>, vector<16x8xf32>, vector<16x8xf32> -> vector<16x8xf32>
    %164 = tpu.concatenate %112, %129, %146, %163 in 1 : vector<16x8xf32>, vector<16x8xf32>, vector<16x8xf32>, vector<16x8xf32> -> vector<16x32xf32>
    %cst_84 = arith.constant dense<0.000000e+00> : vector<16x32xf32>
    %165 = tpu.matmul %164, %87, %cst_84 {dimension_numbers = #tpu.dot_dimension_numbers<[1], [0], [0], [1], [0, 0, 1, 1], [], []>} : vector<16x32xf32>, vector<32x32xf32>, vector<16x32xf32> -> vector<16x32xf32>
    %166 = vector.broadcast %89 : vector<1x32xf32> to vector<16x32xf32>
    %167 = arith.addf %165, %166 : vector<16x32xf32>
    %168 = arith.addf %76, %167 : vector<16x32xf32>
    %169 = vector.extract_strided_slice %79 {offsets = [0, 0], sizes = [1, 32], strides = [1, 1]} : vector<2x32xf32> to vector<1x32xf32>
    %170 = vector.extract_strided_slice %81 {offsets = [0, 0], sizes = [1, 32], strides = [1, 1]} : vector<2x32xf32> to vector<1x32xf32>
    %cst_85 = arith.constant dense<0.000000e+00> : vector<16xf32>
    %171 = vector.multi_reduction <add>, %168, %cst_85 [1] : vector<16x32xf32> to vector<16xf32>
    %172 = vector.shape_cast %171 : vector<16xf32> to vector<16x1xf32>
    %cst_86 = arith.constant 3.200000e+01 : f32
    %173 = vector.broadcast %cst_86 : f32 to vector<16x1xf32>
    %174 = arith.divf %172, %173 : vector<16x1xf32>
    %175 = vector.broadcast %174 : vector<16x1xf32> to vector<16x32xf32>
    %176 = arith.subf %168, %175 : vector<16x32xf32>
    %177 = arith.mulf %176, %176 : vector<16x32xf32>
    %cst_87 = arith.constant dense<0.000000e+00> : vector<16xf32>
    %178 = vector.multi_reduction <add>, %177, %cst_87 [1] : vector<16x32xf32> to vector<16xf32>
    %179 = vector.shape_cast %178 : vector<16xf32> to vector<16x1xf32>
    %cst_88 = arith.constant 3.200000e+01 : f32
    %180 = vector.broadcast %cst_88 : f32 to vector<16x1xf32>
    %181 = arith.divf %179, %180 : vector<16x1xf32>
    %182 = vector.broadcast %174 : vector<16x1xf32> to vector<16x32xf32>
    %183 = arith.subf %168, %182 : vector<16x32xf32>
    %cst_89 = arith.constant 9.99999974E-6 : f32
    %184 = vector.broadcast %cst_89 : f32 to vector<16x1xf32>
    %185 = arith.addf %181, %184 : vector<16x1xf32>
    %186 = math.rsqrt %185 : vector<16x1xf32>
    %187 = vector.broadcast %186 : vector<16x1xf32> to vector<16x32xf32>
    %188 = arith.mulf %183, %187 : vector<16x32xf32>
    %189 = vector.broadcast %169 : vector<1x32xf32> to vector<16x32xf32>
    %190 = arith.mulf %188, %189 : vector<16x32xf32>
    %191 = vector.broadcast %170 : vector<1x32xf32> to vector<16x32xf32>
    %192 = arith.addf %190, %191 : vector<16x32xf32>
    %c0_90 = arith.constant 0 : index
    %c0_91 = arith.constant 0 : index
    %c0_92 = arith.constant 0 : index
    %193 = vector.load %arg25[%c0_90, %c0_91, %c0_92] : memref<1x32x64xf32, #tpu.memory_space<vmem>>, vector<1x32x64xf32>
    %194 = vector.shape_cast %193 : vector<1x32x64xf32> to vector<32x64xf32>
    %cst_93 = arith.constant dense<0.000000e+00> : vector<16x64xf32>
    %195 = tpu.matmul %192, %194, %cst_93 {dimension_numbers = #tpu.dot_dimension_numbers<[1], [0], [0], [1], [0, 0, 1, 1], [], []>} : vector<16x32xf32>, vector<32x64xf32>, vector<16x64xf32> -> vector<16x64xf32>
    %c0_94 = arith.constant 0 : index
    %c0_95 = arith.constant 0 : index
    %c0_96 = arith.constant 0 : index
    %196 = vector.load %arg26[%c0_94, %c0_95, %c0_96] : memref<1x1x64xf32, #tpu.memory_space<vmem>>, vector<1x1x64xf32>
    %197 = vector.shape_cast %196 : vector<1x1x64xf32> to vector<1x64xf32>
    %198 = vector.broadcast %197 : vector<1x64xf32> to vector<16x64xf32>
    %199 = arith.addf %195, %198 : vector<16x64xf32>
    %cst_97 = arith.constant 0.000000e+00 : f32
    %200 = vector.broadcast %cst_97 : f32 to vector<16x64xf32>
    %201 = arith.maximumf %199, %200 : vector<16x64xf32>
    %c0_98 = arith.constant 0 : index
    %c0_99 = arith.constant 0 : index
    %c0_100 = arith.constant 0 : index
    %202 = vector.load %arg27[%c0_98, %c0_99, %c0_100] : memref<1x64x32xf32, #tpu.memory_space<vmem>>, vector<1x64x32xf32>
    %203 = vector.shape_cast %202 : vector<1x64x32xf32> to vector<64x32xf32>
    %cst_101 = arith.constant dense<0.000000e+00> : vector<16x32xf32>
    %204 = tpu.matmul %201, %203, %cst_101 {dimension_numbers = #tpu.dot_dimension_numbers<[1], [0], [0], [1], [0, 0, 1, 1], [], []>} : vector<16x64xf32>, vector<64x32xf32>, vector<16x32xf32> -> vector<16x32xf32>
    %c0_102 = arith.constant 0 : index
    %c0_103 = arith.constant 0 : index
    %c0_104 = arith.constant 0 : index
    %205 = vector.load %arg28[%c0_102, %c0_103, %c0_104] : memref<1x1x32xf32, #tpu.memory_space<vmem>>, vector<1x1x32xf32>
    %206 = vector.shape_cast %205 : vector<1x1x32xf32> to vector<1x32xf32>
    %207 = vector.broadcast %206 : vector<1x32xf32> to vector<16x32xf32>
    %208 = arith.addf %204, %207 : vector<16x32xf32>
    %209 = arith.addf %192, %208 : vector<16x32xf32>
    %210 = vector.extract_strided_slice %79 {offsets = [1, 0], sizes = [1, 32], strides = [1, 1]} : vector<2x32xf32> to vector<1x32xf32>
    %211 = vector.extract_strided_slice %81 {offsets = [1, 0], sizes = [1, 32], strides = [1, 1]} : vector<2x32xf32> to vector<1x32xf32>
    %cst_105 = arith.constant dense<0.000000e+00> : vector<16xf32>
    %212 = vector.multi_reduction <add>, %209, %cst_105 [1] : vector<16x32xf32> to vector<16xf32>
    %213 = vector.shape_cast %212 : vector<16xf32> to vector<16x1xf32>
    %cst_106 = arith.constant 3.200000e+01 : f32
    %214 = vector.broadcast %cst_106 : f32 to vector<16x1xf32>
    %215 = arith.divf %213, %214 : vector<16x1xf32>
    %216 = vector.broadcast %215 : vector<16x1xf32> to vector<16x32xf32>
    %217 = arith.subf %209, %216 : vector<16x32xf32>
    %218 = arith.mulf %217, %217 : vector<16x32xf32>
    %cst_107 = arith.constant dense<0.000000e+00> : vector<16xf32>
    %219 = vector.multi_reduction <add>, %218, %cst_107 [1] : vector<16x32xf32> to vector<16xf32>
    %220 = vector.shape_cast %219 : vector<16xf32> to vector<16x1xf32>
    %cst_108 = arith.constant 3.200000e+01 : f32
    %221 = vector.broadcast %cst_108 : f32 to vector<16x1xf32>
    %222 = arith.divf %220, %221 : vector<16x1xf32>
    %223 = vector.broadcast %215 : vector<16x1xf32> to vector<16x32xf32>
    %224 = arith.subf %209, %223 : vector<16x32xf32>
    %cst_109 = arith.constant 9.99999974E-6 : f32
    %225 = vector.broadcast %cst_109 : f32 to vector<16x1xf32>
    %226 = arith.addf %222, %225 : vector<16x1xf32>
    %227 = math.rsqrt %226 : vector<16x1xf32>
    %228 = vector.broadcast %227 : vector<16x1xf32> to vector<16x32xf32>
    %229 = arith.mulf %224, %228 : vector<16x32xf32>
    %230 = vector.broadcast %210 : vector<1x32xf32> to vector<16x32xf32>
    %231 = arith.mulf %229, %230 : vector<16x32xf32>
    %232 = vector.broadcast %211 : vector<1x32xf32> to vector<16x32xf32>
    %233 = arith.addf %231, %232 : vector<16x32xf32>
    %c0_110 = arith.constant 0 : index
    %c0_111 = arith.constant 0 : index
    %234 = vector.load %arg7[%c0_110, %c0_111] : memref<8x16xf32, #tpu.memory_space<vmem>>, vector<8x16xf32>
    %c0_112 = arith.constant 0 : index
    %c0_113 = arith.constant 0 : index
    %235 = vector.load %arg5[%c0_112, %c0_113] : memref<16x16xf32, #tpu.memory_space<vmem>>, vector<16x16xf32>
    %c0_114 = arith.constant 0 : index
    %c0_115 = arith.constant 0 : index
    %236 = vector.load %arg6[%c0_114, %c0_115] : memref<16x16xf32, #tpu.memory_space<vmem>>, vector<16x16xf32>
    %c1 = arith.constant 1 : index
    %c0_116 = arith.constant 0 : index
    %c0_117 = arith.constant 0 : index
    %237 = vector.load %arg29[%c1, %c0_116, %c0_117] : memref<3x32x32xf32, #tpu.memory_space<vmem>>, vector<1x32x32xf32>
    %238 = vector.shape_cast %237 : vector<1x32x32xf32> to vector<32x32xf32>
    %cst_118 = arith.constant dense<0.000000e+00> : vector<16x32xf32>
    %239 = tpu.matmul %233, %238, %cst_118 {dimension_numbers = #tpu.dot_dimension_numbers<[1], [0], [0], [1], [0, 0, 1, 1], [], []>} : vector<16x32xf32>, vector<32x32xf32>, vector<16x32xf32> -> vector<16x32xf32>
    %cst_119 = arith.constant dense<0.000000e+00> : vector<16x32xf32>
    %240 = tpu.matmul %235, %233, %cst_119 {dimension_numbers = #tpu.dot_dimension_numbers<[1], [0], [0], [1], [0, 0, 1, 1], [], []>} : vector<16x16xf32>, vector<16x32xf32>, vector<16x32xf32> -> vector<16x32xf32>
    %c0_120 = arith.constant 0 : index
    %c0_121 = arith.constant 0 : index
    %c0_122 = arith.constant 0 : index
    %241 = vector.load %arg29[%c0_120, %c0_121, %c0_122] : memref<3x32x32xf32, #tpu.memory_space<vmem>>, vector<1x32x32xf32>
    %242 = vector.shape_cast %241 : vector<1x32x32xf32> to vector<32x32xf32>
    %cst_123 = arith.constant dense<0.000000e+00> : vector<16x32xf32>
    %243 = tpu.matmul %240, %242, %cst_123 {dimension_numbers = #tpu.dot_dimension_numbers<[1], [0], [0], [1], [0, 0, 1, 1], [], []>} : vector<16x32xf32>, vector<32x32xf32>, vector<16x32xf32> -> vector<16x32xf32>
    %244 = arith.addf %239, %243 : vector<16x32xf32>
    %cst_124 = arith.constant dense<0.000000e+00> : vector<16x32xf32>
    %245 = tpu.matmul %236, %233, %cst_124 {dimension_numbers = #tpu.dot_dimension_numbers<[1], [0], [0], [1], [0, 0, 1, 1], [], []>} : vector<16x16xf32>, vector<16x32xf32>, vector<16x32xf32> -> vector<16x32xf32>
    %c2 = arith.constant 2 : index
    %c0_125 = arith.constant 0 : index
    %c0_126 = arith.constant 0 : index
    %246 = vector.load %arg29[%c2, %c0_125, %c0_126] : memref<3x32x32xf32, #tpu.memory_space<vmem>>, vector<1x32x32xf32>
    %247 = vector.shape_cast %246 : vector<1x32x32xf32> to vector<32x32xf32>
    %cst_127 = arith.constant dense<0.000000e+00> : vector<16x32xf32>
    %248 = tpu.matmul %245, %247, %cst_127 {dimension_numbers = #tpu.dot_dimension_numbers<[1], [0], [0], [1], [0, 0, 1, 1], [], []>} : vector<16x32xf32>, vector<32x32xf32>, vector<16x32xf32> -> vector<16x32xf32>
    %249 = arith.addf %244, %248 : vector<16x32xf32>
    %c0_128 = arith.constant 0 : index
    %c0_129 = arith.constant 0 : index
    %250 = vector.load %arg30[%c0_128, %c0_129] : memref<1x32xf32, #tpu.memory_space<vmem>>, vector<1x32xf32>
    %251 = vector.broadcast %250 : vector<1x32xf32> to vector<16x32xf32>
    %252 = arith.addf %249, %251 : vector<16x32xf32>
    %cst_130 = arith.constant 0.707106769 : f32
    %253 = vector.broadcast %cst_130 : f32 to vector<16x32xf32>
    %254 = arith.mulf %252, %253 : vector<16x32xf32>
    %255 = math.absf %254 : vector<16x32xf32>
    %cst_131 = arith.constant 0.327591091 : f32
    %256 = vector.broadcast %cst_131 : f32 to vector<16x32xf32>
    %257 = arith.mulf %256, %255 : vector<16x32xf32>
    %cst_132 = arith.constant 1.000000e+00 : f32
    %258 = vector.broadcast %cst_132 : f32 to vector<16x32xf32>
    %259 = arith.addf %258, %257 : vector<16x32xf32>
    %cst_133 = arith.constant 1.000000e+00 : f32
    %260 = vector.broadcast %cst_133 : f32 to vector<16x32xf32>
    %261 = arith.divf %260, %259 : vector<16x32xf32>
    %cst_134 = arith.constant 1.06140542 : f32
    %262 = vector.broadcast %cst_134 : f32 to vector<16x32xf32>
    %263 = arith.mulf %261, %262 : vector<16x32xf32>
    %cst_135 = arith.constant -1.45315206 : f32
    %264 = vector.broadcast %cst_135 : f32 to vector<16x32xf32>
    %265 = arith.addf %264, %263 : vector<16x32xf32>
    %266 = arith.mulf %261, %265 : vector<16x32xf32>
    %cst_136 = arith.constant 1.42141378 : f32
    %267 = vector.broadcast %cst_136 : f32 to vector<16x32xf32>
    %268 = arith.addf %267, %266 : vector<16x32xf32>
    %269 = arith.mulf %261, %268 : vector<16x32xf32>
    %cst_137 = arith.constant -0.284496725 : f32
    %270 = vector.broadcast %cst_137 : f32 to vector<16x32xf32>
    %271 = arith.addf %270, %269 : vector<16x32xf32>
    %272 = arith.mulf %261, %271 : vector<16x32xf32>
    %cst_138 = arith.constant 0.254829586 : f32
    %273 = vector.broadcast %cst_138 : f32 to vector<16x32xf32>
    %274 = arith.addf %273, %272 : vector<16x32xf32>
    %275 = arith.mulf %261, %274 : vector<16x32xf32>
    %cst_139 = arith.constant 0.000000e+00 : f32
    %276 = vector.broadcast %cst_139 : f32 to vector<16x32xf32>
    %277 = arith.subf %276, %255 : vector<16x32xf32>
    %278 = arith.mulf %277, %255 : vector<16x32xf32>
    %279 = math.exp %278 : vector<16x32xf32>
    %280 = arith.mulf %275, %279 : vector<16x32xf32>
    %cst_140 = arith.constant 1.000000e+00 : f32
    %281 = vector.broadcast %cst_140 : f32 to vector<16x32xf32>
    %282 = arith.subf %281, %280 : vector<16x32xf32>
    %cst_141 = arith.constant 0.000000e+00 : f32
    %283 = vector.broadcast %cst_141 : f32 to vector<16x32xf32>
    %284 = arith.cmpf olt, %254, %283 : vector<16x32xf32>
    %cst_142 = arith.constant 0.000000e+00 : f32
    %285 = vector.broadcast %cst_142 : f32 to vector<16x32xf32>
    %286 = arith.subf %285, %282 : vector<16x32xf32>
    %287 = arith.select %284, %286, %282 : vector<16x32xi1>, vector<16x32xf32>
    %cst_143 = arith.constant 5.000000e-01 : f32
    %288 = vector.broadcast %cst_143 : f32 to vector<16x32xf32>
    %289 = arith.mulf %288, %252 : vector<16x32xf32>
    %cst_144 = arith.constant 1.000000e+00 : f32
    %290 = vector.broadcast %cst_144 : f32 to vector<16x32xf32>
    %291 = arith.addf %290, %287 : vector<16x32xf32>
    %292 = arith.mulf %289, %291 : vector<16x32xf32>
    %cst_145 = arith.constant dense<0.000000e+00> : vector<8x32xf32>
    %293 = tpu.matmul %234, %292, %cst_145 {dimension_numbers = #tpu.dot_dimension_numbers<[1], [0], [0], [1], [0, 0, 1, 1], [], []>} : vector<8x16xf32>, vector<16x32xf32>, vector<8x32xf32> -> vector<8x32xf32>
    %c0_146 = arith.constant 0 : index
    %c0_147 = arith.constant 0 : index
    %294 = vector.load %arg10[%c0_146, %c0_147] : memref<4x8xf32, #tpu.memory_space<vmem>>, vector<4x8xf32>
    %c0_148 = arith.constant 0 : index
    %c0_149 = arith.constant 0 : index
    %295 = vector.load %arg8[%c0_148, %c0_149] : memref<8x8xf32, #tpu.memory_space<vmem>>, vector<8x8xf32>
    %c0_150 = arith.constant 0 : index
    %c0_151 = arith.constant 0 : index
    %296 = vector.load %arg9[%c0_150, %c0_151] : memref<8x8xf32, #tpu.memory_space<vmem>>, vector<8x8xf32>
    %c1_152 = arith.constant 1 : index
    %c0_153 = arith.constant 0 : index
    %c0_154 = arith.constant 0 : index
    %297 = vector.load %arg31[%c1_152, %c0_153, %c0_154] : memref<3x32x32xf32, #tpu.memory_space<vmem>>, vector<1x32x32xf32>
    %298 = vector.shape_cast %297 : vector<1x32x32xf32> to vector<32x32xf32>
    %cst_155 = arith.constant dense<0.000000e+00> : vector<8x32xf32>
    %299 = tpu.matmul %293, %298, %cst_155 {dimension_numbers = #tpu.dot_dimension_numbers<[1], [0], [0], [1], [0, 0, 1, 1], [], []>} : vector<8x32xf32>, vector<32x32xf32>, vector<8x32xf32> -> vector<8x32xf32>
    %cst_156 = arith.constant dense<0.000000e+00> : vector<8x32xf32>
    %300 = tpu.matmul %295, %293, %cst_156 {dimension_numbers = #tpu.dot_dimension_numbers<[1], [0], [0], [1], [0, 0, 1, 1], [], []>} : vector<8x8xf32>, vector<8x32xf32>, vector<8x32xf32> -> vector<8x32xf32>
    %c0_157 = arith.constant 0 : index
    %c0_158 = arith.constant 0 : index
    %c0_159 = arith.constant 0 : index
    %301 = vector.load %arg31[%c0_157, %c0_158, %c0_159] : memref<3x32x32xf32, #tpu.memory_space<vmem>>, vector<1x32x32xf32>
    %302 = vector.shape_cast %301 : vector<1x32x32xf32> to vector<32x32xf32>
    %cst_160 = arith.constant dense<0.000000e+00> : vector<8x32xf32>
    %303 = tpu.matmul %300, %302, %cst_160 {dimension_numbers = #tpu.dot_dimension_numbers<[1], [0], [0], [1], [0, 0, 1, 1], [], []>} : vector<8x32xf32>, vector<32x32xf32>, vector<8x32xf32> -> vector<8x32xf32>
    %304 = arith.addf %299, %303 : vector<8x32xf32>
    %cst_161 = arith.constant dense<0.000000e+00> : vector<8x32xf32>
    %305 = tpu.matmul %296, %293, %cst_161 {dimension_numbers = #tpu.dot_dimension_numbers<[1], [0], [0], [1], [0, 0, 1, 1], [], []>} : vector<8x8xf32>, vector<8x32xf32>, vector<8x32xf32> -> vector<8x32xf32>
    %c2_162 = arith.constant 2 : index
    %c0_163 = arith.constant 0 : index
    %c0_164 = arith.constant 0 : index
    %306 = vector.load %arg31[%c2_162, %c0_163, %c0_164] : memref<3x32x32xf32, #tpu.memory_space<vmem>>, vector<1x32x32xf32>
    %307 = vector.shape_cast %306 : vector<1x32x32xf32> to vector<32x32xf32>
    %cst_165 = arith.constant dense<0.000000e+00> : vector<8x32xf32>
    %308 = tpu.matmul %305, %307, %cst_165 {dimension_numbers = #tpu.dot_dimension_numbers<[1], [0], [0], [1], [0, 0, 1, 1], [], []>} : vector<8x32xf32>, vector<32x32xf32>, vector<8x32xf32> -> vector<8x32xf32>
    %309 = arith.addf %304, %308 : vector<8x32xf32>
    %c0_166 = arith.constant 0 : index
    %c0_167 = arith.constant 0 : index
    %310 = vector.load %arg32[%c0_166, %c0_167] : memref<1x32xf32, #tpu.memory_space<vmem>>, vector<1x32xf32>
    %311 = vector.broadcast %310 : vector<1x32xf32> to vector<8x32xf32>
    %312 = arith.addf %309, %311 : vector<8x32xf32>
    %cst_168 = arith.constant 0.707106769 : f32
    %313 = vector.broadcast %cst_168 : f32 to vector<8x32xf32>
    %314 = arith.mulf %312, %313 : vector<8x32xf32>
    %315 = math.absf %314 : vector<8x32xf32>
    %cst_169 = arith.constant 0.327591091 : f32
    %316 = vector.broadcast %cst_169 : f32 to vector<8x32xf32>
    %317 = arith.mulf %316, %315 : vector<8x32xf32>
    %cst_170 = arith.constant 1.000000e+00 : f32
    %318 = vector.broadcast %cst_170 : f32 to vector<8x32xf32>
    %319 = arith.addf %318, %317 : vector<8x32xf32>
    %cst_171 = arith.constant 1.000000e+00 : f32
    %320 = vector.broadcast %cst_171 : f32 to vector<8x32xf32>
    %321 = arith.divf %320, %319 : vector<8x32xf32>
    %cst_172 = arith.constant 1.06140542 : f32
    %322 = vector.broadcast %cst_172 : f32 to vector<8x32xf32>
    %323 = arith.mulf %321, %322 : vector<8x32xf32>
    %cst_173 = arith.constant -1.45315206 : f32
    %324 = vector.broadcast %cst_173 : f32 to vector<8x32xf32>
    %325 = arith.addf %324, %323 : vector<8x32xf32>
    %326 = arith.mulf %321, %325 : vector<8x32xf32>
    %cst_174 = arith.constant 1.42141378 : f32
    %327 = vector.broadcast %cst_174 : f32 to vector<8x32xf32>
    %328 = arith.addf %327, %326 : vector<8x32xf32>
    %329 = arith.mulf %321, %328 : vector<8x32xf32>
    %cst_175 = arith.constant -0.284496725 : f32
    %330 = vector.broadcast %cst_175 : f32 to vector<8x32xf32>
    %331 = arith.addf %330, %329 : vector<8x32xf32>
    %332 = arith.mulf %321, %331 : vector<8x32xf32>
    %cst_176 = arith.constant 0.254829586 : f32
    %333 = vector.broadcast %cst_176 : f32 to vector<8x32xf32>
    %334 = arith.addf %333, %332 : vector<8x32xf32>
    %335 = arith.mulf %321, %334 : vector<8x32xf32>
    %cst_177 = arith.constant 0.000000e+00 : f32
    %336 = vector.broadcast %cst_177 : f32 to vector<8x32xf32>
    %337 = arith.subf %336, %315 : vector<8x32xf32>
    %338 = arith.mulf %337, %315 : vector<8x32xf32>
    %339 = math.exp %338 : vector<8x32xf32>
    %340 = arith.mulf %335, %339 : vector<8x32xf32>
    %cst_178 = arith.constant 1.000000e+00 : f32
    %341 = vector.broadcast %cst_178 : f32 to vector<8x32xf32>
    %342 = arith.subf %341, %340 : vector<8x32xf32>
    %cst_179 = arith.constant 0.000000e+00 : f32
    %343 = vector.broadcast %cst_179 : f32 to vector<8x32xf32>
    %344 = arith.cmpf olt, %314, %343 : vector<8x32xf32>
    %cst_180 = arith.constant 0.000000e+00 : f32
    %345 = vector.broadcast %cst_180 : f32 to vector<8x32xf32>
    %346 = arith.subf %345, %342 : vector<8x32xf32>
    %347 = arith.select %344, %346, %342 : vector<8x32xi1>, vector<8x32xf32>
    %cst_181 = arith.constant 5.000000e-01 : f32
    %348 = vector.broadcast %cst_181 : f32 to vector<8x32xf32>
    %349 = arith.mulf %348, %312 : vector<8x32xf32>
    %cst_182 = arith.constant 1.000000e+00 : f32
    %350 = vector.broadcast %cst_182 : f32 to vector<8x32xf32>
    %351 = arith.addf %350, %347 : vector<8x32xf32>
    %352 = arith.mulf %349, %351 : vector<8x32xf32>
    %cst_183 = arith.constant dense<0.000000e+00> : vector<4x32xf32>
    %353 = tpu.matmul %294, %352, %cst_183 {dimension_numbers = #tpu.dot_dimension_numbers<[1], [0], [0], [1], [0, 0, 1, 1], [], []>} : vector<4x8xf32>, vector<8x32xf32>, vector<4x32xf32> -> vector<4x32xf32>
    %c0_184 = arith.constant 0 : index
    %c0_185 = arith.constant 0 : index
    %354 = vector.load %arg33[%c0_184, %c0_185] : memref<32x32xf32, #tpu.memory_space<vmem>>, vector<32x32xf32>
    %cst_186 = arith.constant dense<0.000000e+00> : vector<4x32xf32>
    %355 = tpu.matmul %353, %354, %cst_186 {dimension_numbers = #tpu.dot_dimension_numbers<[1], [0], [0], [1], [0, 0, 1, 1], [], []>} : vector<4x32xf32>, vector<32x32xf32>, vector<4x32xf32> -> vector<4x32xf32>
    %c0_187 = arith.constant 0 : index
    %c0_188 = arith.constant 0 : index
    %356 = vector.load %arg34[%c0_187, %c0_188] : memref<1x32xf32, #tpu.memory_space<vmem>>, vector<1x32xf32>
    %357 = vector.broadcast %356 : vector<1x32xf32> to vector<4x32xf32>
    %358 = arith.addf %355, %357 : vector<4x32xf32>
    %cst_189 = arith.constant 0.707106769 : f32
    %359 = vector.broadcast %cst_189 : f32 to vector<4x32xf32>
    %360 = arith.mulf %358, %359 : vector<4x32xf32>
    %361 = math.absf %360 : vector<4x32xf32>
    %cst_190 = arith.constant 0.327591091 : f32
    %362 = vector.broadcast %cst_190 : f32 to vector<4x32xf32>
    %363 = arith.mulf %362, %361 : vector<4x32xf32>
    %cst_191 = arith.constant 1.000000e+00 : f32
    %364 = vector.broadcast %cst_191 : f32 to vector<4x32xf32>
    %365 = arith.addf %364, %363 : vector<4x32xf32>
    %cst_192 = arith.constant 1.000000e+00 : f32
    %366 = vector.broadcast %cst_192 : f32 to vector<4x32xf32>
    %367 = arith.divf %366, %365 : vector<4x32xf32>
    %cst_193 = arith.constant 1.06140542 : f32
    %368 = vector.broadcast %cst_193 : f32 to vector<4x32xf32>
    %369 = arith.mulf %367, %368 : vector<4x32xf32>
    %cst_194 = arith.constant -1.45315206 : f32
    %370 = vector.broadcast %cst_194 : f32 to vector<4x32xf32>
    %371 = arith.addf %370, %369 : vector<4x32xf32>
    %372 = arith.mulf %367, %371 : vector<4x32xf32>
    %cst_195 = arith.constant 1.42141378 : f32
    %373 = vector.broadcast %cst_195 : f32 to vector<4x32xf32>
    %374 = arith.addf %373, %372 : vector<4x32xf32>
    %375 = arith.mulf %367, %374 : vector<4x32xf32>
    %cst_196 = arith.constant -0.284496725 : f32
    %376 = vector.broadcast %cst_196 : f32 to vector<4x32xf32>
    %377 = arith.addf %376, %375 : vector<4x32xf32>
    %378 = arith.mulf %367, %377 : vector<4x32xf32>
    %cst_197 = arith.constant 0.254829586 : f32
    %379 = vector.broadcast %cst_197 : f32 to vector<4x32xf32>
    %380 = arith.addf %379, %378 : vector<4x32xf32>
    %381 = arith.mulf %367, %380 : vector<4x32xf32>
    %cst_198 = arith.constant 0.000000e+00 : f32
    %382 = vector.broadcast %cst_198 : f32 to vector<4x32xf32>
    %383 = arith.subf %382, %361 : vector<4x32xf32>
    %384 = arith.mulf %383, %361 : vector<4x32xf32>
    %385 = math.exp %384 : vector<4x32xf32>
    %386 = arith.mulf %381, %385 : vector<4x32xf32>
    %cst_199 = arith.constant 1.000000e+00 : f32
    %387 = vector.broadcast %cst_199 : f32 to vector<4x32xf32>
    %388 = arith.subf %387, %386 : vector<4x32xf32>
    %cst_200 = arith.constant 0.000000e+00 : f32
    %389 = vector.broadcast %cst_200 : f32 to vector<4x32xf32>
    %390 = arith.cmpf olt, %360, %389 : vector<4x32xf32>
    %cst_201 = arith.constant 0.000000e+00 : f32
    %391 = vector.broadcast %cst_201 : f32 to vector<4x32xf32>
    %392 = arith.subf %391, %388 : vector<4x32xf32>
    %393 = arith.select %390, %392, %388 : vector<4x32xi1>, vector<4x32xf32>
    %cst_202 = arith.constant 5.000000e-01 : f32
    %394 = vector.broadcast %cst_202 : f32 to vector<4x32xf32>
    %395 = arith.mulf %394, %358 : vector<4x32xf32>
    %cst_203 = arith.constant 1.000000e+00 : f32
    %396 = vector.broadcast %cst_203 : f32 to vector<4x32xf32>
    %397 = arith.addf %396, %393 : vector<4x32xf32>
    %398 = arith.mulf %395, %397 : vector<4x32xf32>
    %c0_204 = arith.constant 0 : index
    %c0_205 = arith.constant 0 : index
    %399 = vector.load %arg35[%c0_204, %c0_205] : memref<4x32xf32, #tpu.memory_space<vmem>>, vector<4x32xf32>
    tpu.vector_store %arg35[%c0_204, %c0_205], %398 {strides = array<i32>} : memref<4x32xf32, #tpu.memory_space<vmem>>, vector<4x32xf32>,
    return
  }
  func.func @transform_0(%arg0: i32) -> (i32, i32) {
    %c0_i32 = arith.constant 0 : i32
    %c0_i32_0 = arith.constant 0 : i32
    %c0_i32_1 = arith.constant 0 : i32
    return %c0_i32, %c0_i32_0 : i32, i32
  }
  func.func @transform_1(%arg0: i32) -> (i32, i32) {
    %c0_i32 = arith.constant 0 : i32
    %c0_i32_0 = arith.constant 0 : i32
    %c0_i32_1 = arith.constant 0 : i32
    return %c0_i32, %c0_i32_0 : i32, i32
  }
  func.func @transform_2(%arg0: i32) -> (i32, i32) {
    %c0_i32 = arith.constant 0 : i32
    %c0_i32_0 = arith.constant 0 : i32
    %c0_i32_1 = arith.constant 0 : i32
    return %c0_i32, %c0_i32_0 : i32, i32
  }
  func.func @transform_3(%arg0: i32) -> (i32, i32) {
    %c0_i32 = arith.constant 0 : i32
    %c0_i32_0 = arith.constant 0 : i32
    %c0_i32_1 = arith.constant 0 : i32
    return %c0_i32, %c0_i32_0 : i32, i32
  }
  func.func @transform_4(%arg0: i32) -> (i32, i32) {
    %c0_i32 = arith.constant 0 : i32
    %c0_i32_0 = arith.constant 0 : i32
    %c0_i32_1 = arith.constant 0 : i32
    return %c0_i32, %c0_i32_0 : i32, i32
  }
  func.func @transform_5(%arg0: i32) -> (i32, i32) {
    %c0_i32 = arith.constant 0 : i32
    %c0_i32_0 = arith.constant 0 : i32
    %c0_i32_1 = arith.constant 0 : i32
    return %c0_i32, %c0_i32_0 : i32, i32
  }
  func.func @transform_6(%arg0: i32) -> (i32, i32) {
    %c0_i32 = arith.constant 0 : i32
    %c0_i32_0 = arith.constant 0 : i32
    %c0_i32_1 = arith.constant 0 : i32
    return %c0_i32, %c0_i32_0 : i32, i32
  }
  func.func @transform_7(%arg0: i32) -> (i32, i32) {
    %c0_i32 = arith.constant 0 : i32
    %c0_i32_0 = arith.constant 0 : i32
    %c0_i32_1 = arith.constant 0 : i32
    return %c0_i32, %c0_i32_0 : i32, i32
  }
  func.func @transform_8(%arg0: i32) -> (i32, i32) {
    %c0_i32 = arith.constant 0 : i32
    %c0_i32_0 = arith.constant 0 : i32
    %c0_i32_1 = arith.constant 0 : i32
    return %c0_i32, %c0_i32_0 : i32, i32
  }
  func.func @transform_9(%arg0: i32) -> (i32, i32) {
    %c0_i32 = arith.constant 0 : i32
    %c0_i32_0 = arith.constant 0 : i32
    %c0_i32_1 = arith.constant 0 : i32
    return %c0_i32, %c0_i32_0 : i32, i32
  }
  func.func @transform_10(%arg0: i32) -> (i32, i32) {
    %c0_i32 = arith.constant 0 : i32
    %c0_i32_0 = arith.constant 0 : i32
    %c0_i32_1 = arith.constant 0 : i32
    return %c0_i32, %c0_i32_0 : i32, i32
  }
  func.func @transform_11(%arg0: i32) -> (i32, i32) {
    %c0_i32 = arith.constant 0 : i32
    %c0_i32_0 = arith.constant 0 : i32
    %c0_i32_1 = arith.constant 0 : i32
    return %c0_i32, %c0_i32_0 : i32, i32
  }
  func.func @transform_12(%arg0: i32) -> (i32, i32) {
    %c0_i32 = arith.constant 0 : i32
    %c0_i32_0 = arith.constant 0 : i32
    %c0_i32_1 = arith.constant 0 : i32
    return %c0_i32, %c0_i32_0 : i32, i32
  }
  func.func @transform_13(%arg0: i32) -> (i32, i32) {
    %c0_i32 = arith.constant 0 : i32
    %c0_i32_0 = arith.constant 0 : i32
    %c0_i32_1 = arith.constant 0 : i32
    return %c0_i32, %c0_i32_0 : i32, i32
  }
  func.func @transform_14(%arg0: i32) -> (i32, i32) {
    %c0_i32 = arith.constant 0 : i32
    %c0_i32_0 = arith.constant 0 : i32
    %c0_i32_1 = arith.constant 0 : i32
    return %c0_i32, %c0_i32_0 : i32, i32
  }
  func.func @transform_15(%arg0: i32) -> (i32, i32) {
    %c0_i32 = arith.constant 0 : i32
    %c0_i32_0 = arith.constant 0 : i32
    %c0_i32_1 = arith.constant 0 : i32
    return %c0_i32, %c0_i32_0 : i32, i32
  }
  func.func @transform_16(%arg0: i32) -> (i32, i32) {
    %c0_i32 = arith.constant 0 : i32
    %c0_i32_0 = arith.constant 0 : i32
    %c0_i32_1 = arith.constant 0 : i32
    return %c0_i32, %c0_i32_0 : i32, i32
  }
  func.func @transform_17(%arg0: i32) -> (i32, i32) {
    %c0_i32 = arith.constant 0 : i32
    %c0_i32_0 = arith.constant 0 : i32
    %c0_i32_1 = arith.constant 0 : i32
    return %c0_i32, %c0_i32_0 : i32, i32
  }
  func.func @transform_18(%arg0: i32) -> (i32, i32, i32) {
    %c0_i32 = arith.constant 0 : i32
    %c0_i32_0 = arith.constant 0 : i32
    %c0_i32_1 = arith.constant 0 : i32
    %c0_i32_2 = arith.constant 0 : i32
    return %c0_i32, %c0_i32_0, %c0_i32_1 : i32, i32, i32
  }
  func.func @transform_19(%arg0: i32) -> (i32, i32, i32) {
    %c0_i32 = arith.constant 0 : i32
    %c0_i32_0 = arith.constant 0 : i32
    %c0_i32_1 = arith.constant 0 : i32
    %c0_i32_2 = arith.constant 0 : i32
    return %c0_i32, %c0_i32_0, %c0_i32_1 : i32, i32, i32
  }
  func.func @transform_20(%arg0: i32) -> (i32, i32, i32) {
    %c0_i32 = arith.constant 0 : i32
    %c0_i32_0 = arith.constant 0 : i32
    %c0_i32_1 = arith.constant 0 : i32
    %c0_i32_2 = arith.constant 0 : i32
    return %c0_i32, %c0_i32_0, %c0_i32_1 : i32, i32, i32
  }
  func.func @transform_21(%arg0: i32) -> (i32, i32, i32) {
    %c0_i32 = arith.constant 0 : i32
    %c0_i32_0 = arith.constant 0 : i32
    %c0_i32_1 = arith.constant 0 : i32
    %c0_i32_2 = arith.constant 0 : i32
    return %c0_i32, %c0_i32_0, %c0_i32_1 : i32, i32, i32
  }
  func.func @transform_22(%arg0: i32) -> (i32, i32, i32) {
    %c0_i32 = arith.constant 0 : i32
    %c0_i32_0 = arith.constant 0 : i32
    %c0_i32_1 = arith.constant 0 : i32
    %c0_i32_2 = arith.constant 0 : i32
    return %c0_i32, %c0_i32_0, %c0_i32_1 : i32, i32, i32
  }
  func.func @transform_23(%arg0: i32) -> (i32, i32, i32) {
    %c0_i32 = arith.constant 0 : i32
    %c0_i32_0 = arith.constant 0 : i32
    %c0_i32_1 = arith.constant 0 : i32
    %c0_i32_2 = arith.constant 0 : i32
    return %c0_i32, %c0_i32_0, %c0_i32_1 : i32, i32, i32
  }
  func.func @transform_24(%arg0: i32) -> (i32, i32, i32) {
    %c0_i32 = arith.constant 0 : i32
    %c0_i32_0 = arith.constant 0 : i32
    %c0_i32_1 = arith.constant 0 : i32
    %c0_i32_2 = arith.constant 0 : i32
    return %c0_i32, %c0_i32_0, %c0_i32_1 : i32, i32, i32
  }
  func.func @transform_25(%arg0: i32) -> (i32, i32, i32) {
    %c0_i32 = arith.constant 0 : i32
    %c0_i32_0 = arith.constant 0 : i32
    %c0_i32_1 = arith.constant 0 : i32
    %c0_i32_2 = arith.constant 0 : i32
    return %c0_i32, %c0_i32_0, %c0_i32_1 : i32, i32, i32
  }
  func.func @transform_26(%arg0: i32) -> (i32, i32, i32) {
    %c0_i32 = arith.constant 0 : i32
    %c0_i32_0 = arith.constant 0 : i32
    %c0_i32_1 = arith.constant 0 : i32
    %c0_i32_2 = arith.constant 0 : i32
    return %c0_i32, %c0_i32_0, %c0_i32_1 : i32, i32, i32
  }
  func.func @transform_27(%arg0: i32) -> (i32, i32, i32) {
    %c0_i32 = arith.constant 0 : i32
    %c0_i32_0 = arith.constant 0 : i32
    %c0_i32_1 = arith.constant 0 : i32
    %c0_i32_2 = arith.constant 0 : i32
    return %c0_i32, %c0_i32_0, %c0_i32_1 : i32, i32, i32
  }
  func.func @transform_28(%arg0: i32) -> (i32, i32, i32) {
    %c0_i32 = arith.constant 0 : i32
    %c0_i32_0 = arith.constant 0 : i32
    %c0_i32_1 = arith.constant 0 : i32
    %c0_i32_2 = arith.constant 0 : i32
    return %c0_i32, %c0_i32_0, %c0_i32_1 : i32, i32, i32
  }
  func.func @transform_29(%arg0: i32) -> (i32, i32) {
    %c0_i32 = arith.constant 0 : i32
    %c0_i32_0 = arith.constant 0 : i32
    %c0_i32_1 = arith.constant 0 : i32
    return %c0_i32, %c0_i32_0 : i32, i32
  }
  func.func @transform_30(%arg0: i32) -> (i32, i32, i32) {
    %c0_i32 = arith.constant 0 : i32
    %c0_i32_0 = arith.constant 0 : i32
    %c0_i32_1 = arith.constant 0 : i32
    %c0_i32_2 = arith.constant 0 : i32
    return %c0_i32, %c0_i32_0, %c0_i32_1 : i32, i32, i32
  }
  func.func @transform_31(%arg0: i32) -> (i32, i32) {
    %c0_i32 = arith.constant 0 : i32
    %c0_i32_0 = arith.constant 0 : i32
    %c0_i32_1 = arith.constant 0 : i32
    return %c0_i32, %c0_i32_0 : i32, i32
  }
  func.func @transform_32(%arg0: i32) -> (i32, i32) {
    %c0_i32 = arith.constant 0 : i32
    %c0_i32_0 = arith.constant 0 : i32
    %c0_i32_1 = arith.constant 0 : i32
    return %c0_i32, %c0_i32_0 : i32, i32
  }
  func.func @transform_33(%arg0: i32) -> (i32, i32) {
    %c0_i32 = arith.constant 0 : i32
    %c0_i32_0 = arith.constant 0 : i32
    %c0_i32_1 = arith.constant 0 : i32
    return %c0_i32, %c0_i32_0 : i32, i32
  }
  func.func @transform_34(%arg0: i32) -> (i32, i32) {
    %c0_i32 = arith.constant 0 : i32
    %c0_i32_0 = arith.constant 0 : i32
    %c0_i32_1 = arith.constant 0 : i32
    return %c0_i32, %c0_i32_0 : i32, i32
  }
}

</mosaic_0001>

<llo_original>
// kernel: _encode_impl.1
$region0: #{_encode_impl.1}
  #allocation0 [shape = 'u32[]', space=smem, size = 0x4, offset = 0x4, fixed_abs, tag = 'smem constant byte address 0x4 - core index']
  #allocation1 [shape = 'u32[144,128]{1,0:T(1,128)}', space=vmem, size = 0x12000, scoped, tag = 'internal scratch']
  %s0 = inlined_call_operand.smem [shape: u32[35], index: -1, kind: input, shape index: {}]
  %s1 = sld [smem:[%s0]]
  %s2 = scalar_lea.smem %s0, 1
  %s3 = sld [smem:[%s2]]
  %s4 = scalar_lea.smem %s0, 2
  %s5 = sld [smem:[%s4]]
  %s6 = scalar_lea.smem %s0, 3
  %s7 = sld [smem:[%s6]]
  %s8 = scalar_lea.smem %s0, 4
  %s9 = sld [smem:[%s8]]
  %s10 = scalar_lea.smem %s0, 5
  %s11 = sld [smem:[%s10]]
  %s12 = scalar_lea.smem %s0, 6
  %s13 = sld [smem:[%s12]]
  %s14 = scalar_lea.smem %s0, 7
  %s15 = sld [smem:[%s14]]
  %s16 = scalar_lea.smem %s0, 8
  %s17 = sld [smem:[%s16]]
  %s18 = scalar_lea.smem %s0, 9
  %s19 = sld [smem:[%s18]]
  %s20 = scalar_lea.smem %s0, 10
  %s21 = sld [smem:[%s20]]
  %s22 = scalar_lea.smem %s0, 11
  %s23 = sld [smem:[%s22]]
  %s24 = scalar_lea.smem %s0, 12
  %s25 = sld [smem:[%s24]]
  %s26 = scalar_lea.smem %s0, 13
  %s27 = sld [smem:[%s26]]
  %s28 = scalar_lea.smem %s0, 14
  %s29 = sld [smem:[%s28]]
  %s30 = scalar_lea.smem %s0, 15
  %s31 = sld [smem:[%s30]]
  %s32 = scalar_lea.smem %s0, 16
  %s33 = sld [smem:[%s32]]
  %s34 = scalar_lea.smem %s0, 17
  %s35 = sld [smem:[%s34]]
  %s36 = scalar_lea.smem %s0, 18
  %s37 = sld [smem:[%s36]]
  %s38 = scalar_lea.smem %s0, 19
  %s39 = sld [smem:[%s38]]
  %s40 = scalar_lea.smem %s0, 20
  %s41 = sld [smem:[%s40]]
  %s42 = scalar_lea.smem %s0, 21
  %s43 = sld [smem:[%s42]]
  %s44 = scalar_lea.smem %s0, 22
  %s45 = sld [smem:[%s44]]
  %s46 = scalar_lea.smem %s0, 23
  %s47 = sld [smem:[%s46]]
  %s48 = scalar_lea.smem %s0, 24
  %s49 = sld [smem:[%s48]]
  %s50 = scalar_lea.smem %s0, 25
  %s51 = sld [smem:[%s50]]
  %s52 = scalar_lea.smem %s0, 26
  %s53 = sld [smem:[%s52]]
  %s54 = scalar_lea.smem %s0, 27
  %s55 = sld [smem:[%s54]]
  %s56 = scalar_lea.smem %s0, 28
  %s57 = sld [smem:[%s56]]
  %s58 = scalar_lea.smem %s0, 29
  %s59 = sld [smem:[%s58]]
  %s60 = scalar_lea.smem %s0, 30
  %s61 = sld [smem:[%s60]]
  %s62 = scalar_lea.smem %s0, 31
  %s63 = sld [smem:[%s62]]
  %s64 = scalar_lea.smem %s0, 32
  %s65 = sld [smem:[%s64]]
  %s66 = scalar_lea.smem %s0, 33
  %s67 = sld [smem:[%s66]]
  %s68 = scalar_lea.smem %s0, 34
  %s69 = sld [smem:[%s68]]
  %s70 = sld [smem:[#allocation0]]
  $region146: #{_encode_impl.1} parent=0
    _
  %s72 = ssub.s32 1, %s70
  %s73 = scalar_select 0, %s72, %s70
  $region1: #{_encode_impl.1} parent=0
    #allocation2 [shape = 'u8[2048]{0}', space=vmem, size = 0x800, scoped, tag = 'output window, operand 0, single buffered']
    #allocation3 [shape = 's32[1]{0}', space=sflag, size = 0x4, scoped, tag = 'scoped memory for _encode_impl.1']
    %74 = vsyncpa [#allocation3], 0
    // Predicated region
    $region2: #{_encode_impl.1} parent=1 // pred_check
      _
    $region3: #{_encode_impl.1} parent=1 // pred_check_branch
      %76 = sbr.rel (0) target = $region5
    $region4: #{_encode_impl.1} parent=1 // pred_region
      _
    $region5: #{_encode_impl.1} parent=1 // pred_fallthru
      _
    // Predicated region
    $region6: #{_encode_impl.1} parent=1 // pred_check
      _
    $region7: #{_encode_impl.1} parent=1 // pred_check_branch
      %78 = sbr.rel (0) target = $region9
    $region8: #{_encode_impl.1} parent=1 // pred_region
      _
    $region9: #{_encode_impl.1} parent=1 // pred_fallthru
      _
    // Predicated region
    $region10: #{_encode_impl.1} parent=1 // pred_check
      _
    $region11: #{_encode_impl.1} parent=1 // pred_check_branch
      %80 = sbr.rel (0) target = $region13
    $region12: #{_encode_impl.1} parent=1 // pred_region
      _
    $region13: #{_encode_impl.1} parent=1 // pred_fallthru
      _
    // Predicated region
    $region14: #{_encode_impl.1} parent=1 // pred_check
      _
    $region15: #{_encode_impl.1} parent=1 // pred_check_branch
      %82 = sbr.rel (0) target = $region17
    $region16: #{_encode_impl.1} parent=1 // pred_region
      _
    $region17: #{_encode_impl.1} parent=1 // pred_fallthru
      _
    // Predicated region
    $region18: #{_encode_impl.1} parent=1 // pred_check
      _
    $region19: #{_encode_impl.1} parent=1 // pred_check_branch
      %84 = sbr.rel (0) target = $region21
    $region20: #{_encode_impl.1} parent=1 // pred_region
      _
    $region21: #{_encode_impl.1} parent=1 // pred_fallthru
      _
    // Predicated region
    $region22: #{_encode_impl.1} parent=1 // pred_check
      _
    $region23: #{_encode_impl.1} parent=1 // pred_check_branch
      %86 = sbr.rel (0) target = $region25
    $region24: #{_encode_impl.1} parent=1 // pred_region
      _
    $region25: #{_encode_impl.1} parent=1 // pred_fallthru
      _
    // Predicated region
    $region26: #{_encode_impl.1} parent=1 // pred_check
      _
    $region27: #{_encode_impl.1} parent=1 // pred_check_branch
      %88 = sbr.rel (0) target = $region29
    $region28: #{_encode_impl.1} parent=1 // pred_region
      _
    $region29: #{_encode_impl.1} parent=1 // pred_fallthru
      _
    // Predicated region
    $region30: #{_encode_impl.1} parent=1 // pred_check
      _
    $region31: #{_encode_impl.1} parent=1 // pred_check_branch
      %90 = sbr.rel (0) target = $region33
    $region32: #{_encode_impl.1} parent=1 // pred_region
      _
    $region33: #{_encode_impl.1} parent=1 // pred_fallthru
      _
    // Predicated region
    $region34: #{_encode_impl.1} parent=1 // pred_check
      _
    $region35: #{_encode_impl.1} parent=1 // pred_check_branch
      %92 = sbr.rel (0) target = $region37
    $region36: #{_encode_impl.1} parent=1 // pred_region
      _
    $region37: #{_encode_impl.1} parent=1 // pred_fallthru
      _
    // Predicated region
    $region38: #{_encode_impl.1} parent=1 // pred_check
      _
    $region39: #{_encode_impl.1} parent=1 // pred_check_branch
      %94 = sbr.rel (0) target = $region41
    $region40: #{_encode_impl.1} parent=1 // pred_region
      _
    $region41: #{_encode_impl.1} parent=1 // pred_fallthru
      _
    // Predicated region
    $region42: #{_encode_impl.1} parent=1 // pred_check
      _
    $region43: #{_encode_impl.1} parent=1 // pred_check_branch
      %96 = sbr.rel (0) target = $region45
    $region44: #{_encode_impl.1} parent=1 // pred_region
      _
    $region45: #{_encode_impl.1} parent=1 // pred_fallthru
      _
    // Predicated region
    $region46: #{_encode_impl.1} parent=1 // pred_check
      _
    $region47: #{_encode_impl.1} parent=1 // pred_check_branch
      %98 = sbr.rel (0) target = $region49
    $region48: #{_encode_impl.1} parent=1 // pred_region
      _
    $region49: #{_encode_impl.1} parent=1 // pred_fallthru
      _
    // Predicated region
    $region50: #{_encode_impl.1} parent=1 // pred_check
      _
    $region51: #{_encode_impl.1} parent=1 // pred_check_branch
      %100 = sbr.rel (0) target = $region53
    $region52: #{_encode_impl.1} parent=1 // pred_region
      _
    $region53: #{_encode_impl.1} parent=1 // pred_fallthru
      _
    // Predicated region
    $region54: #{_encode_impl.1} parent=1 // pred_check
      _
    $region55: #{_encode_impl.1} parent=1 // pred_check_branch
      %102 = sbr.rel (0) target = $region57
    $region56: #{_encode_impl.1} parent=1 // pred_region
      _
    $region57: #{_encode_impl.1} parent=1 // pred_fallthru
      _
    // Predicated region
    $region58: #{_encode_impl.1} parent=1 // pred_check
      _
    $region59: #{_encode_impl.1} parent=1 // pred_check_branch
      %104 = sbr.rel (0) target = $region61
    $region60: #{_encode_impl.1} parent=1 // pred_region
      _
    $region61: #{_encode_impl.1} parent=1 // pred_fallthru
      _
    // Predicated region
    $region62: #{_encode_impl.1} parent=1 // pred_check
      _
    $region63: #{_encode_impl.1} parent=1 // pred_check_branch
      %106 = sbr.rel (0) target = $region65
    $region64: #{_encode_impl.1} parent=1 // pred_region
      _
    $region65: #{_encode_impl.1} parent=1 // pred_fallthru
      _
    // Predicated region
    $region66: #{_encode_impl.1} parent=1 // pred_check
      _
    $region67: #{_encode_impl.1} parent=1 // pred_check_branch
      %108 = sbr.rel (0) target = $region69
    $region68: #{_encode_impl.1} parent=1 // pred_region
      _
    $region69: #{_encode_impl.1} parent=1 // pred_fallthru
      _
    // Predicated region
    $region70: #{_encode_impl.1} parent=1 // pred_check
      _
    $region71: #{_encode_impl.1} parent=1 // pred_check_branch
      %110 = sbr.rel (0) target = $region73
    $region72: #{_encode_impl.1} parent=1 // pred_region
      _
    $region73: #{_encode_impl.1} parent=1 // pred_fallthru
      _
    // Predicated region
    $region74: #{_encode_impl.1} parent=1 // pred_check
      _
    $region75: #{_encode_impl.1} parent=1 // pred_check_branch
      %112 = sbr.rel (0) target = $region77
    $region76: #{_encode_impl.1} parent=1 // pred_region
      _
    $region77: #{_encode_impl.1} parent=1 // pred_fallthru
      _
    // Predicated region
    $region78: #{_encode_impl.1} parent=1 // pred_check
      _
    $region79: #{_encode_impl.1} parent=1 // pred_check_branch
      %114 = sbr.rel (0) target = $region81
    $region80: #{_encode_impl.1} parent=1 // pred_region
      _
    $region81: #{_encode_impl.1} parent=1 // pred_fallthru
      _
    // Predicated region
    $region82: #{_encode_impl.1} parent=1 // pred_check
      _
    $region83: #{_encode_impl.1} parent=1 // pred_check_branch
      %116 = sbr.rel (0) target = $region85
    $region84: #{_encode_impl.1} parent=1 // pred_region
      _
    $region85: #{_encode_impl.1} parent=1 // pred_fallthru
      _
    // Predicated region
    $region86: #{_encode_impl.1} parent=1 // pred_check
      _
    $region87: #{_encode_impl.1} parent=1 // pred_check_branch
      %118 = sbr.rel (0) target = $region89
    $region88: #{_encode_impl.1} parent=1 // pred_region
      _
    $region89: #{_encode_impl.1} parent=1 // pred_fallthru
      _
    // Predicated region
    $region90: #{_encode_impl.1} parent=1 // pred_check
      _
    $region91: #{_encode_impl.1} parent=1 // pred_check_branch
      %120 = sbr.rel (0) target = $region93
    $region92: #{_encode_impl.1} parent=1 // pred_region
      _
    $region93: #{_encode_impl.1} parent=1 // pred_fallthru
      _
    // Predicated region
    $region94: #{_encode_impl.1} parent=1 // pred_check
      _
    $region95: #{_encode_impl.1} parent=1 // pred_check_branch
      %122 = sbr.rel (0) target = $region97
    $region96: #{_encode_impl.1} parent=1 // pred_region
      _
    $region97: #{_encode_impl.1} parent=1 // pred_fallthru
      _
    // Predicated region
    $region98: #{_encode_impl.1} parent=1 // pred_check
      _
    $region99: #{_encode_impl.1} parent=1 // pred_check_branch
      %124 = sbr.rel (0) target = $region101
    $region100: #{_encode_impl.1} parent=1 // pred_region
      _
    $region101: #{_encode_impl.1} parent=1 // pred_fallthru
      _
    // Predicated region
    $region102: #{_encode_impl.1} parent=1 // pred_check
      _
    $region103: #{_encode_impl.1} parent=1 // pred_check_branch
      %126 = sbr.rel (0) target = $region105
    $region104: #{_encode_impl.1} parent=1 // pred_region
      _
    $region105: #{_encode_impl.1} parent=1 // pred_fallthru
      _
    // Predicated region
    $region106: #{_encode_impl.1} parent=1 // pred_check
      _
    $region107: #{_encode_impl.1} parent=1 // pred_check_branch
      %128 = sbr.rel (0) target = $region109
    $region108: #{_encode_impl.1} parent=1 // pred_region
      _
    $region109: #{_encode_impl.1} parent=1 // pred_fallthru
      _
    // Predicated region
    $region110: #{_encode_impl.1} parent=1 // pred_check
      _
    $region111: #{_encode_impl.1} parent=1 // pred_check_branch
      %130 = sbr.rel (0) target = $region113
    $region112: #{_encode_impl.1} parent=1 // pred_region
      _
    $region113: #{_encode_impl.1} parent=1 // pred_fallthru
      _
    // Predicated region
    $region114: #{_encode_impl.1} parent=1 // pred_check
      _
    $region115: #{_encode_impl.1} parent=1 // pred_check_branch
      %132 = sbr.rel (0) target = $region117
    $region116: #{_encode_impl.1} parent=1 // pred_region
      _
    $region117: #{_encode_impl.1} parent=1 // pred_fallthru
      _
    // Predicated region
    $region118: #{_encode_impl.1} parent=1 // pred_check
      _
    $region119: #{_encode_impl.1} parent=1 // pred_check_branch
      %134 = sbr.rel (0) target = $region121
    $region120: #{_encode_impl.1} parent=1 // pred_region
      _
    $region121: #{_encode_impl.1} parent=1 // pred_fallthru
      _
    // Predicated region
    $region122: #{_encode_impl.1} parent=1 // pred_check
      _
    $region123: #{_encode_impl.1} parent=1 // pred_check_branch
      %136 = sbr.rel (0) target = $region125
    $region124: #{_encode_impl.1} parent=1 // pred_region
      _
    $region125: #{_encode_impl.1} parent=1 // pred_fallthru
      _
    // Predicated region
    $region126: #{_encode_impl.1} parent=1 // pred_check
      _
    $region127: #{_encode_impl.1} parent=1 // pred_check_branch
      %138 = sbr.rel (0) target = $region129
    $region128: #{_encode_impl.1} parent=1 // pred_region
      _
    $region129: #{_encode_impl.1} parent=1 // pred_fallthru
      _
    // Predicated region
    $region130: #{_encode_impl.1} parent=1 // pred_check
      _
    $region131: #{_encode_impl.1} parent=1 // pred_check_branch
      %140 = sbr.rel (0) target = $region133
    $region132: #{_encode_impl.1} parent=1 // pred_region
      _
    $region133: #{_encode_impl.1} parent=1 // pred_fallthru
      _
    // Predicated region
    $region134: #{_encode_impl.1} parent=1 // pred_check
      _
    $region135: #{_encode_impl.1} parent=1 // pred_check_branch
      %142 = sbr.rel (0) target = $region137
    $region136: #{_encode_impl.1} parent=1 // pred_region
      _
    $region137: #{_encode_impl.1} parent=1 // pred_fallthru
      _
    %v143 = vld [vmem:[%s1] sm:$0xff]
    %v144 = vld [vmem:[%s1 + $0x8] sm:$0xff]
    %v145 = vld [vmem:[%s1 + $0x10] sm:$0xff]
    %v146 = vld [vmem:[%s1 + $0x18] sm:$0xff]
    %v147 = vld [vmem:[%s21] sm:$0xff]
    %v148 = vld [vmem:[%s21 + $0x8] sm:$0xff]
    %v149 = vld [vmem:[%s21 + $0x10] sm:$0xff]
    %v150 = vld [vmem:[%s21 + $0x18] sm:$0xff]
    %v151 = vld [vmem:[%s21 + $0x20] sm:$0xff]
    %v152 = vld [vmem:[%s21 + $0x28] sm:$0xff]
    %v153 = vld [vmem:[%s21 + $0x30] sm:$0xff]
    %v154 = vld [vmem:[%s21 + $0x38] sm:$0xff]
    %v155 = vld [vmem:[%s21 + $0x40] sm:$0xff]
    %v156 = vld [vmem:[%s21 + $0x48] sm:$0xff]
    %v157 = vld [vmem:[%s21 + $0x50] sm:$0xff]
    %v158 = vld [vmem:[%s21 + $0x58] sm:$0xff]
    %v159 = vld [vmem:[%s21 + $0x60] sm:$0xff]
    %v160 = vld [vmem:[%s21 + $0x68] sm:$0xff]
    %v161 = vld [vmem:[%s21 + $0x70] sm:$0xff]
    %v162 = vld [vmem:[%s21 + $0x78] sm:$0xff]
    %v163 = vld [vmem:[%s21 + $0x80] sm:$0xff]
    %v164 = vld [vmem:[%s21 + $0x88] sm:$0xff]
    %v165 = vld [vmem:[%s21 + $0x90] sm:$0xff]
    %v166 = vld [vmem:[%s21 + $0x98] sm:$0xff]
    %v167 = vld [vmem:[%s21 + $0xa0] sm:$0xff]
    %v168 = vld [vmem:[%s21 + $0xa8] sm:$0xf]
    %v169 = vld [vmem:[%s23] sm:$0x1]
    %v171 = vlaneseq
    %v172 = vshrl.u32 %v171, 7
    %v173 = vsub.s32 0, %v172
    %v174 = vrot.slane %v169, %v173
    %vm176 = vcmask 359424
    %v178 = vsel %vm176, %v144, 0
    %v181 = vsel %vm176, %v146, 0
    %vm183 = vcmask 1043456
    %v185 = vsel %vm183, %v168, 0
    %187 = vmatprep.subr.mxu0 0.0
    %188 = vmatpush1.msra.mxu0 %v147
    %189 = vmatprep.subr.mxu0 0.0
    %190 = vmatpush1.msra.mxu0 %v148
    %191 = vmatprep.subr.mxu0 0.0
    %192 = vmatpush1.msra.mxu0 %v149
    %193 = vmatprep.subr.mxu0 0.0
    %194 = vmatpush1.msra.mxu0 %v150
    %195 = vmatprep.subr.mxu0 0.0
    %196 = vmatpush1.msra.mxu0 %v151
    %197 = vmatprep.subr.mxu0 0.0
    %198 = vmatpush1.msra.mxu0 %v152
    %199 = vmatprep.subr.mxu0 0.0
    %200 = vmatpush1.msra.mxu0 %v153
    %201 = vmatprep.subr.mxu0 0.0
    %202 = vmatpush1.msra.mxu0 %v154
    %203 = vmatprep.subr.mxu0 0.0
    %204 = vmatpush1.msra.mxu0 %v155
    %205 = vmatprep.subr.mxu0 0.0
    %206 = vmatpush1.msra.mxu0 %v156
    %207 = vmatprep.subr.mxu0 0.0
    %208 = vmatpush1.msra.mxu0 %v157
    %209 = vmatprep.subr.mxu0 0.0
    %210 = vmatpush1.msra.mxu0 %v158
    %211 = vmatprep.subr.mxu0 0.0
    %212 = vmatpush1.msra.mxu0 %v159
    %213 = vmatprep.subr.mxu0 0.0
    %214 = vmatpush1.msra.mxu0 %v160
    %215 = vmatprep.subr.mxu0 0.0
    %216 = vmatpush1.msra.mxu0 %v161
    %217 = vmatprep.subr.mxu0 0.0
    %218 = vmatpush1.msra.mxu0 %v162
    %219 = vmatprep.subr.mxu0 0.0
    %220 = vmatpush1.msra.mxu0 %v163
    %221 = vmatprep.subr.mxu0 0.0
    %222 = vmatpush1.msra.mxu0 %v164
    %223 = vmatprep.subr.mxu0 0.0
    %224 = vmatpush1.msra.mxu0 %v165
    %225 = vmatprep.subr.mxu0 0.0
    %226 = vmatpush1.msra.mxu0 %v166
    %227 = vmatprep.subr.mxu0 0.0
    %228 = vmatpush1.msra.mxu0 %v167
    %229 = vmatprep.subr.mxu0 0.0
    %230 = vmatpush1.msra.mxu0 %v185
    %231 = vmatprep.subr.mxu0 0.0
    %232 = vmatpush1.msra.mxu0 0.0
    %233 = vmatprep.subr.mxu0 0.0
    %234 = vmatpush1.msra.mxu0 0.0
    %235 = vmatprep.subr.mxu0 0.0
    %236 = vmatpush1.msra.mxu0 0.0
    %237 = vmatprep.subr.mxu0 0.0
    %238 = vmatpush1.msra.mxu0 0.0
    %239 = vmatprep.subr.mxu0 0.0
    %240 = vmatpush1.msra.mxu0 0.0
    %241 = vmatprep.subr.mxu0 0.0
    %242 = vmatpush1.msra.mxu0 0.0
    %243 = vmatprep.subr.mxu0 0.0
    %244 = vmatpush1.msra.mxu0 0.0
    %245 = vmatprep.subr.mxu0 0.0
    %246 = vmatpush1.msra.mxu0 0.0
    %247 = vmatprep.subr.mxu0 0.0
    %248 = vmatpush1.msra.mxu0 0.0
    %249 = vmatprep.subr.mxu0 0.0
    %250 = vmatpush1.msra.mxu0 0.0
    %251 = vmatprep.mubr.f32.mxu0 %v178
    %252 = vmatmul.mubr.f32.gmra.mrb[0].mxu0 %v143
    %v253 = vpop.f32.mrb[0].mxu0
    %v254 = vadd.f32 %v174, %v253
    %v255 = vpop.f32.mrb[0].mxu0
    %256 = vmatprep.mubr.f32.mxu0 %v181
    %257 = vmatmul.mubr.f32.gmra.mrb[0].mxu0 %v145
    %v258 = vpop.f32.mrb[0].mxu0
    %v259 = vadd.f32 %v174, %v258
    %v260 = vpop.f32.mrb[0].mxu0
    %261 = vdwg.mxu0
    %v262 = vmax.f32 %v254, 0.0
    %v263 = vmax.f32 %v259, 0.0
    %v264 = vld [vmem:[%s25] sm:$0xff]
    %v265 = vld [vmem:[%s25 + $0x8] sm:$0xff]
    %v266 = vld [vmem:[%s25 + $0x10] sm:$0xff]
    %v267 = vld [vmem:[%s25 + $0x18] sm:$0xff]
    %v268 = vld [vmem:[%s27] sm:$0x1]
    %v270 = vlaneseq
    %v271 = vshrl.u32 %v270, 7
    %v272 = vsub.s32 0, %v271
    %v273 = vrot.slane %v268, %v272
    %vm275 = vcmask 261120
    %v277 = vsel %vm275, %v262, 0
    %v280 = vsel %vm275, %v263, 0
    %282 = vmatprep.subr.mxu0 0.0
    %283 = vmatpush1.msra.mxu0 %v264
    %284 = vmatprep.subr.mxu0 0.0
    %285 = vmatpush1.msra.mxu0 %v265
    %286 = vmatprep.subr.mxu0 0.0
    %287 = vmatpush1.msra.mxu0 %v266
    %288 = vmatprep.subr.mxu0 0.0
    %289 = vmatpush1.msra.mxu0 %v267
    %290 = vmatprep.subr.mxu0 0.0
    %291 = vmatpush1.msra.mxu0 0.0
    %292 = vmatprep.subr.mxu0 0.0
    %293 = vmatpush1.msra.mxu0 0.0
    %294 = vmatprep.subr.mxu0 0.0
    %295 = vmatpush1.msra.mxu0 0.0
    %296 = vmatprep.subr.mxu0 0.0
    %297 = vmatpush1.msra.mxu0 0.0
    %298 = vmatprep.subr.mxu0 0.0
    %299 = vmatpush1.msra.mxu0 0.0
    %300 = vmatprep.subr.mxu0 0.0
    %301 = vmatpush1.msra.mxu0 0.0
    %302 = vmatprep.subr.mxu0 0.0
    %303 = vmatpush1.msra.mxu0 0.0
    %304 = vmatprep.subr.mxu0 0.0
    %305 = vmatpush1.msra.mxu0 0.0
    %306 = vmatprep.subr.mxu0 0.0
    %307 = vmatpush1.msra.mxu0 0.0
    %308 = vmatprep.subr.mxu0 0.0
    %309 = vmatpush1.msra.mxu0 0.0
    %310 = vmatprep.subr.mxu0 0.0
    %311 = vmatpush1.msra.mxu0 0.0
    %312 = vmatprep.subr.mxu0 0.0
    %313 = vmatpush1.msra.mxu0 0.0
    %314 = vmatprep.subr.mxu0 0.0
    %315 = vmatpush1.msra.mxu0 0.0
    %316 = vmatprep.subr.mxu0 0.0
    %317 = vmatpush1.msra.mxu0 0.0
    %318 = vmatprep.subr.mxu0 0.0
    %319 = vmatpush1.msra.mxu0 0.0
    %320 = vmatprep.subr.mxu0 0.0
    %321 = vmatpush1.msra.mxu0 0.0
    %322 = vmatprep.subr.mxu0 0.0
    %323 = vmatpush1.msra.mxu0 0.0
    %324 = vmatprep.subr.mxu0 0.0
    %325 = vmatpush1.msra.mxu0 0.0
    %326 = vmatprep.subr.mxu0 0.0
    %327 = vmatpush1.msra.mxu0 0.0
    %328 = vmatprep.subr.mxu0 0.0
    %329 = vmatpush1.msra.mxu0 0.0
    %330 = vmatprep.subr.mxu0 0.0
    %331 = vmatpush1.msra.mxu0 0.0
    %332 = vmatprep.subr.mxu0 0.0
    %333 = vmatpush1.msra.mxu0 0.0
    %334 = vmatprep.subr.mxu0 0.0
    %335 = vmatpush1.msra.mxu0 0.0
    %336 = vmatprep.subr.mxu0 0.0
    %337 = vmatpush1.msra.mxu0 0.0
    %338 = vmatprep.subr.mxu0 0.0
    %339 = vmatpush1.msra.mxu0 0.0
    %340 = vmatprep.subr.mxu0 0.0
    %341 = vmatpush1.msra.mxu0 0.0
    %342 = vmatprep.subr.mxu0 0.0
    %343 = vmatpush1.msra.mxu0 0.0
    %344 = vmatprep.subr.mxu0 0.0
    %345 = vmatpush1.msra.mxu0 0.0
    %346 = vmatprep.mubr.f32.mxu0 0.0
    %347 = vmatmul.mubr.f32.gmra.mrb[0].mxu0 %v277
    %v348 = vpop.f32.mrb[0].mxu0
    %v349 = vadd.f32 %v273, %v348
    %v350 = vpop.f32.mrb[0].mxu0
    %351 = vmatprep.mubr.f32.mxu0 0.0
    %352 = vmatmul.mubr.f32.gmra.mrb[0].mxu0 %v280
    %v353 = vpop.f32.mrb[0].mxu0
    %v354 = vadd.f32 %v273, %v353
    %v355 = vpop.f32.mrb[0].mxu0
    %356 = vdwg.mxu0
    %v357 = vmax.f32 %v349, 0.0
    %v358 = vmax.f32 %v354, 0.0
    %v359 = vld [vmem:[%s29] sm:$0xff]
    %v360 = vld [vmem:[%s29 + $0x8] sm:$0xff]
    %v361 = vld [vmem:[%s31] sm:$0x1]
    %v363 = vlaneseq
    %v364 = vshrl.u32 %v363, 7
    %v365 = vsub.s32 0, %v364
    %v366 = vrot.slane %v361, %v365
    %vm368 = vcmask 130048
    %v370 = vsel %vm368, %v357, 0
    %v373 = vsel %vm368, %v358, 0
    %375 = vmatprep.subr.mxu0 0.0
    %376 = vmatpush1.msra.mxu0 %v359
    %377 = vmatprep.subr.mxu0 0.0
    %378 = vmatpush1.msra.mxu0 %v360
    %379 = vmatprep.subr.mxu0 0.0
    %380 = vmatpush1.msra.mxu0 0.0
    %381 = vmatprep.subr.mxu0 0.0
    %382 = vmatpush1.msra.mxu0 0.0
    %383 = vmatprep.subr.mxu0 0.0
    %384 = vmatpush1.msra.mxu0 0.0
    %385 = vmatprep.subr.mxu0 0.0
    %386 = vmatpush1.msra.mxu0 0.0
    %387 = vmatprep.subr.mxu0 0.0
    %388 = vmatpush1.msra.mxu0 0.0
    %389 = vmatprep.subr.mxu0 0.0
    %390 = vmatpush1.msra.mxu0 0.0
    %391 = vmatprep.subr.mxu0 0.0
    %392 = vmatpush1.msra.mxu0 0.0
    %393 = vmatprep.subr.mxu0 0.0
    %394 = vmatpush1.msra.mxu0 0.0
    %395 = vmatprep.subr.mxu0 0.0
    %396 = vmatpush1.msra.mxu0 0.0
    %397 = vmatprep.subr.mxu0 0.0
    %398 = vmatpush1.msra.mxu0 0.0
    %399 = vmatprep.subr.mxu0 0.0
    %400 = vmatpush1.msra.mxu0 0.0
    %401 = vmatprep.subr.mxu0 0.0
    %402 = vmatpush1.msra.mxu0 0.0
    %403 = vmatprep.subr.mxu0 0.0
    %404 = vmatpush1.msra.mxu0 0.0
    %405 = vmatprep.subr.mxu0 0.0
    %406 = vmatpush1.msra.mxu0 0.0
    %407 = vmatprep.subr.mxu0 0.0
    %408 = vmatpush1.msra.mxu0 0.0
    %409 = vmatprep.subr.mxu0 0.0
    %410 = vmatpush1.msra.mxu0 0.0
    %411 = vmatprep.subr.mxu0 0.0
    %412 = vmatpush1.msra.mxu0 0.0
    %413 = vmatprep.subr.mxu0 0.0
    %414 = vmatpush1.msra.mxu0 0.0
    %415 = vmatprep.subr.mxu0 0.0
    %416 = vmatpush1.msra.mxu0 0.0
    %417 = vmatprep.subr.mxu0 0.0
    %418 = vmatpush1.msra.mxu0 0.0
    %419 = vmatprep.subr.mxu0 0.0
    %420 = vmatpush1.msra.mxu0 0.0
    %421 = vmatprep.subr.mxu0 0.0
    %422 = vmatpush1.msra.mxu0 0.0
    %423 = vmatprep.subr.mxu0 0.0
    %424 = vmatpush1.msra.mxu0 0.0
    %425 = vmatprep.subr.mxu0 0.0
    %426 = vmatpush1.msra.mxu0 0.0
    %427 = vmatprep.subr.mxu0 0.0
    %428 = vmatpush1.msra.mxu0 0.0
    %429 = vmatprep.subr.mxu0 0.0
    %430 = vmatpush1.msra.mxu0 0.0
    %431 = vmatprep.subr.mxu0 0.0
    %432 = vmatpush1.msra.mxu0 0.0
    %433 = vmatprep.subr.mxu0 0.0
    %434 = vmatpush1.msra.mxu0 0.0
    %435 = vmatprep.subr.mxu0 0.0
    %436 = vmatpush1.msra.mxu0 0.0
    %437 = vmatprep.subr.mxu0 0.0
    %438 = vmatpush1.msra.mxu0 0.0
    %439 = vmatprep.mubr.f32.mxu0 0.0
    %440 = vmatmul.mubr.f32.gmra.mrb[0].mxu0 %v370
    %v441 = vpop.f32.mrb[0].mxu0
    %v442 = vadd.f32 %v366, %v441
    %v443 = vpop.f32.mrb[0].mxu0
    %444 = vmatprep.mubr.f32.mxu0 0.0
    %445 = vmatmul.mubr.f32.gmra.mrb[0].mxu0 %v373
    %v446 = vpop.f32.mrb[0].mxu0
    %v447 = vadd.f32 %v366, %v446
    %v448 = vpop.f32.mrb[0].mxu0
    %449 = vdwg.mxu0
    %v450 = vld [vmem:[%s5] sm:$0xff]
    %v451 = vld [vmem:[%s5 + $0x8] sm:$0xff]
    %v452 = vld [vmem:[%s5 + $0x10] sm:$0xff]
    %v453 = vld [vmem:[%s5 + $0x18] sm:$0xff]
    %v455 = vsel %vm275, %v442, 0
    %v458 = vsel %vm275, %v447, 0
    %460 = vmatprep.subr.mxu0 0.0
    %461 = vmatpush1.msra.mxu0 %v450
    %462 = vmatprep.subr.mxu0 0.0
    %463 = vmatpush1.msra.mxu0 %v451
    %464 = vmatprep.subr.mxu0 0.0
    %465 = vmatpush1.msra.mxu0 %v452
    %466 = vmatprep.subr.mxu0 0.0
    %467 = vmatpush1.msra.mxu0 %v453
    %468 = vmatprep.subr.mxu0 0.0
    %469 = vmatpush1.msra.mxu0 0.0
    %470 = vmatprep.subr.mxu0 0.0
    %471 = vmatpush1.msra.mxu0 0.0
    %472 = vmatprep.subr.mxu0 0.0
    %473 = vmatpush1.msra.mxu0 0.0
    %474 = vmatprep.subr.mxu0 0.0
    %475 = vmatpush1.msra.mxu0 0.0
    %476 = vmatprep.subr.mxu0 0.0
    %477 = vmatpush1.msra.mxu0 0.0
    %478 = vmatprep.subr.mxu0 0.0
    %479 = vmatpush1.msra.mxu0 0.0
    %480 = vmatprep.subr.mxu0 0.0
    %481 = vmatpush1.msra.mxu0 0.0
    %482 = vmatprep.subr.mxu0 0.0
    %483 = vmatpush1.msra.mxu0 0.0
    %484 = vmatprep.subr.mxu0 0.0
    %485 = vmatpush1.msra.mxu0 0.0
    %486 = vmatprep.subr.mxu0 0.0
    %487 = vmatpush1.msra.mxu0 0.0
    %488 = vmatprep.subr.mxu0 0.0
    %489 = vmatpush1.msra.mxu0 0.0
    %490 = vmatprep.subr.mxu0 0.0
    %491 = vmatpush1.msra.mxu0 0.0
    %492 = vmatprep.subr.mxu0 0.0
    %493 = vmatpush1.msra.mxu0 0.0
    %494 = vmatprep.subr.mxu0 0.0
    %495 = vmatpush1.msra.mxu0 0.0
    %496 = vmatprep.subr.mxu0 0.0
    %497 = vmatpush1.msra.mxu0 0.0
    %498 = vmatprep.subr.mxu0 0.0
    %499 = vmatpush1.msra.mxu0 0.0
    %500 = vmatprep.subr.mxu0 0.0
    %501 = vmatpush1.msra.mxu0 0.0
    %502 = vmatprep.subr.mxu0 0.0
    %503 = vmatpush1.msra.mxu0 0.0
    %504 = vmatprep.subr.mxu0 0.0
    %505 = vmatpush1.msra.mxu0 0.0
    %506 = vmatprep.subr.mxu0 0.0
    %507 = vmatpush1.msra.mxu0 0.0
    %508 = vmatprep.subr.mxu0 0.0
    %509 = vmatpush1.msra.mxu0 0.0
    %510 = vmatprep.subr.mxu0 0.0
    %511 = vmatpush1.msra.mxu0 0.0
    %512 = vmatprep.subr.mxu0 0.0
    %513 = vmatpush1.msra.mxu0 0.0
    %514 = vmatprep.subr.mxu0 0.0
    %515 = vmatpush1.msra.mxu0 0.0
    %516 = vmatprep.subr.mxu0 0.0
    %517 = vmatpush1.msra.mxu0 0.0
    %518 = vmatprep.subr.mxu0 0.0
    %519 = vmatpush1.msra.mxu0 0.0
    %520 = vmatprep.subr.mxu0 0.0
    %521 = vmatpush1.msra.mxu0 0.0
    %522 = vmatprep.subr.mxu0 0.0
    %523 = vmatpush1.msra.mxu0 0.0
    %524 = vmatprep.mubr.f32.mxu0 0.0
    %525 = vmatmul.mubr.f32.gmra.mrb[0].mxu0 %v455
    %v526 = vpop.f32.mrb[0].mxu0
    %v527 = vadd.f32 0.0, %v526
    %v528 = vpop.f32.mrb[0].mxu0
    %529 = vmatprep.mubr.f32.mxu0 0.0
    %530 = vmatmul.mubr.f32.gmra.mrb[0].mxu0 %v458
    %v531 = vpop.f32.mrb[0].mxu0
    %v532 = vadd.f32 0.0, %v531
    %v533 = vpop.f32.mrb[0].mxu0
    %534 = vdwg.mxu0
    %v535 = vsub.f32 %v442, %v527
    %v536 = vsub.f32 %v447, %v532
    %v537 = vmul.f32 %v535, %v535
    %v538 = vmul.f32 %v536, %v536
    %v540 = vsel %vm275, %v537, 0
    %v543 = vsel %vm275, %v538, 0
    %545 = vmatprep.subr.mxu0 0.0
    %546 = vmatpush1.msra.mxu0 %v450
    %547 = vmatprep.subr.mxu0 0.0
    %548 = vmatpush1.msra.mxu0 %v451
    %549 = vmatprep.subr.mxu0 0.0
    %550 = vmatpush1.msra.mxu0 %v452
    %551 = vmatprep.subr.mxu0 0.0
    %552 = vmatpush1.msra.mxu0 %v453
    %553 = vmatprep.subr.mxu0 0.0
    %554 = vmatpush1.msra.mxu0 0.0
    %555 = vmatprep.subr.mxu0 0.0
    %556 = vmatpush1.msra.mxu0 0.0
    %557 = vmatprep.subr.mxu0 0.0
    %558 = vmatpush1.msra.mxu0 0.0
    %559 = vmatprep.subr.mxu0 0.0
    %560 = vmatpush1.msra.mxu0 0.0
    %561 = vmatprep.subr.mxu0 0.0
    %562 = vmatpush1.msra.mxu0 0.0
    %563 = vmatprep.subr.mxu0 0.0
    %564 = vmatpush1.msra.mxu0 0.0
    %565 = vmatprep.subr.mxu0 0.0
    %566 = vmatpush1.msra.mxu0 0.0
    %567 = vmatprep.subr.mxu0 0.0
    %568 = vmatpush1.msra.mxu0 0.0
    %569 = vmatprep.subr.mxu0 0.0
    %570 = vmatpush1.msra.mxu0 0.0
    %571 = vmatprep.subr.mxu0 0.0
    %572 = vmatpush1.msra.mxu0 0.0
    %573 = vmatprep.subr.mxu0 0.0
    %574 = vmatpush1.msra.mxu0 0.0
    %575 = vmatprep.subr.mxu0 0.0
    %576 = vmatpush1.msra.mxu0 0.0
    %577 = vmatprep.subr.mxu0 0.0
    %578 = vmatpush1.msra.mxu0 0.0
    %579 = vmatprep.subr.mxu0 0.0
    %580 = vmatpush1.msra.mxu0 0.0
    %581 = vmatprep.subr.mxu0 0.0
    %582 = vmatpush1.msra.mxu0 0.0
    %583 = vmatprep.subr.mxu0 0.0
    %584 = vmatpush1.msra.mxu0 0.0
    %585 = vmatprep.subr.mxu0 0.0
    %586 = vmatpush1.msra.mxu0 0.0
    %587 = vmatprep.subr.mxu0 0.0
    %588 = vmatpush1.msra.mxu0 0.0
    %589 = vmatprep.subr.mxu0 0.0
    %590 = vmatpush1.msra.mxu0 0.0
    %591 = vmatprep.subr.mxu0 0.0
    %592 = vmatpush1.msra.mxu0 0.0
    %593 = vmatprep.subr.mxu0 0.0
    %594 = vmatpush1.msra.mxu0 0.0
    %595 = vmatprep.subr.mxu0 0.0
    %596 = vmatpush1.msra.mxu0 0.0
    %597 = vmatprep.subr.mxu0 0.0
    %598 = vmatpush1.msra.mxu0 0.0
    %599 = vmatprep.subr.mxu0 0.0
    %600 = vmatpush1.msra.mxu0 0.0
    %601 = vmatprep.subr.mxu0 0.0
    %602 = vmatpush1.msra.mxu0 0.0
    %603 = vmatprep.subr.mxu0 0.0
    %604 = vmatpush1.msra.mxu0 0.0
    %605 = vmatprep.subr.mxu0 0.0
    %606 = vmatpush1.msra.mxu0 0.0
    %607 = vmatprep.subr.mxu0 0.0
    %608 = vmatpush1.msra.mxu0 0.0
    %609 = vmatprep.mubr.f32.mxu0 0.0
    %610 = vmatmul.mubr.f32.gmra.mrb[0].mxu0 %v540
    %v611 = vpop.f32.mrb[0].mxu0
    %v612 = vadd.f32 1e-05, %v611
    %v613 = vpop.f32.mrb[0].mxu0
    %614 = vmatprep.mubr.f32.mxu0 0.0
    %615 = vmatmul.mubr.f32.gmra.mrb[0].mxu0 %v543
    %v616 = vpop.f32.mrb[0].mxu0
    %v617 = vadd.f32 1e-05, %v616
    %v618 = vpop.f32.mrb[0].mxu0
    %619 = vdwg.mxu0
    %v620 = vrsqrt.pop %v612
    %v621 = vrsqrt.pop %v617
    %v622 = vmul.f32 %v535, %v620
    %v623 = vmul.f32 %v536, %v621
    %v624 = vld [vmem:[%s33] sm:$0x1]
    %v626 = vlaneseq
    %v627 = vshrl.u32 %v626, 7
    %v628 = vsub.s32 0, %v627
    %v629 = vrot.slane %v624, %v628
    %v631 = vmul.f32 %v622, %v629
    %v632 = vmul.f32 %v623, %v629
    %v633 = vld [vmem:[%s35] sm:$0x1]
    %v635 = vlaneseq
    %v636 = vshrl.u32 %v635, 7
    %v637 = vsub.s32 0, %v636
    %v638 = vrot.slane %v633, %v637
    %v640 = vadd.f32 %v631, %v638
    %v641 = vadd.f32 %v632, %v638
    %v642 = vmul.f32 %v640, 0.70710677
    %v643 = vmul.f32 %v641, 0.70710677
    %v644 = vand.u32 2147483647, %v642
    %v645 = vand.u32 2147483647, %v643
    %v646 = vmul.f32 %v644, 0.3275911
    %v647 = vmul.f32 %v645, 0.3275911
    %v648 = vadd.f32 %v646, 1.0
    %v649 = vadd.f32 %v647, 1.0
    %v650 = vrcp.pop %v648
    %v651 = vmul.f32 1.0, %v650
    %v652 = vrcp.pop %v649
    %v653 = vmul.f32 1.0, %v652
    %v654 = vmul.f32 %v651, 1.0614054
    %v655 = vmul.f32 %v653, 1.0614054
    %v656 = vadd.f32 %v654, -1.4531521
    %v657 = vadd.f32 %v655, -1.4531521
    %v658 = vmul.f32 %v651, %v656
    %v659 = vmul.f32 %v653, %v657
    %v660 = vadd.f32 %v658, 1.4214138
    %v661 = vadd.f32 %v659, 1.4214138
    %v662 = vmul.f32 %v651, %v660
    %v663 = vmul.f32 %v653, %v661
    %v664 = vadd.f32 %v662, -0.28449672
    %v665 = vadd.f32 %v663, -0.28449672
    %v666 = vmul.f32 %v651, %v664
    %v667 = vmul.f32 %v653, %v665
    %v668 = vadd.f32 %v666, 0.2548296
    %v669 = vadd.f32 %v667, 0.2548296
    %v670 = vmul.f32 %v651, %v668
    %v671 = vmul.f32 %v653, %v669
    %v672 = vsub.f32 0.0, %v644
    %v673 = vsub.f32 0.0, %v645
    %v674 = vmul.f32 %v672, %v644
    %v675 = vmul.f32 %v673, %v645
    %v676 = vmul.f32 %v674, 1.442695
    %v677 = vpow.pop %v676
    %v678 = vmul.f32 %v675, 1.442695
    %v679 = vpow.pop %v678
    %v680 = vmul.f32 %v670, %v677
    %v681 = vmul.f32 %v671, %v679
    %v682 = vsub.f32 1.0, %v680
    %v683 = vsub.f32 1.0, %v681
    %vm684 = vcmp.lt.f32.partialorder %v642, 0.0
    %vm685 = vcmp.lt.f32.partialorder %v643, 0.0
    %v686 = vsub.f32 0.0, %v682
    %v687 = vsub.f32 0.0, %v683
    %v688 = vsel %vm684, %v686, %v682
    %v689 = vsel %vm685, %v687, %v683
    %v690 = vmul.f32 %v640, 0.5
    %v691 = vmul.f32 %v641, 0.5
    %v692 = vadd.f32 %v688, 1.0
    %v693 = vadd.f32 %v689, 1.0
    %v694 = vmul.f32 %v690, %v692
    %v695 = vmul.f32 %v691, %v693
    %v696 = vld [vmem:[%s3] sm:$0xff]
    %v697 = vld [vmem:[%s3 + $0x8] sm:$0xff]
    %v698 = vadd.f32 %v694, %v696
    %v699 = vadd.f32 %v695, %v697
    %v700 = vld [vmem:[%s7] sm:$0xff]
    %v701 = vld [vmem:[%s7 + $0x8] sm:$0xff]
    %v702 = vld [vmem:[%s45] sm:$0x3]
    %v703 = vld [vmem:[%s47] sm:$0x3]
    %v704 = vld [vmem:[%s37] sm:$0xff]
    %v705 = vld [vmem:[%s37 + $0x8] sm:$0xff]
    %v706 = vld [vmem:[%s37 + $0x10] sm:$0xff]
    %v707 = vld [vmem:[%s37 + $0x18] sm:$0xff]
    %v708 = vld [vmem:[%s39] sm:$0x1]
    %v709 = vld [vmem:[%s41] sm:$0xff]
    %v710 = vld [vmem:[%s41 + $0x8] sm:$0xff]
    %v711 = vld [vmem:[%s41 + $0x10] sm:$0xff]
    %v712 = vld [vmem:[%s41 + $0x18] sm:$0xff]
    %v713 = vld [vmem:[%s43] sm:$0x1]
    %v715 = vlaneseq
    %v716 = vshrl.u32 %v715, 7
    %v717 = vsub.s32 0, %v716
    %v718 = vrot.slane %v708, %v717
    %v721 = vsel %vm275, %v698, 0
    %v724 = vsel %vm275, %v699, 0
    %726 = vmatprep.subr.mxu0 0.0
    %727 = vmatpush1.msra.mxu0 %v704
    %728 = vmatprep.subr.mxu0 0.0
    %729 = vmatpush1.msra.mxu0 %v705
    %730 = vmatprep.subr.mxu0 0.0
    %731 = vmatpush1.msra.mxu0 %v706
    %732 = vmatprep.subr.mxu0 0.0
    %733 = vmatpush1.msra.mxu0 %v707
    %734 = vmatprep.subr.mxu0 0.0
    %735 = vmatpush1.msra.mxu0 0.0
    %736 = vmatprep.subr.mxu0 0.0
    %737 = vmatpush1.msra.mxu0 0.0
    %738 = vmatprep.subr.mxu0 0.0
    %739 = vmatpush1.msra.mxu0 0.0
    %740 = vmatprep.subr.mxu0 0.0
    %741 = vmatpush1.msra.mxu0 0.0
    %742 = vmatprep.subr.mxu0 0.0
    %743 = vmatpush1.msra.mxu0 0.0
    %744 = vmatprep.subr.mxu0 0.0
    %745 = vmatpush1.msra.mxu0 0.0
    %746 = vmatprep.subr.mxu0 0.0
    %747 = vmatpush1.msra.mxu0 0.0
    %748 = vmatprep.subr.mxu0 0.0
    %749 = vmatpush1.msra.mxu0 0.0
    %750 = vmatprep.subr.mxu0 0.0
    %751 = vmatpush1.msra.mxu0 0.0
    %752 = vmatprep.subr.mxu0 0.0
    %753 = vmatpush1.msra.mxu0 0.0
    %754 = vmatprep.subr.mxu0 0.0
    %755 = vmatpush1.msra.mxu0 0.0
    %756 = vmatprep.subr.mxu0 0.0
    %757 = vmatpush1.msra.mxu0 0.0
    %758 = vmatprep.subr.mxu0 0.0
    %759 = vmatpush1.msra.mxu0 0.0
    %760 = vmatprep.subr.mxu0 0.0
    %761 = vmatpush1.msra.mxu0 0.0
    %762 = vmatprep.subr.mxu0 0.0
    %763 = vmatpush1.msra.mxu0 0.0
    %764 = vmatprep.subr.mxu0 0.0
    %765 = vmatpush1.msra.mxu0 0.0
    %766 = vmatprep.subr.mxu0 0.0
    %767 = vmatpush1.msra.mxu0 0.0
    %768 = vmatprep.subr.mxu0 0.0
    %769 = vmatpush1.msra.mxu0 0.0
    %770 = vmatprep.subr.mxu0 0.0
    %771 = vmatpush1.msra.mxu0 0.0
    %772 = vmatprep.subr.mxu0 0.0
    %773 = vmatpush1.msra.mxu0 0.0
    %774 = vmatprep.subr.mxu0 0.0
    %775 = vmatpush1.msra.mxu0 0.0
    %776 = vmatprep.subr.mxu0 0.0
    %777 = vmatpush1.msra.mxu0 0.0
    %778 = vmatprep.subr.mxu0 0.0
    %779 = vmatpush1.msra.mxu0 0.0
    %780 = vmatprep.subr.mxu0 0.0
    %781 = vmatpush1.msra.mxu0 0.0
    %782 = vmatprep.subr.mxu0 0.0
    %783 = vmatpush1.msra.mxu0 0.0
    %784 = vmatprep.subr.mxu0 0.0
    %785 = vmatpush1.msra.mxu0 0.0
    %786 = vmatprep.subr.mxu0 0.0
    %787 = vmatpush1.msra.mxu0 0.0
    %788 = vmatprep.subr.mxu0 0.0
    %789 = vmatpush1.msra.mxu0 0.0
    %790 = vmatprep.mubr.f32.mxu0 0.0
    %791 = vmatmul.mubr.f32.gmra.mrb[0].mxu0 %v721
    %v792 = vpop.f32.mrb[0].mxu0
    %v793 = vadd.f32 %v718, %v792
    %v794 = vpop.f32.mrb[0].mxu0
    %795 = vmatprep.mubr.f32.mxu0 0.0
    %796 = vmatmul.mubr.f32.gmra.mrb[0].mxu0 %v724
    %v797 = vpop.f32.mrb[0].mxu0
    %v798 = vadd.f32 %v718, %v797
    %v799 = vpop.f32.mrb[0].mxu0
    %800 = vdwg.mxu0
    %803 = vrot.lane.b32.xlu0 %v793, 96
    %v804 = vpop.permute.xlu0 %803
    %805 = vrot.lane.b32.xlu0 %v798, 96
    %v806 = vpop.permute.xlu0 %805
    %vm807 = vcmask 64512
    %v808 = vsel %vm807, %v793, 0
    %v810 = vsel %vm807, %v798, 0
    %v812 = vsel %vm807, %v804, 0
    %v814 = vsel %vm807, %v806, 0
    %816 = vmatprep.subr.mxu0 0.0
    %817 = vmatpush1.xpose.msra.mxu0 %v812
    %818 = vmatprep.subr.mxu0 0.0
    %819 = vmatpush1.xpose.msra.mxu0 %v814
    %820 = vmatprep.subr.mxu0 0.0
    %821 = vmatpush1.xpose.msra.mxu0 0.0
    %822 = vmatprep.subr.mxu0 0.0
    %823 = vmatpush1.xpose.msra.mxu0 0.0
    %824 = vmatprep.subr.mxu0 0.0
    %825 = vmatpush1.xpose.msra.mxu0 0.0
    %826 = vmatprep.subr.mxu0 0.0
    %827 = vmatpush1.xpose.msra.mxu0 0.0
    %828 = vmatprep.subr.mxu0 0.0
    %829 = vmatpush1.xpose.msra.mxu0 0.0
    %830 = vmatprep.subr.mxu0 0.0
    %831 = vmatpush1.xpose.msra.mxu0 0.0
    %832 = vmatprep.subr.mxu0 0.0
    %833 = vmatpush1.xpose.msra.mxu0 0.0
    %834 = vmatprep.subr.mxu0 0.0
    %835 = vmatpush1.xpose.msra.mxu0 0.0
    %836 = vmatprep.subr.mxu0 0.0
    %837 = vmatpush1.xpose.msra.mxu0 0.0
    %838 = vmatprep.subr.mxu0 0.0
    %839 = vmatpush1.xpose.msra.mxu0 0.0
    %840 = vmatprep.subr.mxu0 0.0
    %841 = vmatpush1.xpose.msra.mxu0 0.0
    %842 = vmatprep.subr.mxu0 0.0
    %843 = vmatpush1.xpose.msra.mxu0 0.0
    %844 = vmatprep.subr.mxu0 0.0
    %845 = vmatpush1.xpose.msra.mxu0 0.0
    %846 = vmatprep.subr.mxu0 0.0
    %847 = vmatpush1.xpose.msra.mxu0 0.0
    %848 = vmatprep.subr.mxu0 0.0
    %849 = vmatpush1.xpose.msra.mxu0 0.0
    %850 = vmatprep.subr.mxu0 0.0
    %851 = vmatpush1.xpose.msra.mxu0 0.0
    %852 = vmatprep.subr.mxu0 0.0
    %853 = vmatpush1.xpose.msra.mxu0 0.0
    %854 = vmatprep.subr.mxu0 0.0
    %855 = vmatpush1.xpose.msra.mxu0 0.0
    %856 = vmatprep.subr.mxu0 0.0
    %857 = vmatpush1.xpose.msra.mxu0 0.0
    %858 = vmatprep.subr.mxu0 0.0
    %859 = vmatpush1.xpose.msra.mxu0 0.0
    %860 = vmatprep.subr.mxu0 0.0
    %861 = vmatpush1.xpose.msra.mxu0 0.0
    %862 = vmatprep.subr.mxu0 0.0
    %863 = vmatpush1.xpose.msra.mxu0 0.0
    %864 = vmatprep.subr.mxu0 0.0
    %865 = vmatpush1.xpose.msra.mxu0 0.0
    %866 = vmatprep.subr.mxu0 0.0
    %867 = vmatpush1.xpose.msra.mxu0 0.0
    %868 = vmatprep.subr.mxu0 0.0
    %869 = vmatpush1.xpose.msra.mxu0 0.0
    %870 = vmatprep.subr.mxu0 0.0
    %871 = vmatpush1.xpose.msra.mxu0 0.0
    %872 = vmatprep.subr.mxu0 0.0
    %873 = vmatpush1.xpose.msra.mxu0 0.0
    %874 = vmatprep.subr.mxu0 0.0
    %875 = vmatpush1.xpose.msra.mxu0 0.0
    %876 = vmatprep.subr.mxu0 0.0
    %877 = vmatpush1.xpose.msra.mxu0 0.0
    %878 = vmatprep.subr.mxu0 0.0
    %879 = vmatpush1.xpose.msra.mxu0 0.0
    %880 = vmatprep.mubr.f32.mxu0 0.0
    %881 = vmatmul.mubr.f32.gmra.mrb[0].mxu0 %v808
    %v882 = vpop.f32.mrb[0].mxu0
    %v883 = vadd.f32 0.0, %v882
    %v884 = vpop.f32.mrb[0].mxu0
    %885 = vmatprep.mubr.f32.mxu0 0.0
    %886 = vmatmul.mubr.f32.gmra.mrb[0].mxu0 %v810
    %v887 = vpop.f32.mrb[0].mxu0
    %v888 = vadd.f32 0.0, %v887
    %v889 = vpop.f32.mrb[0].mxu0
    %890 = vdwg.mxu0
    %v891 = vmul.f32 %v883, 0.35355338
    %v892 = vmul.f32 %v888, 0.35355338
    %v893 = vadd.f32 %v891, %v700
    %v894 = vadd.f32 %v892, %v701
    %v895 = vsel %vm368, %v893, -inf
    %896 = vmax.xlane.f32.xlu0 %v895
    %v897 = vpop.xlane.xlu0 %896
    %v898 = vsel %vm368, %v894, -inf
    %899 = vmax.xlane.f32.xlu0 %v898
    %v900 = vpop.xlane.xlu0 %899
    %v901 = vsub.f32 %v893, %v897
    %v902 = vsub.f32 %v894, %v900
    %v903 = vmul.f32 %v901, 1.442695
    %v904 = vpow.pop %v903
    %v905 = vmul.f32 %v902, 1.442695
    %v906 = vpow.pop %v905
    %v907 = vsel %vm368, %v904, 0.0
    %908 = vadd.xlane.f32.xlu0 %v907
    %v909 = vpop.xlane.xlu0 %908
    %v910 = vsel %vm368, %v906, 0.0
    %911 = vadd.xlane.f32.xlu0 %v910
    %v912 = vpop.xlane.xlu0 %911
    %v913 = vrcp.pop %v909
    %v914 = vmul.f32 %v904, %v913
    %v915 = vrcp.pop %v912
    %v916 = vmul.f32 %v906, %v915
    %917 = vrot.lane.b32.xlu0 %v793, 64
    %v918 = vpop.permute.xlu0 %917
    %919 = vrot.lane.b32.xlu0 %v798, 64
    %v920 = vpop.permute.xlu0 %919
    %v924 = vsel %vm368, %v914, 0
    %v927 = vsel %vm368, %v916, 0
    %929 = vmatprep.subr.mxu0 0.0
    %930 = vmatpush1.msra.mxu0 %v918
    %931 = vmatprep.subr.mxu0 0.0
    %932 = vmatpush1.msra.mxu0 %v920
    %933 = vmatprep.subr.mxu0 0.0
    %934 = vmatpush1.msra.mxu0 0.0
    %935 = vmatprep.subr.mxu0 0.0
    %936 = vmatpush1.msra.mxu0 0.0
    %937 = vmatprep.subr.mxu0 0.0
    %938 = vmatpush1.msra.mxu0 0.0
    %939 = vmatprep.subr.mxu0 0.0
    %940 = vmatpush1.msra.mxu0 0.0
    %941 = vmatprep.subr.mxu0 0.0
    %942 = vmatpush1.msra.mxu0 0.0
    %943 = vmatprep.subr.mxu0 0.0
    %944 = vmatpush1.msra.mxu0 0.0
    %945 = vmatprep.subr.mxu0 0.0
    %946 = vmatpush1.msra.mxu0 0.0
    %947 = vmatprep.subr.mxu0 0.0
    %948 = vmatpush1.msra.mxu0 0.0
    %949 = vmatprep.subr.mxu0 0.0
    %950 = vmatpush1.msra.mxu0 0.0
    %951 = vmatprep.subr.mxu0 0.0
    %952 = vmatpush1.msra.mxu0 0.0
    %953 = vmatprep.subr.mxu0 0.0
    %954 = vmatpush1.msra.mxu0 0.0
    %955 = vmatprep.subr.mxu0 0.0
    %956 = vmatpush1.msra.mxu0 0.0
    %957 = vmatprep.subr.mxu0 0.0
    %958 = vmatpush1.msra.mxu0 0.0
    %959 = vmatprep.subr.mxu0 0.0
    %960 = vmatpush1.msra.mxu0 0.0
    %961 = vmatprep.subr.mxu0 0.0
    %962 = vmatpush1.msra.mxu0 0.0
    %963 = vmatprep.subr.mxu0 0.0
    %964 = vmatpush1.msra.mxu0 0.0
    %965 = vmatprep.subr.mxu0 0.0
    %966 = vmatpush1.msra.mxu0 0.0
    %967 = vmatprep.subr.mxu0 0.0
    %968 = vmatpush1.msra.mxu0 0.0
    %969 = vmatprep.subr.mxu0 0.0
    %970 = vmatpush1.msra.mxu0 0.0
    %971 = vmatprep.subr.mxu0 0.0
    %972 = vmatpush1.msra.mxu0 0.0
    %973 = vmatprep.subr.mxu0 0.0
    %974 = vmatpush1.msra.mxu0 0.0
    %975 = vmatprep.subr.mxu0 0.0
    %976 = vmatpush1.msra.mxu0 0.0
    %977 = vmatprep.subr.mxu0 0.0
    %978 = vmatpush1.msra.mxu0 0.0
    %979 = vmatprep.subr.mxu0 0.0
    %980 = vmatpush1.msra.mxu0 0.0
    %981 = vmatprep.subr.mxu0 0.0
    %982 = vmatpush1.msra.mxu0 0.0
    %983 = vmatprep.subr.mxu0 0.0
    %984 = vmatpush1.msra.mxu0 0.0
    %985 = vmatprep.subr.mxu0 0.0
    %986 = vmatpush1.msra.mxu0 0.0
    %987 = vmatprep.subr.mxu0 0.0
    %988 = vmatpush1.msra.mxu0 0.0
    %989 = vmatprep.subr.mxu0 0.0
    %990 = vmatpush1.msra.mxu0 0.0
    %991 = vmatprep.subr.mxu0 0.0
    %992 = vmatpush1.msra.mxu0 0.0
    %993 = vmatprep.mubr.f32.mxu0 0.0
    %994 = vmatmul.mubr.f32.gmra.mrb[0].mxu0 %v924
    %v995 = vpop.f32.mrb[0].mxu0
    %v996 = vadd.f32 0.0, %v995
    %v997 = vpop.f32.mrb[0].mxu0
    %998 = vmatprep.mubr.f32.mxu0 0.0
    %999 = vmatmul.mubr.f32.gmra.mrb[0].mxu0 %v927
    %v1000 = vpop.f32.mrb[0].mxu0
    %v1001 = vadd.f32 0.0, %v1000
    %v1002 = vpop.f32.mrb[0].mxu0
    %1003 = vdwg.mxu0
    %1004 = vrot.lane.b32.xlu0 %v793, 120
    %v1005 = vpop.permute.xlu0 %1004
    %1006 = vrot.lane.b32.xlu0 %v798, 120
    %v1007 = vpop.permute.xlu0 %1006
    %1008 = vrot.lane.b32.xlu0 %v793, 88
    %v1009 = vpop.permute.xlu0 %1008
    %1010 = vrot.lane.b32.xlu0 %v798, 88
    %v1011 = vpop.permute.xlu0 %1010
    %v1012 = vsel %vm807, %v1005, 0
    %v1014 = vsel %vm807, %v1007, 0
    %v1016 = vsel %vm807, %v1009, 0
    %v1018 = vsel %vm807, %v1011, 0
    %1020 = vmatprep.subr.mxu0 0.0
    %1021 = vmatpush1.xpose.msra.mxu0 %v1016
    %1022 = vmatprep.subr.mxu0 0.0
    %1023 = vmatpush1.xpose.msra.mxu0 %v1018
    %1024 = vmatprep.subr.mxu0 0.0
    %1025 = vmatpush1.xpose.msra.mxu0 0.0
    %1026 = vmatprep.subr.mxu0 0.0
    %1027 = vmatpush1.xpose.msra.mxu0 0.0
    %1028 = vmatprep.subr.mxu0 0.0
    %1029 = vmatpush1.xpose.msra.mxu0 0.0
    %1030 = vmatprep.subr.mxu0 0.0
    %1031 = vmatpush1.xpose.msra.mxu0 0.0
    %1032 = vmatprep.subr.mxu0 0.0
    %1033 = vmatpush1.xpose.msra.mxu0 0.0
    %1034 = vmatprep.subr.mxu0 0.0
    %1035 = vmatpush1.xpose.msra.mxu0 0.0
    %1036 = vmatprep.subr.mxu0 0.0
    %1037 = vmatpush1.xpose.msra.mxu0 0.0
    %1038 = vmatprep.subr.mxu0 0.0
    %1039 = vmatpush1.xpose.msra.mxu0 0.0
    %1040 = vmatprep.subr.mxu0 0.0
    %1041 = vmatpush1.xpose.msra.mxu0 0.0
    %1042 = vmatprep.subr.mxu0 0.0
    %1043 = vmatpush1.xpose.msra.mxu0 0.0
    %1044 = vmatprep.subr.mxu0 0.0
    %1045 = vmatpush1.xpose.msra.mxu0 0.0
    %1046 = vmatprep.subr.mxu0 0.0
    %1047 = vmatpush1.xpose.msra.mxu0 0.0
    %1048 = vmatprep.subr.mxu0 0.0
    %1049 = vmatpush1.xpose.msra.mxu0 0.0
    %1050 = vmatprep.subr.mxu0 0.0
    %1051 = vmatpush1.xpose.msra.mxu0 0.0
    %1052 = vmatprep.subr.mxu0 0.0
    %1053 = vmatpush1.xpose.msra.mxu0 0.0
    %1054 = vmatprep.subr.mxu0 0.0
    %1055 = vmatpush1.xpose.msra.mxu0 0.0
    %1056 = vmatprep.subr.mxu0 0.0
    %1057 = vmatpush1.xpose.msra.mxu0 0.0
    %1058 = vmatprep.subr.mxu0 0.0
    %1059 = vmatpush1.xpose.msra.mxu0 0.0
    %1060 = vmatprep.subr.mxu0 0.0
    %1061 = vmatpush1.xpose.msra.mxu0 0.0
    %1062 = vmatprep.subr.mxu0 0.0
    %1063 = vmatpush1.xpose.msra.mxu0 0.0
    %1064 = vmatprep.subr.mxu0 0.0
    %1065 = vmatpush1.xpose.msra.mxu0 0.0
    %1066 = vmatprep.subr.mxu0 0.0
    %1067 = vmatpush1.xpose.msra.mxu0 0.0
    %1068 = vmatprep.subr.mxu0 0.0
    %1069 = vmatpush1.xpose.msra.mxu0 0.0
    %1070 = vmatprep.subr.mxu0 0.0
    %1071 = vmatpush1.xpose.msra.mxu0 0.0
    %1072 = vmatprep.subr.mxu0 0.0
    %1073 = vmatpush1.xpose.msra.mxu0 0.0
    %1074 = vmatprep.subr.mxu0 0.0
    %1075 = vmatpush1.xpose.msra.mxu0 0.0
    %1076 = vmatprep.subr.mxu0 0.0
    %1077 = vmatpush1.xpose.msra.mxu0 0.0
    %1078 = vmatprep.subr.mxu0 0.0
    %1079 = vmatpush1.xpose.msra.mxu0 0.0
    %1080 = vmatprep.subr.mxu0 0.0
    %1081 = vmatpush1.xpose.msra.mxu0 0.0
    %1082 = vmatprep.subr.mxu0 0.0
    %1083 = vmatpush1.xpose.msra.mxu0 0.0
    %1084 = vmatprep.mubr.f32.mxu0 0.0
    %1085 = vmatmul.mubr.f32.gmra.mrb[0].mxu0 %v1012
    %v1086 = vpop.f32.mrb[0].mxu0
    %v1087 = vadd.f32 0.0, %v1086
    %v1088 = vpop.f32.mrb[0].mxu0
    %1089 = vmatprep.mubr.f32.mxu0 0.0
    %1090 = vmatmul.mubr.f32.gmra.mrb[0].mxu0 %v1014
    %v1091 = vpop.f32.mrb[0].mxu0
    %v1092 = vadd.f32 0.0, %v1091
    %v1093 = vpop.f32.mrb[0].mxu0
    %1094 = vdwg.mxu0
    %v1095 = vmul.f32 %v1087, 0.35355338
    %v1096 = vmul.f32 %v1092, 0.35355338
    %v1097 = vadd.f32 %v1095, %v700
    %v1098 = vadd.f32 %v1096, %v701
    %v1099 = vsel %vm368, %v1097, -inf
    %1100 = vmax.xlane.f32.xlu0 %v1099
    %v1101 = vpop.xlane.xlu0 %1100
    %v1102 = vsel %vm368, %v1098, -inf
    %1103 = vmax.xlane.f32.xlu0 %v1102
    %v1104 = vpop.xlane.xlu0 %1103
    %v1105 = vsub.f32 %v1097, %v1101
    %v1106 = vsub.f32 %v1098, %v1104
    %v1107 = vmul.f32 %v1105, 1.442695
    %v1108 = vpow.pop %v1107
    %v1109 = vmul.f32 %v1106, 1.442695
    %v1110 = vpow.pop %v1109
    %v1111 = vsel %vm368, %v1108, 0.0
    %1112 = vadd.xlane.f32.xlu0 %v1111
    %v1113 = vpop.xlane.xlu0 %1112
    %v1114 = vsel %vm368, %v1110, 0.0
    %1115 = vadd.xlane.f32.xlu0 %v1114
    %v1116 = vpop.xlane.xlu0 %1115
    %v1117 = vrcp.pop %v1113
    %v1118 = vmul.f32 %v1108, %v1117
    %v1119 = vrcp.pop %v1116
    %v1120 = vmul.f32 %v1110, %v1119
    %1121 = vrot.lane.b32.xlu0 %v793, 56
    %v1122 = vpop.permute.xlu0 %1121
    %1123 = vrot.lane.b32.xlu0 %v798, 56
    %v1124 = vpop.permute.xlu0 %1123
    %v1128 = vsel %vm368, %v1118, 0
    %v1131 = vsel %vm368, %v1120, 0
    %1133 = vmatprep.subr.mxu0 0.0
    %1134 = vmatpush1.msra.mxu0 %v1122
    %1135 = vmatprep.subr.mxu0 0.0
    %1136 = vmatpush1.msra.mxu0 %v1124
    %1137 = vmatprep.subr.mxu0 0.0
    %1138 = vmatpush1.msra.mxu0 0.0
    %1139 = vmatprep.subr.mxu0 0.0
    %1140 = vmatpush1.msra.mxu0 0.0
    %1141 = vmatprep.subr.mxu0 0.0
    %1142 = vmatpush1.msra.mxu0 0.0
    %1143 = vmatprep.subr.mxu0 0.0
    %1144 = vmatpush1.msra.mxu0 0.0
    %1145 = vmatprep.subr.mxu0 0.0
    %1146 = vmatpush1.msra.mxu0 0.0
    %1147 = vmatprep.subr.mxu0 0.0
    %1148 = vmatpush1.msra.mxu0 0.0
    %1149 = vmatprep.subr.mxu0 0.0
    %1150 = vmatpush1.msra.mxu0 0.0
    %1151 = vmatprep.subr.mxu0 0.0
    %1152 = vmatpush1.msra.mxu0 0.0
    %1153 = vmatprep.subr.mxu0 0.0
    %1154 = vmatpush1.msra.mxu0 0.0
    %1155 = vmatprep.subr.mxu0 0.0
    %1156 = vmatpush1.msra.mxu0 0.0
    %1157 = vmatprep.subr.mxu0 0.0
    %1158 = vmatpush1.msra.mxu0 0.0
    %1159 = vmatprep.subr.mxu0 0.0
    %1160 = vmatpush1.msra.mxu0 0.0
    %1161 = vmatprep.subr.mxu0 0.0
    %1162 = vmatpush1.msra.mxu0 0.0
    %1163 = vmatprep.subr.mxu0 0.0
    %1164 = vmatpush1.msra.mxu0 0.0
    %1165 = vmatprep.subr.mxu0 0.0
    %1166 = vmatpush1.msra.mxu0 0.0
    %1167 = vmatprep.subr.mxu0 0.0
    %1168 = vmatpush1.msra.mxu0 0.0
    %1169 = vmatprep.subr.mxu0 0.0
    %1170 = vmatpush1.msra.mxu0 0.0
    %1171 = vmatprep.subr.mxu0 0.0
    %1172 = vmatpush1.msra.mxu0 0.0
    %1173 = vmatprep.subr.mxu0 0.0
    %1174 = vmatpush1.msra.mxu0 0.0
    %1175 = vmatprep.subr.mxu0 0.0
    %1176 = vmatpush1.msra.mxu0 0.0
    %1177 = vmatprep.subr.mxu0 0.0
    %1178 = vmatpush1.msra.mxu0 0.0
    %1179 = vmatprep.subr.mxu0 0.0
    %1180 = vmatpush1.msra.mxu0 0.0
    %1181 = vmatprep.subr.mxu0 0.0
    %1182 = vmatpush1.msra.mxu0 0.0
    %1183 = vmatprep.subr.mxu0 0.0
    %1184 = vmatpush1.msra.mxu0 0.0
    %1185 = vmatprep.subr.mxu0 0.0
    %1186 = vmatpush1.msra.mxu0 0.0
    %1187 = vmatprep.subr.mxu0 0.0
    %1188 = vmatpush1.msra.mxu0 0.0
    %1189 = vmatprep.subr.mxu0 0.0
    %1190 = vmatpush1.msra.mxu0 0.0
    %1191 = vmatprep.subr.mxu0 0.0
    %1192 = vmatpush1.msra.mxu0 0.0
    %1193 = vmatprep.subr.mxu0 0.0
    %1194 = vmatpush1.msra.mxu0 0.0
    %1195 = vmatprep.subr.mxu0 0.0
    %1196 = vmatpush1.msra.mxu0 0.0
    %1197 = vmatprep.mubr.f32.mxu0 0.0
    %1198 = vmatmul.mubr.f32.gmra.mrb[0].mxu0 %v1128
    %v1199 = vpop.f32.mrb[0].mxu0
    %v1200 = vadd.f32 0.0, %v1199
    %v1201 = vpop.f32.mrb[0].mxu0
    %1202 = vmatprep.mubr.f32.mxu0 0.0
    %1203 = vmatmul.mubr.f32.gmra.mrb[0].mxu0 %v1131
    %v1204 = vpop.f32.mrb[0].mxu0
    %v1205 = vadd.f32 0.0, %v1204
    %v1206 = vpop.f32.mrb[0].mxu0
    %1207 = vdwg.mxu0
    %1208 = vrot.lane.b32.xlu0 %v793, 112
    %v1209 = vpop.permute.xlu0 %1208
    %1210 = vrot.lane.b32.xlu0 %v798, 112
    %v1211 = vpop.permute.xlu0 %1210
    %1212 = vrot.lane.b32.xlu0 %v793, 80
    %v1213 = vpop.permute.xlu0 %1212
    %1214 = vrot.lane.b32.xlu0 %v798, 80
    %v1215 = vpop.permute.xlu0 %1214
    %v1216 = vsel %vm807, %v1209, 0
    %v1218 = vsel %vm807, %v1211, 0
    %v1220 = vsel %vm807, %v1213, 0
    %v1222 = vsel %vm807, %v1215, 0
    %1224 = vmatprep.subr.mxu0 0.0
    %1225 = vmatpush1.xpose.msra.mxu0 %v1220
    %1226 = vmatprep.subr.mxu0 0.0
    %1227 = vmatpush1.xpose.msra.mxu0 %v1222
    %1228 = vmatprep.subr.mxu0 0.0
    %1229 = vmatpush1.xpose.msra.mxu0 0.0
    %1230 = vmatprep.subr.mxu0 0.0
    %1231 = vmatpush1.xpose.msra.mxu0 0.0
    %1232 = vmatprep.subr.mxu0 0.0
    %1233 = vmatpush1.xpose.msra.mxu0 0.0
    %1234 = vmatprep.subr.mxu0 0.0
    %1235 = vmatpush1.xpose.msra.mxu0 0.0
    %1236 = vmatprep.subr.mxu0 0.0
    %1237 = vmatpush1.xpose.msra.mxu0 0.0
    %1238 = vmatprep.subr.mxu0 0.0
    %1239 = vmatpush1.xpose.msra.mxu0 0.0
    %1240 = vmatprep.subr.mxu0 0.0
    %1241 = vmatpush1.xpose.msra.mxu0 0.0
    %1242 = vmatprep.subr.mxu0 0.0
    %1243 = vmatpush1.xpose.msra.mxu0 0.0
    %1244 = vmatprep.subr.mxu0 0.0
    %1245 = vmatpush1.xpose.msra.mxu0 0.0
    %1246 = vmatprep.subr.mxu0 0.0
    %1247 = vmatpush1.xpose.msra.mxu0 0.0
    %1248 = vmatprep.subr.mxu0 0.0
    %1249 = vmatpush1.xpose.msra.mxu0 0.0
    %1250 = vmatprep.subr.mxu0 0.0
    %1251 = vmatpush1.xpose.msra.mxu0 0.0
    %1252 = vmatprep.subr.mxu0 0.0
    %1253 = vmatpush1.xpose.msra.mxu0 0.0
    %1254 = vmatprep.subr.mxu0 0.0
    %1255 = vmatpush1.xpose.msra.mxu0 0.0
    %1256 = vmatprep.subr.mxu0 0.0
    %1257 = vmatpush1.xpose.msra.mxu0 0.0
    %1258 = vmatprep.subr.mxu0 0.0
    %1259 = vmatpush1.xpose.msra.mxu0 0.0
    %1260 = vmatprep.subr.mxu0 0.0
    %1261 = vmatpush1.xpose.msra.mxu0 0.0
    %1262 = vmatprep.subr.mxu0 0.0
    %1263 = vmatpush1.xpose.msra.mxu0 0.0
    %1264 = vmatprep.subr.mxu0 0.0
    %1265 = vmatpush1.xpose.msra.mxu0 0.0
    %1266 = vmatprep.subr.mxu0 0.0
    %1267 = vmatpush1.xpose.msra.mxu0 0.0
    %1268 = vmatprep.subr.mxu0 0.0
    %1269 = vmatpush1.xpose.msra.mxu0 0.0
    %1270 = vmatprep.subr.mxu0 0.0
    %1271 = vmatpush1.xpose.msra.mxu0 0.0
    %1272 = vmatprep.subr.mxu0 0.0
    %1273 = vmatpush1.xpose.msra.mxu0 0.0
    %1274 = vmatprep.subr.mxu0 0.0
    %1275 = vmatpush1.xpose.msra.mxu0 0.0
    %1276 = vmatprep.subr.mxu0 0.0
    %1277 = vmatpush1.xpose.msra.mxu0 0.0
    %1278 = vmatprep.subr.mxu0 0.0
    %1279 = vmatpush1.xpose.msra.mxu0 0.0
    %1280 = vmatprep.subr.mxu0 0.0
    %1281 = vmatpush1.xpose.msra.mxu0 0.0
    %1282 = vmatprep.subr.mxu0 0.0
    %1283 = vmatpush1.xpose.msra.mxu0 0.0
    %1284 = vmatprep.subr.mxu0 0.0
    %1285 = vmatpush1.xpose.msra.mxu0 0.0
    %1286 = vmatprep.subr.mxu0 0.0
    %1287 = vmatpush1.xpose.msra.mxu0 0.0
    %1288 = vmatprep.mubr.f32.mxu0 0.0
    %1289 = vmatmul.mubr.f32.gmra.mrb[0].mxu0 %v1216
    %v1290 = vpop.f32.mrb[0].mxu0
    %v1291 = vadd.f32 0.0, %v1290
    %v1292 = vpop.f32.mrb[0].mxu0
    %1293 = vmatprep.mubr.f32.mxu0 0.0
    %1294 = vmatmul.mubr.f32.gmra.mrb[0].mxu0 %v1218
    %v1295 = vpop.f32.mrb[0].mxu0
    %v1296 = vadd.f32 0.0, %v1295
    %v1297 = vpop.f32.mrb[0].mxu0
    %1298 = vdwg.mxu0
    %v1299 = vmul.f32 %v1291, 0.35355338
    %v1300 = vmul.f32 %v1296, 0.35355338
    %v1301 = vadd.f32 %v1299, %v700
    %v1302 = vadd.f32 %v1300, %v701
    %v1303 = vsel %vm368, %v1301, -inf
    %1304 = vmax.xlane.f32.xlu0 %v1303
    %v1305 = vpop.xlane.xlu0 %1304
    %v1306 = vsel %vm368, %v1302, -inf
    %1307 = vmax.xlane.f32.xlu0 %v1306
    %v1308 = vpop.xlane.xlu0 %1307
    %v1309 = vsub.f32 %v1301, %v1305
    %v1310 = vsub.f32 %v1302, %v1308
    %v1311 = vmul.f32 %v1309, 1.442695
    %v1312 = vpow.pop %v1311
    %v1313 = vmul.f32 %v1310, 1.442695
    %v1314 = vpow.pop %v1313
    %v1315 = vsel %vm368, %v1312, 0.0
    %1316 = vadd.xlane.f32.xlu0 %v1315
    %v1317 = vpop.xlane.xlu0 %1316
    %v1318 = vsel %vm368, %v1314, 0.0
    %1319 = vadd.xlane.f32.xlu0 %v1318
    %v1320 = vpop.xlane.xlu0 %1319
    %v1321 = vrcp.pop %v1317
    %v1322 = vmul.f32 %v1312, %v1321
    %v1323 = vrcp.pop %v1320
    %v1324 = vmul.f32 %v1314, %v1323
    %1325 = vrot.lane.b32.xlu0 %v793, 48
    %v1326 = vpop.permute.xlu0 %1325
    %1327 = vrot.lane.b32.xlu0 %v798, 48
    %v1328 = vpop.permute.xlu0 %1327
    %v1332 = vsel %vm368, %v1322, 0
    %v1335 = vsel %vm368, %v1324, 0
    %1337 = vmatprep.subr.mxu0 0.0
    %1338 = vmatpush1.msra.mxu0 %v1326
    %1339 = vmatprep.subr.mxu0 0.0
    %1340 = vmatpush1.msra.mxu0 %v1328
    %1341 = vmatprep.subr.mxu0 0.0
    %1342 = vmatpush1.msra.mxu0 0.0
    %1343 = vmatprep.subr.mxu0 0.0
    %1344 = vmatpush1.msra.mxu0 0.0
    %1345 = vmatprep.subr.mxu0 0.0
    %1346 = vmatpush1.msra.mxu0 0.0
    %1347 = vmatprep.subr.mxu0 0.0
    %1348 = vmatpush1.msra.mxu0 0.0
    %1349 = vmatprep.subr.mxu0 0.0
    %1350 = vmatpush1.msra.mxu0 0.0
    %1351 = vmatprep.subr.mxu0 0.0
    %1352 = vmatpush1.msra.mxu0 0.0
    %1353 = vmatprep.subr.mxu0 0.0
    %1354 = vmatpush1.msra.mxu0 0.0
    %1355 = vmatprep.subr.mxu0 0.0
    %1356 = vmatpush1.msra.mxu0 0.0
    %1357 = vmatprep.subr.mxu0 0.0
    %1358 = vmatpush1.msra.mxu0 0.0
    %1359 = vmatprep.subr.mxu0 0.0
    %1360 = vmatpush1.msra.mxu0 0.0
    %1361 = vmatprep.subr.mxu0 0.0
    %1362 = vmatpush1.msra.mxu0 0.0
    %1363 = vmatprep.subr.mxu0 0.0
    %1364 = vmatpush1.msra.mxu0 0.0
    %1365 = vmatprep.subr.mxu0 0.0
    %1366 = vmatpush1.msra.mxu0 0.0
    %1367 = vmatprep.subr.mxu0 0.0
    %1368 = vmatpush1.msra.mxu0 0.0
    %1369 = vmatprep.subr.mxu0 0.0
    %1370 = vmatpush1.msra.mxu0 0.0
    %1371 = vmatprep.subr.mxu0 0.0
    %1372 = vmatpush1.msra.mxu0 0.0
    %1373 = vmatprep.subr.mxu0 0.0
    %1374 = vmatpush1.msra.mxu0 0.0
    %1375 = vmatprep.subr.mxu0 0.0
    %1376 = vmatpush1.msra.mxu0 0.0
    %1377 = vmatprep.subr.mxu0 0.0
    %1378 = vmatpush1.msra.mxu0 0.0
    %1379 = vmatprep.subr.mxu0 0.0
    %1380 = vmatpush1.msra.mxu0 0.0
    %1381 = vmatprep.subr.mxu0 0.0
    %1382 = vmatpush1.msra.mxu0 0.0
    %1383 = vmatprep.subr.mxu0 0.0
    %1384 = vmatpush1.msra.mxu0 0.0
    %1385 = vmatprep.subr.mxu0 0.0
    %1386 = vmatpush1.msra.mxu0 0.0
    %1387 = vmatprep.subr.mxu0 0.0
    %1388 = vmatpush1.msra.mxu0 0.0
    %1389 = vmatprep.subr.mxu0 0.0
    %1390 = vmatpush1.msra.mxu0 0.0
    %1391 = vmatprep.subr.mxu0 0.0
    %1392 = vmatpush1.msra.mxu0 0.0
    %1393 = vmatprep.subr.mxu0 0.0
    %1394 = vmatpush1.msra.mxu0 0.0
    %1395 = vmatprep.subr.mxu0 0.0
    %1396 = vmatpush1.msra.mxu0 0.0
    %1397 = vmatprep.subr.mxu0 0.0
    %1398 = vmatpush1.msra.mxu0 0.0
    %1399 = vmatprep.subr.mxu0 0.0
    %1400 = vmatpush1.msra.mxu0 0.0
    %1401 = vmatprep.mubr.f32.mxu0 0.0
    %1402 = vmatmul.mubr.f32.gmra.mrb[0].mxu0 %v1332
    %v1403 = vpop.f32.mrb[0].mxu0
    %v1404 = vadd.f32 0.0, %v1403
    %v1405 = vpop.f32.mrb[0].mxu0
    %1406 = vmatprep.mubr.f32.mxu0 0.0
    %1407 = vmatmul.mubr.f32.gmra.mrb[0].mxu0 %v1335
    %v1408 = vpop.f32.mrb[0].mxu0
    %v1409 = vadd.f32 0.0, %v1408
    %v1410 = vpop.f32.mrb[0].mxu0
    %1411 = vdwg.mxu0
    %1412 = vrot.lane.b32.xlu0 %v793, 104
    %v1413 = vpop.permute.xlu0 %1412
    %1414 = vrot.lane.b32.xlu0 %v798, 104
    %v1415 = vpop.permute.xlu0 %1414
    %1416 = vrot.lane.b32.xlu0 %v793, 72
    %v1417 = vpop.permute.xlu0 %1416
    %1418 = vrot.lane.b32.xlu0 %v798, 72
    %v1419 = vpop.permute.xlu0 %1418
    %v1420 = vsel %vm807, %v1413, 0
    %v1422 = vsel %vm807, %v1415, 0
    %v1424 = vsel %vm807, %v1417, 0
    %v1426 = vsel %vm807, %v1419, 0
    %1428 = vmatprep.subr.mxu0 0.0
    %1429 = vmatpush1.xpose.msra.mxu0 %v1424
    %1430 = vmatprep.subr.mxu0 0.0
    %1431 = vmatpush1.xpose.msra.mxu0 %v1426
    %1432 = vmatprep.subr.mxu0 0.0
    %1433 = vmatpush1.xpose.msra.mxu0 0.0
    %1434 = vmatprep.subr.mxu0 0.0
    %1435 = vmatpush1.xpose.msra.mxu0 0.0
    %1436 = vmatprep.subr.mxu0 0.0
    %1437 = vmatpush1.xpose.msra.mxu0 0.0
    %1438 = vmatprep.subr.mxu0 0.0
    %1439 = vmatpush1.xpose.msra.mxu0 0.0
    %1440 = vmatprep.subr.mxu0 0.0
    %1441 = vmatpush1.xpose.msra.mxu0 0.0
    %1442 = vmatprep.subr.mxu0 0.0
    %1443 = vmatpush1.xpose.msra.mxu0 0.0
    %1444 = vmatprep.subr.mxu0 0.0
    %1445 = vmatpush1.xpose.msra.mxu0 0.0
    %1446 = vmatprep.subr.mxu0 0.0
    %1447 = vmatpush1.xpose.msra.mxu0 0.0
    %1448 = vmatprep.subr.mxu0 0.0
    %1449 = vmatpush1.xpose.msra.mxu0 0.0
    %1450 = vmatprep.subr.mxu0 0.0
    %1451 = vmatpush1.xpose.msra.mxu0 0.0
    %1452 = vmatprep.subr.mxu0 0.0
    %1453 = vmatpush1.xpose.msra.mxu0 0.0
    %1454 = vmatprep.subr.mxu0 0.0
    %1455 = vmatpush1.xpose.msra.mxu0 0.0
    %1456 = vmatprep.subr.mxu0 0.0
    %1457 = vmatpush1.xpose.msra.mxu0 0.0
    %1458 = vmatprep.subr.mxu0 0.0
    %1459 = vmatpush1.xpose.msra.mxu0 0.0
    %1460 = vmatprep.subr.mxu0 0.0
    %1461 = vmatpush1.xpose.msra.mxu0 0.0
    %1462 = vmatprep.subr.mxu0 0.0
    %1463 = vmatpush1.xpose.msra.mxu0 0.0
    %1464 = vmatprep.subr.mxu0 0.0
    %1465 = vmatpush1.xpose.msra.mxu0 0.0
    %1466 = vmatprep.subr.mxu0 0.0
    %1467 = vmatpush1.xpose.msra.mxu0 0.0
    %1468 = vmatprep.subr.mxu0 0.0
    %1469 = vmatpush1.xpose.msra.mxu0 0.0
    %1470 = vmatprep.subr.mxu0 0.0
    %1471 = vmatpush1.xpose.msra.mxu0 0.0
    %1472 = vmatprep.subr.mxu0 0.0
    %1473 = vmatpush1.xpose.msra.mxu0 0.0
    %1474 = vmatprep.subr.mxu0 0.0
    %1475 = vmatpush1.xpose.msra.mxu0 0.0
    %1476 = vmatprep.subr.mxu0 0.0
    %1477 = vmatpush1.xpose.msra.mxu0 0.0
    %1478 = vmatprep.subr.mxu0 0.0
    %1479 = vmatpush1.xpose.msra.mxu0 0.0
    %1480 = vmatprep.subr.mxu0 0.0
    %1481 = vmatpush1.xpose.msra.mxu0 0.0
    %1482 = vmatprep.subr.mxu0 0.0
    %1483 = vmatpush1.xpose.msra.mxu0 0.0
    %1484 = vmatprep.subr.mxu0 0.0
    %1485 = vmatpush1.xpose.msra.mxu0 0.0
    %1486 = vmatprep.subr.mxu0 0.0
    %1487 = vmatpush1.xpose.msra.mxu0 0.0
    %1488 = vmatprep.subr.mxu0 0.0
    %1489 = vmatpush1.xpose.msra.mxu0 0.0
    %1490 = vmatprep.subr.mxu0 0.0
    %1491 = vmatpush1.xpose.msra.mxu0 0.0
    %1492 = vmatprep.mubr.f32.mxu0 0.0
    %1493 = vmatmul.mubr.f32.gmra.mrb[0].mxu0 %v1420
    %v1494 = vpop.f32.mrb[0].mxu0
    %v1495 = vadd.f32 0.0, %v1494
    %v1496 = vpop.f32.mrb[0].mxu0
    %1497 = vmatprep.mubr.f32.mxu0 0.0
    %1498 = vmatmul.mubr.f32.gmra.mrb[0].mxu0 %v1422
    %v1499 = vpop.f32.mrb[0].mxu0
    %v1500 = vadd.f32 0.0, %v1499
    %v1501 = vpop.f32.mrb[0].mxu0
    %1502 = vdwg.mxu0
    %v1503 = vmul.f32 %v1495, 0.35355338
    %v1504 = vmul.f32 %v1500, 0.35355338
    %v1505 = vadd.f32 %v1503, %v700
    %v1506 = vadd.f32 %v1504, %v701
    %v1507 = vsel %vm368, %v1505, -inf
    %1508 = vmax.xlane.f32.xlu0 %v1507
    %v1509 = vpop.xlane.xlu0 %1508
    %v1510 = vsel %vm368, %v1506, -inf
    %1511 = vmax.xlane.f32.xlu0 %v1510
    %v1512 = vpop.xlane.xlu0 %1511
    %v1513 = vsub.f32 %v1505, %v1509
    %v1514 = vsub.f32 %v1506, %v1512
    %v1515 = vmul.f32 %v1513, 1.442695
    %v1516 = vpow.pop %v1515
    %v1517 = vmul.f32 %v1514, 1.442695
    %v1518 = vpow.pop %v1517
    %v1519 = vsel %vm368, %v1516, 0.0
    %1520 = vadd.xlane.f32.xlu0 %v1519
    %v1521 = vpop.xlane.xlu0 %1520
    %v1522 = vsel %vm368, %v1518, 0.0
    %1523 = vadd.xlane.f32.xlu0 %v1522
    %v1524 = vpop.xlane.xlu0 %1523
    %v1525 = vrcp.pop %v1521
    %v1526 = vmul.f32 %v1516, %v1525
    %v1527 = vrcp.pop %v1524
    %v1528 = vmul.f32 %v1518, %v1527
    %1529 = vrot.lane.b32.xlu0 %v793, 40
    %v1530 = vpop.permute.xlu0 %1529
    %1531 = vrot.lane.b32.xlu0 %v798, 40
    %v1532 = vpop.permute.xlu0 %1531
    %v1536 = vsel %vm368, %v1526, 0
    %v1539 = vsel %vm368, %v1528, 0
    %1541 = vmatprep.subr.mxu0 0.0
    %1542 = vmatpush1.msra.mxu0 %v1530
    %1543 = vmatprep.subr.mxu0 0.0
    %1544 = vmatpush1.msra.mxu0 %v1532
    %1545 = vmatprep.subr.mxu0 0.0
    %1546 = vmatpush1.msra.mxu0 0.0
    %1547 = vmatprep.subr.mxu0 0.0
    %1548 = vmatpush1.msra.mxu0 0.0
    %1549 = vmatprep.subr.mxu0 0.0
    %1550 = vmatpush1.msra.mxu0 0.0
    %1551 = vmatprep.subr.mxu0 0.0
    %1552 = vmatpush1.msra.mxu0 0.0
    %1553 = vmatprep.subr.mxu0 0.0
    %1554 = vmatpush1.msra.mxu0 0.0
    %1555 = vmatprep.subr.mxu0 0.0
    %1556 = vmatpush1.msra.mxu0 0.0
    %1557 = vmatprep.subr.mxu0 0.0
    %1558 = vmatpush1.msra.mxu0 0.0
    %1559 = vmatprep.subr.mxu0 0.0
    %1560 = vmatpush1.msra.mxu0 0.0
    %1561 = vmatprep.subr.mxu0 0.0
    %1562 = vmatpush1.msra.mxu0 0.0
    %1563 = vmatprep.subr.mxu0 0.0
    %1564 = vmatpush1.msra.mxu0 0.0
    %1565 = vmatprep.subr.mxu0 0.0
    %1566 = vmatpush1.msra.mxu0 0.0
    %1567 = vmatprep.subr.mxu0 0.0
    %1568 = vmatpush1.msra.mxu0 0.0
    %1569 = vmatprep.subr.mxu0 0.0
    %1570 = vmatpush1.msra.mxu0 0.0
    %1571 = vmatprep.subr.mxu0 0.0
    %1572 = vmatpush1.msra.mxu0 0.0
    %1573 = vmatprep.subr.mxu0 0.0
    %1574 = vmatpush1.msra.mxu0 0.0
    %1575 = vmatprep.subr.mxu0 0.0
    %1576 = vmatpush1.msra.mxu0 0.0
    %1577 = vmatprep.subr.mxu0 0.0
    %1578 = vmatpush1.msra.mxu0 0.0
    %1579 = vmatprep.subr.mxu0 0.0
    %1580 = vmatpush1.msra.mxu0 0.0
    %1581 = vmatprep.subr.mxu0 0.0
    %1582 = vmatpush1.msra.mxu0 0.0
    %1583 = vmatprep.subr.mxu0 0.0
    %1584 = vmatpush1.msra.mxu0 0.0
    %1585 = vmatprep.subr.mxu0 0.0
    %1586 = vmatpush1.msra.mxu0 0.0
    %1587 = vmatprep.subr.mxu0 0.0
    %1588 = vmatpush1.msra.mxu0 0.0
    %1589 = vmatprep.subr.mxu0 0.0
    %1590 = vmatpush1.msra.mxu0 0.0
    %1591 = vmatprep.subr.mxu0 0.0
    %1592 = vmatpush1.msra.mxu0 0.0
    %1593 = vmatprep.subr.mxu0 0.0
    %1594 = vmatpush1.msra.mxu0 0.0
    %1595 = vmatprep.subr.mxu0 0.0
    %1596 = vmatpush1.msra.mxu0 0.0
    %1597 = vmatprep.subr.mxu0 0.0
    %1598 = vmatpush1.msra.mxu0 0.0
    %1599 = vmatprep.subr.mxu0 0.0
    %1600 = vmatpush1.msra.mxu0 0.0
    %1601 = vmatprep.subr.mxu0 0.0
    %1602 = vmatpush1.msra.mxu0 0.0
    %1603 = vmatprep.subr.mxu0 0.0
    %1604 = vmatpush1.msra.mxu0 0.0
    %1605 = vmatprep.mubr.f32.mxu0 0.0
    %1606 = vmatmul.mubr.f32.gmra.mrb[0].mxu0 %v1536
    %v1607 = vpop.f32.mrb[0].mxu0
    %v1608 = vadd.f32 0.0, %v1607
    %v1609 = vpop.f32.mrb[0].mxu0
    %1610 = vmatprep.mubr.f32.mxu0 0.0
    %1611 = vmatmul.mubr.f32.gmra.mrb[0].mxu0 %v1539
    %v1612 = vpop.f32.mrb[0].mxu0
    %v1613 = vadd.f32 0.0, %v1612
    %v1614 = vpop.f32.mrb[0].mxu0
    %1615 = vdwg.mxu0
    %1618 = vrot.lane.b32.xlu0 %v1200, 8
    %v1619 = vpop.permute.xlu0 %1618
    %1620 = vrot.lane.b32.xlu0 %v1205, 8
    %v1621 = vpop.permute.xlu0 %1620
    %1626 = vrot.lane.b32.xlu0 %v1404, 16
    %v1627 = vpop.permute.xlu0 %1626
    %1628 = vrot.lane.b32.xlu0 %v1409, 16
    %v1629 = vpop.permute.xlu0 %1628
    %1634 = vrot.lane.b32.xlu0 %v1608, 24
    %v1635 = vpop.permute.xlu0 %1634
    %1636 = vrot.lane.b32.xlu0 %v1613, 24
    %v1637 = vpop.permute.xlu0 %1636
    %v1640 = vsel %vm807, %v996, %v1619
    %v1641 = vsel %vm807, %v1001, %v1621
    %v1642 = vsel %vm368, %v1640, %v1627
    %v1643 = vsel %vm368, %v1641, %v1629
    %vm1644 = vcmask 195584
    %v1645 = vsel %vm1644, %v1642, %v1635
    %v1646 = vsel %vm1644, %v1643, %v1637
    %v1648 = vlaneseq
    %v1649 = vshrl.u32 %v1648, 7
    %v1650 = vsub.s32 0, %v1649
    %v1651 = vrot.slane %v713, %v1650
    %v1654 = vsel %vm275, %v1645, 0
    %v1657 = vsel %vm275, %v1646, 0
    %1659 = vmatprep.subr.mxu0 0.0
    %1660 = vmatpush1.msra.mxu0 %v709
    %1661 = vmatprep.subr.mxu0 0.0
    %1662 = vmatpush1.msra.mxu0 %v710
    %1663 = vmatprep.subr.mxu0 0.0
    %1664 = vmatpush1.msra.mxu0 %v711
    %1665 = vmatprep.subr.mxu0 0.0
    %1666 = vmatpush1.msra.mxu0 %v712
    %1667 = vmatprep.subr.mxu0 0.0
    %1668 = vmatpush1.msra.mxu0 0.0
    %1669 = vmatprep.subr.mxu0 0.0
    %1670 = vmatpush1.msra.mxu0 0.0
    %1671 = vmatprep.subr.mxu0 0.0
    %1672 = vmatpush1.msra.mxu0 0.0
    %1673 = vmatprep.subr.mxu0 0.0
    %1674 = vmatpush1.msra.mxu0 0.0
    %1675 = vmatprep.subr.mxu0 0.0
    %1676 = vmatpush1.msra.mxu0 0.0
    %1677 = vmatprep.subr.mxu0 0.0
    %1678 = vmatpush1.msra.mxu0 0.0
    %1679 = vmatprep.subr.mxu0 0.0
    %1680 = vmatpush1.msra.mxu0 0.0
    %1681 = vmatprep.subr.mxu0 0.0
    %1682 = vmatpush1.msra.mxu0 0.0
    %1683 = vmatprep.subr.mxu0 0.0
    %1684 = vmatpush1.msra.mxu0 0.0
    %1685 = vmatprep.subr.mxu0 0.0
    %1686 = vmatpush1.msra.mxu0 0.0
    %1687 = vmatprep.subr.mxu0 0.0
    %1688 = vmatpush1.msra.mxu0 0.0
    %1689 = vmatprep.subr.mxu0 0.0
    %1690 = vmatpush1.msra.mxu0 0.0
    %1691 = vmatprep.subr.mxu0 0.0
    %1692 = vmatpush1.msra.mxu0 0.0
    %1693 = vmatprep.subr.mxu0 0.0
    %1694 = vmatpush1.msra.mxu0 0.0
    %1695 = vmatprep.subr.mxu0 0.0
    %1696 = vmatpush1.msra.mxu0 0.0
    %1697 = vmatprep.subr.mxu0 0.0
    %1698 = vmatpush1.msra.mxu0 0.0
    %1699 = vmatprep.subr.mxu0 0.0
    %1700 = vmatpush1.msra.mxu0 0.0
    %1701 = vmatprep.subr.mxu0 0.0
    %1702 = vmatpush1.msra.mxu0 0.0
    %1703 = vmatprep.subr.mxu0 0.0
    %1704 = vmatpush1.msra.mxu0 0.0
    %1705 = vmatprep.subr.mxu0 0.0
    %1706 = vmatpush1.msra.mxu0 0.0
    %1707 = vmatprep.subr.mxu0 0.0
    %1708 = vmatpush1.msra.mxu0 0.0
    %1709 = vmatprep.subr.mxu0 0.0
    %1710 = vmatpush1.msra.mxu0 0.0
    %1711 = vmatprep.subr.mxu0 0.0
    %1712 = vmatpush1.msra.mxu0 0.0
    %1713 = vmatprep.subr.mxu0 0.0
    %1714 = vmatpush1.msra.mxu0 0.0
    %1715 = vmatprep.subr.mxu0 0.0
    %1716 = vmatpush1.msra.mxu0 0.0
    %1717 = vmatprep.subr.mxu0 0.0
    %1718 = vmatpush1.msra.mxu0 0.0
    %1719 = vmatprep.subr.mxu0 0.0
    %1720 = vmatpush1.msra.mxu0 0.0
    %1721 = vmatprep.subr.mxu0 0.0
    %1722 = vmatpush1.msra.mxu0 0.0
    %1723 = vmatprep.mubr.f32.mxu0 0.0
    %1724 = vmatmul.mubr.f32.gmra.mrb[0].mxu0 %v1654
    %v1725 = vpop.f32.mrb[0].mxu0
    %v1726 = vadd.f32 %v1651, %v1725
    %v1727 = vpop.f32.mrb[0].mxu0
    %1728 = vmatprep.mubr.f32.mxu0 0.0
    %1729 = vmatmul.mubr.f32.gmra.mrb[0].mxu0 %v1657
    %v1730 = vpop.f32.mrb[0].mxu0
    %v1731 = vadd.f32 %v1651, %v1730
    %v1732 = vpop.f32.mrb[0].mxu0
    %1733 = vdwg.mxu0
    %v1734 = vadd.f32 %v698, %v1726
    %v1735 = vadd.f32 %v699, %v1731
    %v1736 = vsel %vm275, %v1734, 0.0
    %1737 = vadd.xlane.f32.xlu0 %v1736
    %v1738 = vpop.xlane.xlu0 %1737
    %v1739 = vsel %vm275, %v1735, 0.0
    %1740 = vadd.xlane.f32.xlu0 %v1739
    %v1741 = vpop.xlane.xlu0 %1740
    %v1742 = vrcp.pop 32.0
    %v1743 = vmul.f32 %v1738, %v1742
    %v1744 = vmul.f32 %v1741, %v1742
    %v1745 = vsub.f32 %v1734, %v1743
    %v1746 = vsub.f32 %v1735, %v1744
    %v1747 = vmul.f32 %v1745, %v1745
    %v1748 = vmul.f32 %v1746, %v1746
    %v1749 = vsel %vm275, %v1747, 0.0
    %1750 = vadd.xlane.f32.xlu0 %v1749
    %v1751 = vpop.xlane.xlu0 %1750
    %v1752 = vsel %vm275, %v1748, 0.0
    %1753 = vadd.xlane.f32.xlu0 %v1752
    %v1754 = vpop.xlane.xlu0 %1753
    %v1755 = vmul.f32 %v1751, %v1742
    %v1756 = vmul.f32 %v1754, %v1742
    %v1757 = vadd.f32 %v1755, 1e-05
    %v1758 = vadd.f32 %v1756, 1e-05
    %v1759 = vrsqrt.pop %v1757
    %v1760 = vrsqrt.pop %v1758
    %v1761 = vmul.f32 %v1745, %v1759
    %v1762 = vmul.f32 %v1746, %v1760
    %v1763 = vlaneseq
    %v1764 = vshrl.u32 %v1763, 7
    %v1765 = vsub.s32 0, %v1764
    %v1766 = vrot.slane %v702, %v1765
    %v1767 = vmul.f32 %v1761, %v1766
    %v1768 = vmul.f32 %v1762, %v1766
    %v1769 = vlaneseq
    %v1770 = vshrl.u32 %v1769, 7
    %v1771 = vsub.s32 0, %v1770
    %v1772 = vrot.slane %v703, %v1771
    %v1773 = vadd.f32 %v1767, %v1772
    %v1774 = vadd.f32 %v1768, %v1772
    %v1775 = vld [vmem:[%s49] sm:$0xff]
    %v1776 = vld [vmem:[%s49 + $0x8] sm:$0xff]
    %v1777 = vld [vmem:[%s49 + $0x10] sm:$0xff]
    %v1778 = vld [vmem:[%s49 + $0x18] sm:$0xff]
    %v1779 = vld [vmem:[%s51] sm:$0x1]
    %v1781 = vlaneseq
    %v1782 = vshrl.u32 %v1781, 7
    %v1783 = vsub.s32 0, %v1782
    %v1784 = vrot.slane %v1779, %v1783
    %v1787 = vsel %vm275, %v1773, 0
    %v1790 = vsel %vm275, %v1774, 0
    %1792 = vmatprep.subr.mxu0 0.0
    %1793 = vmatpush1.msra.mxu0 %v1775
    %1794 = vmatprep.subr.mxu0 0.0
    %1795 = vmatpush1.msra.mxu0 %v1776
    %1796 = vmatprep.subr.mxu0 0.0
    %1797 = vmatpush1.msra.mxu0 %v1777
    %1798 = vmatprep.subr.mxu0 0.0
    %1799 = vmatpush1.msra.mxu0 %v1778
    %1800 = vmatprep.subr.mxu0 0.0
    %1801 = vmatpush1.msra.mxu0 0.0
    %1802 = vmatprep.subr.mxu0 0.0
    %1803 = vmatpush1.msra.mxu0 0.0
    %1804 = vmatprep.subr.mxu0 0.0
    %1805 = vmatpush1.msra.mxu0 0.0
    %1806 = vmatprep.subr.mxu0 0.0
    %1807 = vmatpush1.msra.mxu0 0.0
    %1808 = vmatprep.subr.mxu0 0.0
    %1809 = vmatpush1.msra.mxu0 0.0
    %1810 = vmatprep.subr.mxu0 0.0
    %1811 = vmatpush1.msra.mxu0 0.0
    %1812 = vmatprep.subr.mxu0 0.0
    %1813 = vmatpush1.msra.mxu0 0.0
    %1814 = vmatprep.subr.mxu0 0.0
    %1815 = vmatpush1.msra.mxu0 0.0
    %1816 = vmatprep.subr.mxu0 0.0
    %1817 = vmatpush1.msra.mxu0 0.0
    %1818 = vmatprep.subr.mxu0 0.0
    %1819 = vmatpush1.msra.mxu0 0.0
    %1820 = vmatprep.subr.mxu0 0.0
    %1821 = vmatpush1.msra.mxu0 0.0
    %1822 = vmatprep.subr.mxu0 0.0
    %1823 = vmatpush1.msra.mxu0 0.0
    %1824 = vmatprep.subr.mxu0 0.0
    %1825 = vmatpush1.msra.mxu0 0.0
    %1826 = vmatprep.subr.mxu0 0.0
    %1827 = vmatpush1.msra.mxu0 0.0
    %1828 = vmatprep.subr.mxu0 0.0
    %1829 = vmatpush1.msra.mxu0 0.0
    %1830 = vmatprep.subr.mxu0 0.0
    %1831 = vmatpush1.msra.mxu0 0.0
    %1832 = vmatprep.subr.mxu0 0.0
    %1833 = vmatpush1.msra.mxu0 0.0
    %1834 = vmatprep.subr.mxu0 0.0
    %1835 = vmatpush1.msra.mxu0 0.0
    %1836 = vmatprep.subr.mxu0 0.0
    %1837 = vmatpush1.msra.mxu0 0.0
    %1838 = vmatprep.subr.mxu0 0.0
    %1839 = vmatpush1.msra.mxu0 0.0
    %1840 = vmatprep.subr.mxu0 0.0
    %1841 = vmatpush1.msra.mxu0 0.0
    %1842 = vmatprep.subr.mxu0 0.0
    %1843 = vmatpush1.msra.mxu0 0.0
    %1844 = vmatprep.subr.mxu0 0.0
    %1845 = vmatpush1.msra.mxu0 0.0
    %1846 = vmatprep.subr.mxu0 0.0
    %1847 = vmatpush1.msra.mxu0 0.0
    %1848 = vmatprep.subr.mxu0 0.0
    %1849 = vmatpush1.msra.mxu0 0.0
    %1850 = vmatprep.subr.mxu0 0.0
    %1851 = vmatpush1.msra.mxu0 0.0
    %1852 = vmatprep.subr.mxu0 0.0
    %1853 = vmatpush1.msra.mxu0 0.0
    %1854 = vmatprep.subr.mxu0 0.0
    %1855 = vmatpush1.msra.mxu0 0.0
    %1856 = vmatprep.mubr.f32.mxu0 0.0
    %1857 = vmatmul.mubr.f32.gmra.mrb[0].mxu0 %v1787
    %v1858 = vpop.f32.mrb[0].mxu0
    %v1859 = vadd.f32 %v1784, %v1858
    %v1860 = vpop.f32.mrb[0].mxu0
    %1861 = vmatprep.mubr.f32.mxu0 0.0
    %1862 = vmatmul.mubr.f32.gmra.mrb[0].mxu0 %v1790
    %v1863 = vpop.f32.mrb[0].mxu0
    %v1864 = vadd.f32 %v1784, %v1863
    %v1865 = vpop.f32.mrb[0].mxu0
    %1866 = vdwg.mxu0
    %v1867 = vmax.f32 %v1859, 0.0
    %v1868 = vmax.f32 %v1864, 0.0
    %v1869 = vld [vmem:[%s53] sm:$0xff]
    %v1870 = vld [vmem:[%s53 + $0x8] sm:$0xff]
    %v1871 = vld [vmem:[%s53 + $0x10] sm:$0xff]
    %v1872 = vld [vmem:[%s53 + $0x18] sm:$0xff]
    %v1873 = vld [vmem:[%s53 + $0x20] sm:$0xff]
    %v1874 = vld [vmem:[%s53 + $0x28] sm:$0xff]
    %v1875 = vld [vmem:[%s53 + $0x30] sm:$0xff]
    %v1876 = vld [vmem:[%s53 + $0x38] sm:$0xff]
    %v1877 = vld [vmem:[%s55] sm:$0x1]
    %v1879 = vlaneseq
    %v1880 = vshrl.u32 %v1879, 7
    %v1881 = vsub.s32 0, %v1880
    %v1882 = vrot.slane %v1877, %v1881
    %vm1884 = vcmask 523264
    %v1886 = vsel %vm1884, %v1867, 0
    %v1889 = vsel %vm1884, %v1868, 0
    %1891 = vmatprep.subr.mxu0 0.0
    %1892 = vmatpush1.msra.mxu0 %v1869
    %1893 = vmatprep.subr.mxu0 0.0
    %1894 = vmatpush1.msra.mxu0 %v1870
    %1895 = vmatprep.subr.mxu0 0.0
    %1896 = vmatpush1.msra.mxu0 %v1871
    %1897 = vmatprep.subr.mxu0 0.0
    %1898 = vmatpush1.msra.mxu0 %v1872
    %1899 = vmatprep.subr.mxu0 0.0
    %1900 = vmatpush1.msra.mxu0 %v1873
    %1901 = vmatprep.subr.mxu0 0.0
    %1902 = vmatpush1.msra.mxu0 %v1874
    %1903 = vmatprep.subr.mxu0 0.0
    %1904 = vmatpush1.msra.mxu0 %v1875
    %1905 = vmatprep.subr.mxu0 0.0
    %1906 = vmatpush1.msra.mxu0 %v1876
    %1907 = vmatprep.subr.mxu0 0.0
    %1908 = vmatpush1.msra.mxu0 0.0
    %1909 = vmatprep.subr.mxu0 0.0
    %1910 = vmatpush1.msra.mxu0 0.0
    %1911 = vmatprep.subr.mxu0 0.0
    %1912 = vmatpush1.msra.mxu0 0.0
    %1913 = vmatprep.subr.mxu0 0.0
    %1914 = vmatpush1.msra.mxu0 0.0
    %1915 = vmatprep.subr.mxu0 0.0
    %1916 = vmatpush1.msra.mxu0 0.0
    %1917 = vmatprep.subr.mxu0 0.0
    %1918 = vmatpush1.msra.mxu0 0.0
    %1919 = vmatprep.subr.mxu0 0.0
    %1920 = vmatpush1.msra.mxu0 0.0
    %1921 = vmatprep.subr.mxu0 0.0
    %1922 = vmatpush1.msra.mxu0 0.0
    %1923 = vmatprep.subr.mxu0 0.0
    %1924 = vmatpush1.msra.mxu0 0.0
    %1925 = vmatprep.subr.mxu0 0.0
    %1926 = vmatpush1.msra.mxu0 0.0
    %1927 = vmatprep.subr.mxu0 0.0
    %1928 = vmatpush1.msra.mxu0 0.0
    %1929 = vmatprep.subr.mxu0 0.0
    %1930 = vmatpush1.msra.mxu0 0.0
    %1931 = vmatprep.subr.mxu0 0.0
    %1932 = vmatpush1.msra.mxu0 0.0
    %1933 = vmatprep.subr.mxu0 0.0
    %1934 = vmatpush1.msra.mxu0 0.0
    %1935 = vmatprep.subr.mxu0 0.0
    %1936 = vmatpush1.msra.mxu0 0.0
    %1937 = vmatprep.subr.mxu0 0.0
    %1938 = vmatpush1.msra.mxu0 0.0
    %1939 = vmatprep.subr.mxu0 0.0
    %1940 = vmatpush1.msra.mxu0 0.0
    %1941 = vmatprep.subr.mxu0 0.0
    %1942 = vmatpush1.msra.mxu0 0.0
    %1943 = vmatprep.subr.mxu0 0.0
    %1944 = vmatpush1.msra.mxu0 0.0
    %1945 = vmatprep.subr.mxu0 0.0
    %1946 = vmatpush1.msra.mxu0 0.0
    %1947 = vmatprep.subr.mxu0 0.0
    %1948 = vmatpush1.msra.mxu0 0.0
    %1949 = vmatprep.subr.mxu0 0.0
    %1950 = vmatpush1.msra.mxu0 0.0
    %1951 = vmatprep.subr.mxu0 0.0
    %1952 = vmatpush1.msra.mxu0 0.0
    %1953 = vmatprep.subr.mxu0 0.0
    %1954 = vmatpush1.msra.mxu0 0.0
    %1955 = vmatprep.mubr.f32.mxu0 0.0
    %1956 = vmatmul.mubr.f32.gmra.mrb[0].mxu0 %v1886
    %v1957 = vpop.f32.mrb[0].mxu0
    %v1958 = vadd.f32 %v1882, %v1957
    %v1959 = vpop.f32.mrb[0].mxu0
    %1960 = vmatprep.mubr.f32.mxu0 0.0
    %1961 = vmatmul.mubr.f32.gmra.mrb[0].mxu0 %v1889
    %v1962 = vpop.f32.mrb[0].mxu0
    %v1963 = vadd.f32 %v1882, %v1962
    %v1964 = vpop.f32.mrb[0].mxu0
    %1965 = vdwg.mxu0
    %v1966 = vadd.f32 %v1773, %v1958
    %v1967 = vadd.f32 %v1774, %v1963
    %v1968 = vsel %vm275, %v1966, 0.0
    %1969 = vadd.xlane.f32.xlu0 %v1968
    %v1970 = vpop.xlane.xlu0 %1969
    %v1971 = vsel %vm275, %v1967, 0.0
    %1972 = vadd.xlane.f32.xlu0 %v1971
    %v1973 = vpop.xlane.xlu0 %1972
    %v1974 = vmul.f32 %v1970, %v1742
    %v1975 = vmul.f32 %v1973, %v1742
    %v1976 = vsub.f32 %v1966, %v1974
    %v1977 = vsub.f32 %v1967, %v1975
    %v1978 = vmul.f32 %v1976, %v1976
    %v1979 = vmul.f32 %v1977, %v1977
    %v1980 = vsel %vm275, %v1978, 0.0
    %1981 = vadd.xlane.f32.xlu0 %v1980
    %v1982 = vpop.xlane.xlu0 %1981
    %v1983 = vsel %vm275, %v1979, 0.0
    %1984 = vadd.xlane.f32.xlu0 %v1983
    %v1985 = vpop.xlane.xlu0 %1984
    %v1986 = vmul.f32 %v1982, %v1742
    %v1987 = vmul.f32 %v1985, %v1742
    %v1988 = vadd.f32 %v1986, 1e-05
    %v1989 = vadd.f32 %v1987, 1e-05
    %v1990 = vrsqrt.pop %v1988
    %v1991 = vrsqrt.pop %v1989
    %v1992 = vmul.f32 %v1976, %v1990
    %v1993 = vmul.f32 %v1977, %v1991
    %v1994 = vlaneseq
    %v1995 = vshrl.u32 %v1994, 7
    %v1996 = vsub.s32 1, %v1995
    %v1997 = vrot.slane %v702, %v1996
    %v1998 = vmul.f32 %v1992, %v1997
    %v1999 = vmul.f32 %v1993, %v1997
    %v2000 = vlaneseq
    %v2001 = vshrl.u32 %v2000, 7
    %v2002 = vsub.s32 1, %v2001
    %v2003 = vrot.slane %v703, %v2002
    %v2004 = vadd.f32 %v1998, %v2003
    %v2005 = vadd.f32 %v1999, %v2003
    %v2006 = vld [vmem:[%s13] sm:$0xff]
    %v2007 = vld [vmem:[%s9] sm:$0xff]
    %v2008 = vld [vmem:[%s9 + $0x8] sm:$0xff]
    %v2009 = vld [vmem:[%s11] sm:$0xff]
    %v2010 = vld [vmem:[%s11 + $0x8] sm:$0xff]
    %s2011 = scalar_lea.vmem %s57, 32
    %v2012 = vld [vmem:[%s2011] sm:$0xff]
    %v2013 = vld [vmem:[%s2011 + $0x8] sm:$0xff]
    %v2014 = vld [vmem:[%s2011 + $0x10] sm:$0xff]
    %v2015 = vld [vmem:[%s2011 + $0x18] sm:$0xff]
    %v2017 = vsel %vm368, %v2007, 0
    %v2020 = vsel %vm368, %v2008, 0
    %2022 = vmatprep.subr.mxu0 0.0
    %2023 = vmatpush1.msra.mxu0 %v2004
    %2024 = vmatprep.subr.mxu0 0.0
    %2025 = vmatpush1.msra.mxu0 %v2005
    %2026 = vmatprep.subr.mxu0 0.0
    %2027 = vmatpush1.msra.mxu0 0.0
    %2028 = vmatprep.subr.mxu0 0.0
    %2029 = vmatpush1.msra.mxu0 0.0
    %2030 = vmatprep.subr.mxu0 0.0
    %2031 = vmatpush1.msra.mxu0 0.0
    %2032 = vmatprep.subr.mxu0 0.0
    %2033 = vmatpush1.msra.mxu0 0.0
    %2034 = vmatprep.subr.mxu0 0.0
    %2035 = vmatpush1.msra.mxu0 0.0
    %2036 = vmatprep.subr.mxu0 0.0
    %2037 = vmatpush1.msra.mxu0 0.0
    %2038 = vmatprep.subr.mxu0 0.0
    %2039 = vmatpush1.msra.mxu0 0.0
    %2040 = vmatprep.subr.mxu0 0.0
    %2041 = vmatpush1.msra.mxu0 0.0
    %2042 = vmatprep.subr.mxu0 0.0
    %2043 = vmatpush1.msra.mxu0 0.0
    %2044 = vmatprep.subr.mxu0 0.0
    %2045 = vmatpush1.msra.mxu0 0.0
    %2046 = vmatprep.subr.mxu0 0.0
    %2047 = vmatpush1.msra.mxu0 0.0
    %2048 = vmatprep.subr.mxu0 0.0
    %2049 = vmatpush1.msra.mxu0 0.0
    %2050 = vmatprep.subr.mxu0 0.0
    %2051 = vmatpush1.msra.mxu0 0.0
    %2052 = vmatprep.subr.mxu0 0.0
    %2053 = vmatpush1.msra.mxu0 0.0
    %2054 = vmatprep.subr.mxu0 0.0
    %2055 = vmatpush1.msra.mxu0 0.0
    %2056 = vmatprep.subr.mxu0 0.0
    %2057 = vmatpush1.msra.mxu0 0.0
    %2058 = vmatprep.subr.mxu0 0.0
    %2059 = vmatpush1.msra.mxu0 0.0
    %2060 = vmatprep.subr.mxu0 0.0
    %2061 = vmatpush1.msra.mxu0 0.0
    %2062 = vmatprep.subr.mxu0 0.0
    %2063 = vmatpush1.msra.mxu0 0.0
    %2064 = vmatprep.subr.mxu0 0.0
    %2065 = vmatpush1.msra.mxu0 0.0
    %2066 = vmatprep.subr.mxu0 0.0
    %2067 = vmatpush1.msra.mxu0 0.0
    %2068 = vmatprep.subr.mxu0 0.0
    %2069 = vmatpush1.msra.mxu0 0.0
    %2070 = vmatprep.subr.mxu0 0.0
    %2071 = vmatpush1.msra.mxu0 0.0
    %2072 = vmatprep.subr.mxu0 0.0
    %2073 = vmatpush1.msra.mxu0 0.0
    %2074 = vmatprep.subr.mxu0 0.0
    %2075 = vmatpush1.msra.mxu0 0.0
    %2076 = vmatprep.subr.mxu0 0.0
    %2077 = vmatpush1.msra.mxu0 0.0
    %2078 = vmatprep.subr.mxu0 0.0
    %2079 = vmatpush1.msra.mxu0 0.0
    %2080 = vmatprep.subr.mxu0 0.0
    %2081 = vmatpush1.msra.mxu0 0.0
    %2082 = vmatprep.subr.mxu0 0.0
    %2083 = vmatpush1.msra.mxu0 0.0
    %2084 = vmatprep.subr.mxu0 0.0
    %2085 = vmatpush1.msra.mxu0 0.0
    %2086 = vmatprep.mubr.f32.mxu0 0.0
    %2087 = vmatmul.mubr.f32.gmra.mrb[0].mxu0 %v2017
    %v2088 = vpop.f32.mrb[0].mxu0
    %v2089 = vadd.f32 0.0, %v2088
    %v2090 = vpop.f32.mrb[0].mxu0
    %2091 = vmatprep.mubr.f32.mxu0 0.0
    %2092 = vmatmul.mubr.f32.gmra.mrb[0].mxu0 %v2020
    %v2093 = vpop.f32.mrb[0].mxu0
    %v2094 = vadd.f32 0.0, %v2093
    %v2095 = vpop.f32.mrb[0].mxu0
    %2096 = vdwg.mxu0
    %v2097 = vld [vmem:[%s57] sm:$0xff]
    %v2098 = vld [vmem:[%s57 + $0x8] sm:$0xff]
    %v2099 = vld [vmem:[%s57 + $0x10] sm:$0xff]
    %v2100 = vld [vmem:[%s57 + $0x18] sm:$0xff]
    %v2102 = vsel %vm275, %v2089, 0
    %v2105 = vsel %vm275, %v2094, 0
    %2107 = vmatprep.subr.mxu0 0.0
    %2108 = vmatpush1.msra.mxu0 %v2097
    %2109 = vmatprep.subr.mxu0 0.0
    %2110 = vmatpush1.msra.mxu0 %v2098
    %2111 = vmatprep.subr.mxu0 0.0
    %2112 = vmatpush1.msra.mxu0 %v2099
    %2113 = vmatprep.subr.mxu0 0.0
    %2114 = vmatpush1.msra.mxu0 %v2100
    %2115 = vmatprep.subr.mxu0 0.0
    %2116 = vmatpush1.msra.mxu0 0.0
    %2117 = vmatprep.subr.mxu0 0.0
    %2118 = vmatpush1.msra.mxu0 0.0
    %2119 = vmatprep.subr.mxu0 0.0
    %2120 = vmatpush1.msra.mxu0 0.0
    %2121 = vmatprep.subr.mxu0 0.0
    %2122 = vmatpush1.msra.mxu0 0.0
    %2123 = vmatprep.subr.mxu0 0.0
    %2124 = vmatpush1.msra.mxu0 0.0
    %2125 = vmatprep.subr.mxu0 0.0
    %2126 = vmatpush1.msra.mxu0 0.0
    %2127 = vmatprep.subr.mxu0 0.0
    %2128 = vmatpush1.msra.mxu0 0.0
    %2129 = vmatprep.subr.mxu0 0.0
    %2130 = vmatpush1.msra.mxu0 0.0
    %2131 = vmatprep.subr.mxu0 0.0
    %2132 = vmatpush1.msra.mxu0 0.0
    %2133 = vmatprep.subr.mxu0 0.0
    %2134 = vmatpush1.msra.mxu0 0.0
    %2135 = vmatprep.subr.mxu0 0.0
    %2136 = vmatpush1.msra.mxu0 0.0
    %2137 = vmatprep.subr.mxu0 0.0
    %2138 = vmatpush1.msra.mxu0 0.0
    %2139 = vmatprep.subr.mxu0 0.0
    %2140 = vmatpush1.msra.mxu0 0.0
    %2141 = vmatprep.subr.mxu0 0.0
    %2142 = vmatpush1.msra.mxu0 0.0
    %2143 = vmatprep.subr.mxu0 0.0
    %2144 = vmatpush1.msra.mxu0 0.0
    %2145 = vmatprep.subr.mxu0 0.0
    %2146 = vmatpush1.msra.mxu0 0.0
    %2147 = vmatprep.subr.mxu0 0.0
    %2148 = vmatpush1.msra.mxu0 0.0
    %2149 = vmatprep.subr.mxu0 0.0
    %2150 = vmatpush1.msra.mxu0 0.0
    %2151 = vmatprep.subr.mxu0 0.0
    %2152 = vmatpush1.msra.mxu0 0.0
    %2153 = vmatprep.subr.mxu0 0.0
    %2154 = vmatpush1.msra.mxu0 0.0
    %2155 = vmatprep.subr.mxu0 0.0
    %2156 = vmatpush1.msra.mxu0 0.0
    %2157 = vmatprep.subr.mxu0 0.0
    %2158 = vmatpush1.msra.mxu0 0.0
    %2159 = vmatprep.subr.mxu0 0.0
    %2160 = vmatpush1.msra.mxu0 0.0
    %2161 = vmatprep.subr.mxu0 0.0
    %2162 = vmatpush1.msra.mxu0 0.0
    %2163 = vmatprep.subr.mxu0 0.0
    %2164 = vmatpush1.msra.mxu0 0.0
    %2165 = vmatprep.subr.mxu0 0.0
    %2166 = vmatpush1.msra.mxu0 0.0
    %2167 = vmatprep.subr.mxu0 0.0
    %2168 = vmatpush1.msra.mxu0 0.0
    %2169 = vmatprep.subr.mxu0 0.0
    %2170 = vmatpush1.msra.mxu0 0.0
    %2171 = vmatprep.mubr.f32.mxu0 0.0
    %2172 = vmatmul.mubr.f32.gmra.mrb[0].mxu0 %v2102
    %v2173 = vpop.f32.mrb[0].mxu0
    %v2174 = vadd.f32 0.0, %v2173
    %v2175 = vpop.f32.mrb[0].mxu0
    %2176 = vmatprep.mubr.f32.mxu0 0.0
    %2177 = vmatmul.mubr.f32.gmra.mrb[0].mxu0 %v2105
    %v2178 = vpop.f32.mrb[0].mxu0
    %v2179 = vadd.f32 0.0, %v2178
    %v2180 = vpop.f32.mrb[0].mxu0
    %2181 = vdwg.mxu0
    %v2183 = vsel %vm275, %v2004, 0
    %v2186 = vsel %vm275, %v2005, 0
    %2188 = vmatprep.subr.mxu0 0.0
    %2189 = vmatpush1.msra.mxu0 %v2012
    %2190 = vmatprep.subr.mxu0 0.0
    %2191 = vmatpush1.msra.mxu0 %v2013
    %2192 = vmatprep.subr.mxu0 0.0
    %2193 = vmatpush1.msra.mxu0 %v2014
    %2194 = vmatprep.subr.mxu0 0.0
    %2195 = vmatpush1.msra.mxu0 %v2015
    %2196 = vmatprep.subr.mxu0 0.0
    %2197 = vmatpush1.msra.mxu0 0.0
    %2198 = vmatprep.subr.mxu0 0.0
    %2199 = vmatpush1.msra.mxu0 0.0
    %2200 = vmatprep.subr.mxu0 0.0
    %2201 = vmatpush1.msra.mxu0 0.0
    %2202 = vmatprep.subr.mxu0 0.0
    %2203 = vmatpush1.msra.mxu0 0.0
    %2204 = vmatprep.subr.mxu0 0.0
    %2205 = vmatpush1.msra.mxu0 0.0
    %2206 = vmatprep.subr.mxu0 0.0
    %2207 = vmatpush1.msra.mxu0 0.0
    %2208 = vmatprep.subr.mxu0 0.0
    %2209 = vmatpush1.msra.mxu0 0.0
    %2210 = vmatprep.subr.mxu0 0.0
    %2211 = vmatpush1.msra.mxu0 0.0
    %2212 = vmatprep.subr.mxu0 0.0
    %2213 = vmatpush1.msra.mxu0 0.0
    %2214 = vmatprep.subr.mxu0 0.0
    %2215 = vmatpush1.msra.mxu0 0.0
    %2216 = vmatprep.subr.mxu0 0.0
    %2217 = vmatpush1.msra.mxu0 0.0
    %2218 = vmatprep.subr.mxu0 0.0
    %2219 = vmatpush1.msra.mxu0 0.0
    %2220 = vmatprep.subr.mxu0 0.0
    %2221 = vmatpush1.msra.mxu0 0.0
    %2222 = vmatprep.subr.mxu0 0.0
    %2223 = vmatpush1.msra.mxu0 0.0
    %2224 = vmatprep.subr.mxu0 0.0
    %2225 = vmatpush1.msra.mxu0 0.0
    %2226 = vmatprep.subr.mxu0 0.0
    %2227 = vmatpush1.msra.mxu0 0.0
    %2228 = vmatprep.subr.mxu0 0.0
    %2229 = vmatpush1.msra.mxu0 0.0
    %2230 = vmatprep.subr.mxu0 0.0
    %2231 = vmatpush1.msra.mxu0 0.0
    %2232 = vmatprep.subr.mxu0 0.0
    %2233 = vmatpush1.msra.mxu0 0.0
    %2234 = vmatprep.subr.mxu0 0.0
    %2235 = vmatpush1.msra.mxu0 0.0
    %2236 = vmatprep.subr.mxu0 0.0
    %2237 = vmatpush1.msra.mxu0 0.0
    %2238 = vmatprep.subr.mxu0 0.0
    %2239 = vmatpush1.msra.mxu0 0.0
    %2240 = vmatprep.subr.mxu0 0.0
    %2241 = vmatpush1.msra.mxu0 0.0
    %2242 = vmatprep.subr.mxu0 0.0
    %2243 = vmatpush1.msra.mxu0 0.0
    %2244 = vmatprep.subr.mxu0 0.0
    %2245 = vmatpush1.msra.mxu0 0.0
    %2246 = vmatprep.subr.mxu0 0.0
    %2247 = vmatpush1.msra.mxu0 0.0
    %2248 = vmatprep.subr.mxu0 0.0
    %2249 = vmatpush1.msra.mxu0 0.0
    %2250 = vmatprep.subr.mxu0 0.0
    %2251 = vmatpush1.msra.mxu0 0.0
    %2252 = vmatprep.mubr.f32.mxu0 0.0
    %2253 = vmatmul.mubr.f32.gmra.mrb[0].mxu0 %v2183
    %v2254 = vpop.f32.mrb[0].mxu0
    %v2255 = vadd.f32 %v2174, %v2254
    %v2256 = vpop.f32.mrb[0].mxu0
    %2257 = vmatprep.mubr.f32.mxu0 0.0
    %2258 = vmatmul.mubr.f32.gmra.mrb[0].mxu0 %v2186
    %v2259 = vpop.f32.mrb[0].mxu0
    %v2260 = vadd.f32 %v2179, %v2259
    %v2261 = vpop.f32.mrb[0].mxu0
    %2262 = vdwg.mxu0
    %v2264 = vsel %vm368, %v2009, 0
    %v2267 = vsel %vm368, %v2010, 0
    %2269 = vmatprep.subr.mxu0 0.0
    %2270 = vmatpush1.msra.mxu0 %v2004
    %2271 = vmatprep.subr.mxu0 0.0
    %2272 = vmatpush1.msra.mxu0 %v2005
    %2273 = vmatprep.subr.mxu0 0.0
    %2274 = vmatpush1.msra.mxu0 0.0
    %2275 = vmatprep.subr.mxu0 0.0
    %2276 = vmatpush1.msra.mxu0 0.0
    %2277 = vmatprep.subr.mxu0 0.0
    %2278 = vmatpush1.msra.mxu0 0.0
    %2279 = vmatprep.subr.mxu0 0.0
    %2280 = vmatpush1.msra.mxu0 0.0
    %2281 = vmatprep.subr.mxu0 0.0
    %2282 = vmatpush1.msra.mxu0 0.0
    %2283 = vmatprep.subr.mxu0 0.0
    %2284 = vmatpush1.msra.mxu0 0.0
    %2285 = vmatprep.subr.mxu0 0.0
    %2286 = vmatpush1.msra.mxu0 0.0
    %2287 = vmatprep.subr.mxu0 0.0
    %2288 = vmatpush1.msra.mxu0 0.0
    %2289 = vmatprep.subr.mxu0 0.0
    %2290 = vmatpush1.msra.mxu0 0.0
    %2291 = vmatprep.subr.mxu0 0.0
    %2292 = vmatpush1.msra.mxu0 0.0
    %2293 = vmatprep.subr.mxu0 0.0
    %2294 = vmatpush1.msra.mxu0 0.0
    %2295 = vmatprep.subr.mxu0 0.0
    %2296 = vmatpush1.msra.mxu0 0.0
    %2297 = vmatprep.subr.mxu0 0.0
    %2298 = vmatpush1.msra.mxu0 0.0
    %2299 = vmatprep.subr.mxu0 0.0
    %2300 = vmatpush1.msra.mxu0 0.0
    %2301 = vmatprep.subr.mxu0 0.0
    %2302 = vmatpush1.msra.mxu0 0.0
    %2303 = vmatprep.subr.mxu0 0.0
    %2304 = vmatpush1.msra.mxu0 0.0
    %2305 = vmatprep.subr.mxu0 0.0
    %2306 = vmatpush1.msra.mxu0 0.0
    %2307 = vmatprep.subr.mxu0 0.0
    %2308 = vmatpush1.msra.mxu0 0.0
    %2309 = vmatprep.subr.mxu0 0.0
    %2310 = vmatpush1.msra.mxu0 0.0
    %2311 = vmatprep.subr.mxu0 0.0
    %2312 = vmatpush1.msra.mxu0 0.0
    %2313 = vmatprep.subr.mxu0 0.0
    %2314 = vmatpush1.msra.mxu0 0.0
    %2315 = vmatprep.subr.mxu0 0.0
    %2316 = vmatpush1.msra.mxu0 0.0
    %2317 = vmatprep.subr.mxu0 0.0
    %2318 = vmatpush1.msra.mxu0 0.0
    %2319 = vmatprep.subr.mxu0 0.0
    %2320 = vmatpush1.msra.mxu0 0.0
    %2321 = vmatprep.subr.mxu0 0.0
    %2322 = vmatpush1.msra.mxu0 0.0
    %2323 = vmatprep.subr.mxu0 0.0
    %2324 = vmatpush1.msra.mxu0 0.0
    %2325 = vmatprep.subr.mxu0 0.0
    %2326 = vmatpush1.msra.mxu0 0.0
    %2327 = vmatprep.subr.mxu0 0.0
    %2328 = vmatpush1.msra.mxu0 0.0
    %2329 = vmatprep.subr.mxu0 0.0
    %2330 = vmatpush1.msra.mxu0 0.0
    %2331 = vmatprep.subr.mxu0 0.0
    %2332 = vmatpush1.msra.mxu0 0.0
    %2333 = vmatprep.mubr.f32.mxu0 0.0
    %2334 = vmatmul.mubr.f32.gmra.mrb[0].mxu0 %v2264
    %v2335 = vpop.f32.mrb[0].mxu0
    %v2336 = vadd.f32 0.0, %v2335
    %v2337 = vpop.f32.mrb[0].mxu0
    %2338 = vmatprep.mubr.f32.mxu0 0.0
    %2339 = vmatmul.mubr.f32.gmra.mrb[0].mxu0 %v2267
    %v2340 = vpop.f32.mrb[0].mxu0
    %v2341 = vadd.f32 0.0, %v2340
    %v2342 = vpop.f32.mrb[0].mxu0
    %2343 = vdwg.mxu0
    %s2344 = scalar_lea.vmem %s57, 64
    %v2345 = vld [vmem:[%s2344] sm:$0xff]
    %v2346 = vld [vmem:[%s2344 + $0x8] sm:$0xff]
    %v2347 = vld [vmem:[%s2344 + $0x10] sm:$0xff]
    %v2348 = vld [vmem:[%s2344 + $0x18] sm:$0xff]
    %v2350 = vsel %vm275, %v2336, 0
    %v2353 = vsel %vm275, %v2341, 0
    %2355 = vmatprep.subr.mxu0 0.0
    %2356 = vmatpush1.msra.mxu0 %v2345
    %2357 = vmatprep.subr.mxu0 0.0
    %2358 = vmatpush1.msra.mxu0 %v2346
    %2359 = vmatprep.subr.mxu0 0.0
    %2360 = vmatpush1.msra.mxu0 %v2347
    %2361 = vmatprep.subr.mxu0 0.0
    %2362 = vmatpush1.msra.mxu0 %v2348
    %2363 = vmatprep.subr.mxu0 0.0
    %2364 = vmatpush1.msra.mxu0 0.0
    %2365 = vmatprep.subr.mxu0 0.0
    %2366 = vmatpush1.msra.mxu0 0.0
    %2367 = vmatprep.subr.mxu0 0.0
    %2368 = vmatpush1.msra.mxu0 0.0
    %2369 = vmatprep.subr.mxu0 0.0
    %2370 = vmatpush1.msra.mxu0 0.0
    %2371 = vmatprep.subr.mxu0 0.0
    %2372 = vmatpush1.msra.mxu0 0.0
    %2373 = vmatprep.subr.mxu0 0.0
    %2374 = vmatpush1.msra.mxu0 0.0
    %2375 = vmatprep.subr.mxu0 0.0
    %2376 = vmatpush1.msra.mxu0 0.0
    %2377 = vmatprep.subr.mxu0 0.0
    %2378 = vmatpush1.msra.mxu0 0.0
    %2379 = vmatprep.subr.mxu0 0.0
    %2380 = vmatpush1.msra.mxu0 0.0
    %2381 = vmatprep.subr.mxu0 0.0
    %2382 = vmatpush1.msra.mxu0 0.0
    %2383 = vmatprep.subr.mxu0 0.0
    %2384 = vmatpush1.msra.mxu0 0.0
    %2385 = vmatprep.subr.mxu0 0.0
    %2386 = vmatpush1.msra.mxu0 0.0
    %2387 = vmatprep.subr.mxu0 0.0
    %2388 = vmatpush1.msra.mxu0 0.0
    %2389 = vmatprep.subr.mxu0 0.0
    %2390 = vmatpush1.msra.mxu0 0.0
    %2391 = vmatprep.subr.mxu0 0.0
    %2392 = vmatpush1.msra.mxu0 0.0
    %2393 = vmatprep.subr.mxu0 0.0
    %2394 = vmatpush1.msra.mxu0 0.0
    %2395 = vmatprep.subr.mxu0 0.0
    %2396 = vmatpush1.msra.mxu0 0.0
    %2397 = vmatprep.subr.mxu0 0.0
    %2398 = vmatpush1.msra.mxu0 0.0
    %2399 = vmatprep.subr.mxu0 0.0
    %2400 = vmatpush1.msra.mxu0 0.0
    %2401 = vmatprep.subr.mxu0 0.0
    %2402 = vmatpush1.msra.mxu0 0.0
    %2403 = vmatprep.subr.mxu0 0.0
    %2404 = vmatpush1.msra.mxu0 0.0
    %2405 = vmatprep.subr.mxu0 0.0
    %2406 = vmatpush1.msra.mxu0 0.0
    %2407 = vmatprep.subr.mxu0 0.0
    %2408 = vmatpush1.msra.mxu0 0.0
    %2409 = vmatprep.subr.mxu0 0.0
    %2410 = vmatpush1.msra.mxu0 0.0
    %2411 = vmatprep.subr.mxu0 0.0
    %2412 = vmatpush1.msra.mxu0 0.0
    %2413 = vmatprep.subr.mxu0 0.0
    %2414 = vmatpush1.msra.mxu0 0.0
    %2415 = vmatprep.subr.mxu0 0.0
    %2416 = vmatpush1.msra.mxu0 0.0
    %2417 = vmatprep.subr.mxu0 0.0
    %2418 = vmatpush1.msra.mxu0 0.0
    %2419 = vmatprep.mubr.f32.mxu0 0.0
    %2420 = vmatmul.mubr.f32.gmra.mrb[0].mxu0 %v2350
    %v2421 = vpop.f32.mrb[0].mxu0
    %v2422 = vadd.f32 0.0, %v2421
    %v2423 = vpop.f32.mrb[0].mxu0
    %2424 = vmatprep.mubr.f32.mxu0 0.0
    %2425 = vmatmul.mubr.f32.gmra.mrb[0].mxu0 %v2353
    %v2426 = vpop.f32.mrb[0].mxu0
    %v2427 = vadd.f32 0.0, %v2426
    %v2428 = vpop.f32.mrb[0].mxu0
    %2429 = vdwg.mxu0
    %v2430 = vadd.f32 %v2255, %v2422
    %v2431 = vadd.f32 %v2260, %v2427
    %v2432 = vld [vmem:[%s59] sm:$0x1]
    %v2434 = vlaneseq
    %v2435 = vshrl.u32 %v2434, 7
    %v2436 = vsub.s32 0, %v2435
    %v2437 = vrot.slane %v2432, %v2436
    %v2439 = vadd.f32 %v2430, %v2437
    %v2440 = vadd.f32 %v2431, %v2437
    %v2441 = vmul.f32 %v2439, 0.70710677
    %v2442 = vmul.f32 %v2440, 0.70710677
    %v2443 = vand.u32 2147483647, %v2441
    %v2444 = vand.u32 2147483647, %v2442
    %v2445 = vmul.f32 %v2443, 0.3275911
    %v2446 = vmul.f32 %v2444, 0.3275911
    %v2447 = vadd.f32 %v2445, 1.0
    %v2448 = vadd.f32 %v2446, 1.0
    %v2449 = vrcp.pop %v2447
    %v2450 = vmul.f32 1.0, %v2449
    %v2451 = vrcp.pop %v2448
    %v2452 = vmul.f32 1.0, %v2451
    %v2453 = vmul.f32 %v2450, 1.0614054
    %v2454 = vmul.f32 %v2452, 1.0614054
    %v2455 = vadd.f32 %v2453, -1.4531521
    %v2456 = vadd.f32 %v2454, -1.4531521
    %v2457 = vmul.f32 %v2450, %v2455
    %v2458 = vmul.f32 %v2452, %v2456
    %v2459 = vadd.f32 %v2457, 1.4214138
    %v2460 = vadd.f32 %v2458, 1.4214138
    %v2461 = vmul.f32 %v2450, %v2459
    %v2462 = vmul.f32 %v2452, %v2460
    %v2463 = vadd.f32 %v2461, -0.28449672
    %v2464 = vadd.f32 %v2462, -0.28449672
    %v2465 = vmul.f32 %v2450, %v2463
    %v2466 = vmul.f32 %v2452, %v2464
    %v2467 = vadd.f32 %v2465, 0.2548296
    %v2468 = vadd.f32 %v2466, 0.2548296
    %v2469 = vmul.f32 %v2450, %v2467
    %v2470 = vmul.f32 %v2452, %v2468
    %v2471 = vsub.f32 0.0, %v2443
    %v2472 = vsub.f32 0.0, %v2444
    %v2473 = vmul.f32 %v2471, %v2443
    %v2474 = vmul.f32 %v2472, %v2444
    %v2475 = vmul.f32 %v2473, 1.442695
    %v2476 = vpow.pop %v2475
    %v2477 = vmul.f32 %v2474, 1.442695
    %v2478 = vpow.pop %v2477
    %v2479 = vmul.f32 %v2469, %v2476
    %v2480 = vmul.f32 %v2470, %v2478
    %v2481 = vsub.f32 1.0, %v2479
    %v2482 = vsub.f32 1.0, %v2480
    %vm2483 = vcmp.lt.f32.partialorder %v2441, 0.0
    %vm2484 = vcmp.lt.f32.partialorder %v2442, 0.0
    %v2485 = vsub.f32 0.0, %v2481
    %v2486 = vsub.f32 0.0, %v2482
    %v2487 = vsel %vm2483, %v2485, %v2481
    %v2488 = vsel %vm2484, %v2486, %v2482
    %v2489 = vmul.f32 %v2439, 0.5
    %v2490 = vmul.f32 %v2440, 0.5
    %v2491 = vadd.f32 %v2487, 1.0
    %v2492 = vadd.f32 %v2488, 1.0
    %v2493 = vmul.f32 %v2489, %v2491
    %v2494 = vmul.f32 %v2490, %v2492
    %v2496 = vsel %vm368, %v2006, 0
    %2498 = vmatprep.subr.mxu0 0.0
    %2499 = vmatpush1.msra.mxu0 %v2493
    %2500 = vmatprep.subr.mxu0 0.0
    %2501 = vmatpush1.msra.mxu0 %v2494
    %2502 = vmatprep.subr.mxu0 0.0
    %2503 = vmatpush1.msra.mxu0 0.0
    %2504 = vmatprep.subr.mxu0 0.0
    %2505 = vmatpush1.msra.mxu0 0.0
    %2506 = vmatprep.subr.mxu0 0.0
    %2507 = vmatpush1.msra.mxu0 0.0
    %2508 = vmatprep.subr.mxu0 0.0
    %2509 = vmatpush1.msra.mxu0 0.0
    %2510 = vmatprep.subr.mxu0 0.0
    %2511 = vmatpush1.msra.mxu0 0.0
    %2512 = vmatprep.subr.mxu0 0.0
    %2513 = vmatpush1.msra.mxu0 0.0
    %2514 = vmatprep.subr.mxu0 0.0
    %2515 = vmatpush1.msra.mxu0 0.0
    %2516 = vmatprep.subr.mxu0 0.0
    %2517 = vmatpush1.msra.mxu0 0.0
    %2518 = vmatprep.subr.mxu0 0.0
    %2519 = vmatpush1.msra.mxu0 0.0
    %2520 = vmatprep.subr.mxu0 0.0
    %2521 = vmatpush1.msra.mxu0 0.0
    %2522 = vmatprep.subr.mxu0 0.0
    %2523 = vmatpush1.msra.mxu0 0.0
    %2524 = vmatprep.subr.mxu0 0.0
    %2525 = vmatpush1.msra.mxu0 0.0
    %2526 = vmatprep.subr.mxu0 0.0
    %2527 = vmatpush1.msra.mxu0 0.0
    %2528 = vmatprep.subr.mxu0 0.0
    %2529 = vmatpush1.msra.mxu0 0.0
    %2530 = vmatprep.subr.mxu0 0.0
    %2531 = vmatpush1.msra.mxu0 0.0
    %2532 = vmatprep.subr.mxu0 0.0
    %2533 = vmatpush1.msra.mxu0 0.0
    %2534 = vmatprep.subr.mxu0 0.0
    %2535 = vmatpush1.msra.mxu0 0.0
    %2536 = vmatprep.subr.mxu0 0.0
    %2537 = vmatpush1.msra.mxu0 0.0
    %2538 = vmatprep.subr.mxu0 0.0
    %2539 = vmatpush1.msra.mxu0 0.0
    %2540 = vmatprep.subr.mxu0 0.0
    %2541 = vmatpush1.msra.mxu0 0.0
    %2542 = vmatprep.subr.mxu0 0.0
    %2543 = vmatpush1.msra.mxu0 0.0
    %2544 = vmatprep.subr.mxu0 0.0
    %2545 = vmatpush1.msra.mxu0 0.0
    %2546 = vmatprep.subr.mxu0 0.0
    %2547 = vmatpush1.msra.mxu0 0.0
    %2548 = vmatprep.subr.mxu0 0.0
    %2549 = vmatpush1.msra.mxu0 0.0
    %2550 = vmatprep.subr.mxu0 0.0
    %2551 = vmatpush1.msra.mxu0 0.0
    %2552 = vmatprep.subr.mxu0 0.0
    %2553 = vmatpush1.msra.mxu0 0.0
    %2554 = vmatprep.subr.mxu0 0.0
    %2555 = vmatpush1.msra.mxu0 0.0
    %2556 = vmatprep.subr.mxu0 0.0
    %2557 = vmatpush1.msra.mxu0 0.0
    %2558 = vmatprep.subr.mxu0 0.0
    %2559 = vmatpush1.msra.mxu0 0.0
    %2560 = vmatprep.subr.mxu0 0.0
    %2561 = vmatpush1.msra.mxu0 0.0
    %2562 = vmatprep.mubr.f32.mxu0 0.0
    %2563 = vmatmul.mubr.f32.gmra.mrb[0].mxu0 %v2496
    %v2564 = vpop.f32.mrb[0].mxu0
    %v2565 = vadd.f32 0.0, %v2564
    %v2566 = vpop.f32.mrb[0].mxu0
    %2567 = vdwg.mxu0
    %v2568 = vld [vmem:[%s19] sm:$0xf]
    %v2569 = vld [vmem:[%s15] sm:$0xff]
    %v2570 = vld [vmem:[%s17] sm:$0xff]
    %s2571 = scalar_lea.vmem %s61, 32
    %v2572 = vld [vmem:[%s2571] sm:$0xff]
    %v2573 = vld [vmem:[%s2571 + $0x8] sm:$0xff]
    %v2574 = vld [vmem:[%s2571 + $0x10] sm:$0xff]
    %v2575 = vld [vmem:[%s2571 + $0x18] sm:$0xff]
    %v2577 = vsel %vm807, %v2569, 0
    %2579 = vmatprep.subr.mxu0 0.0
    %2580 = vmatpush1.msra.mxu0 %v2565
    %2581 = vmatprep.subr.mxu0 0.0
    %2582 = vmatpush1.msra.mxu0 0.0
    %2583 = vmatprep.subr.mxu0 0.0
    %2584 = vmatpush1.msra.mxu0 0.0
    %2585 = vmatprep.subr.mxu0 0.0
    %2586 = vmatpush1.msra.mxu0 0.0
    %2587 = vmatprep.subr.mxu0 0.0
    %2588 = vmatpush1.msra.mxu0 0.0
    %2589 = vmatprep.subr.mxu0 0.0
    %2590 = vmatpush1.msra.mxu0 0.0
    %2591 = vmatprep.subr.mxu0 0.0
    %2592 = vmatpush1.msra.mxu0 0.0
    %2593 = vmatprep.subr.mxu0 0.0
    %2594 = vmatpush1.msra.mxu0 0.0
    %2595 = vmatprep.subr.mxu0 0.0
    %2596 = vmatpush1.msra.mxu0 0.0
    %2597 = vmatprep.subr.mxu0 0.0
    %2598 = vmatpush1.msra.mxu0 0.0
    %2599 = vmatprep.subr.mxu0 0.0
    %2600 = vmatpush1.msra.mxu0 0.0
    %2601 = vmatprep.subr.mxu0 0.0
    %2602 = vmatpush1.msra.mxu0 0.0
    %2603 = vmatprep.subr.mxu0 0.0
    %2604 = vmatpush1.msra.mxu0 0.0
    %2605 = vmatprep.subr.mxu0 0.0
    %2606 = vmatpush1.msra.mxu0 0.0
    %2607 = vmatprep.subr.mxu0 0.0
    %2608 = vmatpush1.msra.mxu0 0.0
    %2609 = vmatprep.subr.mxu0 0.0
    %2610 = vmatpush1.msra.mxu0 0.0
    %2611 = vmatprep.subr.mxu0 0.0
    %2612 = vmatpush1.msra.mxu0 0.0
    %2613 = vmatprep.subr.mxu0 0.0
    %2614 = vmatpush1.msra.mxu0 0.0
    %2615 = vmatprep.subr.mxu0 0.0
    %2616 = vmatpush1.msra.mxu0 0.0
    %2617 = vmatprep.subr.mxu0 0.0
    %2618 = vmatpush1.msra.mxu0 0.0
    %2619 = vmatprep.subr.mxu0 0.0
    %2620 = vmatpush1.msra.mxu0 0.0
    %2621 = vmatprep.subr.mxu0 0.0
    %2622 = vmatpush1.msra.mxu0 0.0
    %2623 = vmatprep.subr.mxu0 0.0
    %2624 = vmatpush1.msra.mxu0 0.0
    %2625 = vmatprep.subr.mxu0 0.0
    %2626 = vmatpush1.msra.mxu0 0.0
    %2627 = vmatprep.subr.mxu0 0.0
    %2628 = vmatpush1.msra.mxu0 0.0
    %2629 = vmatprep.subr.mxu0 0.0
    %2630 = vmatpush1.msra.mxu0 0.0
    %2631 = vmatprep.subr.mxu0 0.0
    %2632 = vmatpush1.msra.mxu0 0.0
    %2633 = vmatprep.subr.mxu0 0.0
    %2634 = vmatpush1.msra.mxu0 0.0
    %2635 = vmatprep.subr.mxu0 0.0
    %2636 = vmatpush1.msra.mxu0 0.0
    %2637 = vmatprep.subr.mxu0 0.0
    %2638 = vmatpush1.msra.mxu0 0.0
    %2639 = vmatprep.subr.mxu0 0.0
    %2640 = vmatpush1.msra.mxu0 0.0
    %2641 = vmatprep.subr.mxu0 0.0
    %2642 = vmatpush1.msra.mxu0 0.0
    %2643 = vmatprep.mubr.f32.mxu0 0.0
    %2644 = vmatmul.mubr.f32.gmra.mrb[0].mxu0 %v2577
    %v2645 = vpop.f32.mrb[0].mxu0
    %v2646 = vadd.f32 0.0, %v2645
    %v2647 = vpop.f32.mrb[0].mxu0
    %2648 = vdwg.mxu0
    %v2649 = vld [vmem:[%s61] sm:$0xff]
    %v2650 = vld [vmem:[%s61 + $0x8] sm:$0xff]
    %v2651 = vld [vmem:[%s61 + $0x10] sm:$0xff]
    %v2652 = vld [vmem:[%s61 + $0x18] sm:$0xff]
    %v2654 = vsel %vm275, %v2646, 0
    %2656 = vmatprep.subr.mxu0 0.0
    %2657 = vmatpush1.msra.mxu0 %v2649
    %2658 = vmatprep.subr.mxu0 0.0
    %2659 = vmatpush1.msra.mxu0 %v2650
    %2660 = vmatprep.subr.mxu0 0.0
    %2661 = vmatpush1.msra.mxu0 %v2651
    %2662 = vmatprep.subr.mxu0 0.0
    %2663 = vmatpush1.msra.mxu0 %v2652
    %2664 = vmatprep.subr.mxu0 0.0
    %2665 = vmatpush1.msra.mxu0 0.0
    %2666 = vmatprep.subr.mxu0 0.0
    %2667 = vmatpush1.msra.mxu0 0.0
    %2668 = vmatprep.subr.mxu0 0.0
    %2669 = vmatpush1.msra.mxu0 0.0
    %2670 = vmatprep.subr.mxu0 0.0
    %2671 = vmatpush1.msra.mxu0 0.0
    %2672 = vmatprep.subr.mxu0 0.0
    %2673 = vmatpush1.msra.mxu0 0.0
    %2674 = vmatprep.subr.mxu0 0.0
    %2675 = vmatpush1.msra.mxu0 0.0
    %2676 = vmatprep.subr.mxu0 0.0
    %2677 = vmatpush1.msra.mxu0 0.0
    %2678 = vmatprep.subr.mxu0 0.0
    %2679 = vmatpush1.msra.mxu0 0.0
    %2680 = vmatprep.subr.mxu0 0.0
    %2681 = vmatpush1.msra.mxu0 0.0
    %2682 = vmatprep.subr.mxu0 0.0
    %2683 = vmatpush1.msra.mxu0 0.0
    %2684 = vmatprep.subr.mxu0 0.0
    %2685 = vmatpush1.msra.mxu0 0.0
    %2686 = vmatprep.subr.mxu0 0.0
    %2687 = vmatpush1.msra.mxu0 0.0
    %2688 = vmatprep.subr.mxu0 0.0
    %2689 = vmatpush1.msra.mxu0 0.0
    %2690 = vmatprep.subr.mxu0 0.0
    %2691 = vmatpush1.msra.mxu0 0.0
    %2692 = vmatprep.subr.mxu0 0.0
    %2693 = vmatpush1.msra.mxu0 0.0
    %2694 = vmatprep.subr.mxu0 0.0
    %2695 = vmatpush1.msra.mxu0 0.0
    %2696 = vmatprep.subr.mxu0 0.0
    %2697 = vmatpush1.msra.mxu0 0.0
    %2698 = vmatprep.subr.mxu0 0.0
    %2699 = vmatpush1.msra.mxu0 0.0
    %2700 = vmatprep.subr.mxu0 0.0
    %2701 = vmatpush1.msra.mxu0 0.0
    %2702 = vmatprep.subr.mxu0 0.0
    %2703 = vmatpush1.msra.mxu0 0.0
    %2704 = vmatprep.subr.mxu0 0.0
    %2705 = vmatpush1.msra.mxu0 0.0
    %2706 = vmatprep.subr.mxu0 0.0
    %2707 = vmatpush1.msra.mxu0 0.0
    %2708 = vmatprep.subr.mxu0 0.0
    %2709 = vmatpush1.msra.mxu0 0.0
    %2710 = vmatprep.subr.mxu0 0.0
    %2711 = vmatpush1.msra.mxu0 0.0
    %2712 = vmatprep.subr.mxu0 0.0
    %2713 = vmatpush1.msra.mxu0 0.0
    %2714 = vmatprep.subr.mxu0 0.0
    %2715 = vmatpush1.msra.mxu0 0.0
    %2716 = vmatprep.subr.mxu0 0.0
    %2717 = vmatpush1.msra.mxu0 0.0
    %2718 = vmatprep.subr.mxu0 0.0
    %2719 = vmatpush1.msra.mxu0 0.0
    %2720 = vmatprep.mubr.f32.mxu0 0.0
    %2721 = vmatmul.mubr.f32.gmra.mrb[0].mxu0 %v2654
    %v2722 = vpop.f32.mrb[0].mxu0
    %v2723 = vadd.f32 0.0, %v2722
    %v2724 = vpop.f32.mrb[0].mxu0
    %2725 = vdwg.mxu0
    %v2727 = vsel %vm275, %v2565, 0
    %2729 = vmatprep.subr.mxu0 0.0
    %2730 = vmatpush1.msra.mxu0 %v2572
    %2731 = vmatprep.subr.mxu0 0.0
    %2732 = vmatpush1.msra.mxu0 %v2573
    %2733 = vmatprep.subr.mxu0 0.0
    %2734 = vmatpush1.msra.mxu0 %v2574
    %2735 = vmatprep.subr.mxu0 0.0
    %2736 = vmatpush1.msra.mxu0 %v2575
    %2737 = vmatprep.subr.mxu0 0.0
    %2738 = vmatpush1.msra.mxu0 0.0
    %2739 = vmatprep.subr.mxu0 0.0
    %2740 = vmatpush1.msra.mxu0 0.0
    %2741 = vmatprep.subr.mxu0 0.0
    %2742 = vmatpush1.msra.mxu0 0.0
    %2743 = vmatprep.subr.mxu0 0.0
    %2744 = vmatpush1.msra.mxu0 0.0
    %2745 = vmatprep.subr.mxu0 0.0
    %2746 = vmatpush1.msra.mxu0 0.0
    %2747 = vmatprep.subr.mxu0 0.0
    %2748 = vmatpush1.msra.mxu0 0.0
    %2749 = vmatprep.subr.mxu0 0.0
    %2750 = vmatpush1.msra.mxu0 0.0
    %2751 = vmatprep.subr.mxu0 0.0
    %2752 = vmatpush1.msra.mxu0 0.0
    %2753 = vmatprep.subr.mxu0 0.0
    %2754 = vmatpush1.msra.mxu0 0.0
    %2755 = vmatprep.subr.mxu0 0.0
    %2756 = vmatpush1.msra.mxu0 0.0
    %2757 = vmatprep.subr.mxu0 0.0
    %2758 = vmatpush1.msra.mxu0 0.0
    %2759 = vmatprep.subr.mxu0 0.0
    %2760 = vmatpush1.msra.mxu0 0.0
    %2761 = vmatprep.subr.mxu0 0.0
    %2762 = vmatpush1.msra.mxu0 0.0
    %2763 = vmatprep.subr.mxu0 0.0
    %2764 = vmatpush1.msra.mxu0 0.0
    %2765 = vmatprep.subr.mxu0 0.0
    %2766 = vmatpush1.msra.mxu0 0.0
    %2767 = vmatprep.subr.mxu0 0.0
    %2768 = vmatpush1.msra.mxu0 0.0
    %2769 = vmatprep.subr.mxu0 0.0
    %2770 = vmatpush1.msra.mxu0 0.0
    %2771 = vmatprep.subr.mxu0 0.0
    %2772 = vmatpush1.msra.mxu0 0.0
    %2773 = vmatprep.subr.mxu0 0.0
    %2774 = vmatpush1.msra.mxu0 0.0
    %2775 = vmatprep.subr.mxu0 0.0
    %2776 = vmatpush1.msra.mxu0 0.0
    %2777 = vmatprep.subr.mxu0 0.0
    %2778 = vmatpush1.msra.mxu0 0.0
    %2779 = vmatprep.subr.mxu0 0.0
    %2780 = vmatpush1.msra.mxu0 0.0
    %2781 = vmatprep.subr.mxu0 0.0
    %2782 = vmatpush1.msra.mxu0 0.0
    %2783 = vmatprep.subr.mxu0 0.0
    %2784 = vmatpush1.msra.mxu0 0.0
    %2785 = vmatprep.subr.mxu0 0.0
    %2786 = vmatpush1.msra.mxu0 0.0
    %2787 = vmatprep.subr.mxu0 0.0
    %2788 = vmatpush1.msra.mxu0 0.0
    %2789 = vmatprep.subr.mxu0 0.0
    %2790 = vmatpush1.msra.mxu0 0.0
    %2791 = vmatprep.subr.mxu0 0.0
    %2792 = vmatpush1.msra.mxu0 0.0
    %2793 = vmatprep.mubr.f32.mxu0 0.0
    %2794 = vmatmul.mubr.f32.gmra.mrb[0].mxu0 %v2727
    %v2795 = vpop.f32.mrb[0].mxu0
    %v2796 = vadd.f32 %v2723, %v2795
    %v2797 = vpop.f32.mrb[0].mxu0
    %2798 = vdwg.mxu0
    %v2800 = vsel %vm807, %v2570, 0
    %2802 = vmatprep.subr.mxu0 0.0
    %2803 = vmatpush1.msra.mxu0 %v2565
    %2804 = vmatprep.subr.mxu0 0.0
    %2805 = vmatpush1.msra.mxu0 0.0
    %2806 = vmatprep.subr.mxu0 0.0
    %2807 = vmatpush1.msra.mxu0 0.0
    %2808 = vmatprep.subr.mxu0 0.0
    %2809 = vmatpush1.msra.mxu0 0.0
    %2810 = vmatprep.subr.mxu0 0.0
    %2811 = vmatpush1.msra.mxu0 0.0
    %2812 = vmatprep.subr.mxu0 0.0
    %2813 = vmatpush1.msra.mxu0 0.0
    %2814 = vmatprep.subr.mxu0 0.0
    %2815 = vmatpush1.msra.mxu0 0.0
    %2816 = vmatprep.subr.mxu0 0.0
    %2817 = vmatpush1.msra.mxu0 0.0
    %2818 = vmatprep.subr.mxu0 0.0
    %2819 = vmatpush1.msra.mxu0 0.0
    %2820 = vmatprep.subr.mxu0 0.0
    %2821 = vmatpush1.msra.mxu0 0.0
    %2822 = vmatprep.subr.mxu0 0.0
    %2823 = vmatpush1.msra.mxu0 0.0
    %2824 = vmatprep.subr.mxu0 0.0
    %2825 = vmatpush1.msra.mxu0 0.0
    %2826 = vmatprep.subr.mxu0 0.0
    %2827 = vmatpush1.msra.mxu0 0.0
    %2828 = vmatprep.subr.mxu0 0.0
    %2829 = vmatpush1.msra.mxu0 0.0
    %2830 = vmatprep.subr.mxu0 0.0
    %2831 = vmatpush1.msra.mxu0 0.0
    %2832 = vmatprep.subr.mxu0 0.0
    %2833 = vmatpush1.msra.mxu0 0.0
    %2834 = vmatprep.subr.mxu0 0.0
    %2835 = vmatpush1.msra.mxu0 0.0
    %2836 = vmatprep.subr.mxu0 0.0
    %2837 = vmatpush1.msra.mxu0 0.0
    %2838 = vmatprep.subr.mxu0 0.0
    %2839 = vmatpush1.msra.mxu0 0.0
    %2840 = vmatprep.subr.mxu0 0.0
    %2841 = vmatpush1.msra.mxu0 0.0
    %2842 = vmatprep.subr.mxu0 0.0
    %2843 = vmatpush1.msra.mxu0 0.0
    %2844 = vmatprep.subr.mxu0 0.0
    %2845 = vmatpush1.msra.mxu0 0.0
    %2846 = vmatprep.subr.mxu0 0.0
    %2847 = vmatpush1.msra.mxu0 0.0
    %2848 = vmatprep.subr.mxu0 0.0
    %2849 = vmatpush1.msra.mxu0 0.0
    %2850 = vmatprep.subr.mxu0 0.0
    %2851 = vmatpush1.msra.mxu0 0.0
    %2852 = vmatprep.subr.mxu0 0.0
    %2853 = vmatpush1.msra.mxu0 0.0
    %2854 = vmatprep.subr.mxu0 0.0
    %2855 = vmatpush1.msra.mxu0 0.0
    %2856 = vmatprep.subr.mxu0 0.0
    %2857 = vmatpush1.msra.mxu0 0.0
    %2858 = vmatprep.subr.mxu0 0.0
    %2859 = vmatpush1.msra.mxu0 0.0
    %2860 = vmatprep.subr.mxu0 0.0
    %2861 = vmatpush1.msra.mxu0 0.0
    %2862 = vmatprep.subr.mxu0 0.0
    %2863 = vmatpush1.msra.mxu0 0.0
    %2864 = vmatprep.subr.mxu0 0.0
    %2865 = vmatpush1.msra.mxu0 0.0
    %2866 = vmatprep.mubr.f32.mxu0 0.0
    %2867 = vmatmul.mubr.f32.gmra.mrb[0].mxu0 %v2800
    %v2868 = vpop.f32.mrb[0].mxu0
    %v2869 = vadd.f32 0.0, %v2868
    %v2870 = vpop.f32.mrb[0].mxu0
    %2871 = vdwg.mxu0
    %s2872 = scalar_lea.vmem %s61, 64
    %v2873 = vld [vmem:[%s2872] sm:$0xff]
    %v2874 = vld [vmem:[%s2872 + $0x8] sm:$0xff]
    %v2875 = vld [vmem:[%s2872 + $0x10] sm:$0xff]
    %v2876 = vld [vmem:[%s2872 + $0x18] sm:$0xff]
    %v2878 = vsel %vm275, %v2869, 0
    %2880 = vmatprep.subr.mxu0 0.0
    %2881 = vmatpush1.msra.mxu0 %v2873
    %2882 = vmatprep.subr.mxu0 0.0
    %2883 = vmatpush1.msra.mxu0 %v2874
    %2884 = vmatprep.subr.mxu0 0.0
    %2885 = vmatpush1.msra.mxu0 %v2875
    %2886 = vmatprep.subr.mxu0 0.0
    %2887 = vmatpush1.msra.mxu0 %v2876
    %2888 = vmatprep.subr.mxu0 0.0
    %2889 = vmatpush1.msra.mxu0 0.0
    %2890 = vmatprep.subr.mxu0 0.0
    %2891 = vmatpush1.msra.mxu0 0.0
    %2892 = vmatprep.subr.mxu0 0.0
    %2893 = vmatpush1.msra.mxu0 0.0
    %2894 = vmatprep.subr.mxu0 0.0
    %2895 = vmatpush1.msra.mxu0 0.0
    %2896 = vmatprep.subr.mxu0 0.0
    %2897 = vmatpush1.msra.mxu0 0.0
    %2898 = vmatprep.subr.mxu0 0.0
    %2899 = vmatpush1.msra.mxu0 0.0
    %2900 = vmatprep.subr.mxu0 0.0
    %2901 = vmatpush1.msra.mxu0 0.0
    %2902 = vmatprep.subr.mxu0 0.0
    %2903 = vmatpush1.msra.mxu0 0.0
    %2904 = vmatprep.subr.mxu0 0.0
    %2905 = vmatpush1.msra.mxu0 0.0
    %2906 = vmatprep.subr.mxu0 0.0
    %2907 = vmatpush1.msra.mxu0 0.0
    %2908 = vmatprep.subr.mxu0 0.0
    %2909 = vmatpush1.msra.mxu0 0.0
    %2910 = vmatprep.subr.mxu0 0.0
    %2911 = vmatpush1.msra.mxu0 0.0
    %2912 = vmatprep.subr.mxu0 0.0
    %2913 = vmatpush1.msra.mxu0 0.0
    %2914 = vmatprep.subr.mxu0 0.0
    %2915 = vmatpush1.msra.mxu0 0.0
    %2916 = vmatprep.subr.mxu0 0.0
    %2917 = vmatpush1.msra.mxu0 0.0
    %2918 = vmatprep.subr.mxu0 0.0
    %2919 = vmatpush1.msra.mxu0 0.0
    %2920 = vmatprep.subr.mxu0 0.0
    %2921 = vmatpush1.msra.mxu0 0.0
    %2922 = vmatprep.subr.mxu0 0.0
    %2923 = vmatpush1.msra.mxu0 0.0
    %2924 = vmatprep.subr.mxu0 0.0
    %2925 = vmatpush1.msra.mxu0 0.0
    %2926 = vmatprep.subr.mxu0 0.0
    %2927 = vmatpush1.msra.mxu0 0.0
    %2928 = vmatprep.subr.mxu0 0.0
    %2929 = vmatpush1.msra.mxu0 0.0
    %2930 = vmatprep.subr.mxu0 0.0
    %2931 = vmatpush1.msra.mxu0 0.0
    %2932 = vmatprep.subr.mxu0 0.0
    %2933 = vmatpush1.msra.mxu0 0.0
    %2934 = vmatprep.subr.mxu0 0.0
    %2935 = vmatpush1.msra.mxu0 0.0
    %2936 = vmatprep.subr.mxu0 0.0
    %2937 = vmatpush1.msra.mxu0 0.0
    %2938 = vmatprep.subr.mxu0 0.0
    %2939 = vmatpush1.msra.mxu0 0.0
    %2940 = vmatprep.subr.mxu0 0.0
    %2941 = vmatpush1.msra.mxu0 0.0
    %2942 = vmatprep.subr.mxu0 0.0
    %2943 = vmatpush1.msra.mxu0 0.0
    %2944 = vmatprep.mubr.f32.mxu0 0.0
    %2945 = vmatmul.mubr.f32.gmra.mrb[0].mxu0 %v2878
    %v2946 = vpop.f32.mrb[0].mxu0
    %v2947 = vadd.f32 0.0, %v2946
    %v2948 = vpop.f32.mrb[0].mxu0
    %2949 = vdwg.mxu0
    %v2950 = vadd.f32 %v2796, %v2947
    %v2951 = vld [vmem:[%s63] sm:$0x1]
    %v2953 = vlaneseq
    %v2954 = vshrl.u32 %v2953, 7
    %v2955 = vsub.s32 0, %v2954
    %v2956 = vrot.slane %v2951, %v2955
    %v2958 = vadd.f32 %v2950, %v2956
    %v2959 = vmul.f32 %v2958, 0.70710677
    %v2960 = vand.u32 2147483647, %v2959
    %v2961 = vmul.f32 %v2960, 0.3275911
    %v2962 = vadd.f32 %v2961, 1.0
    %v2963 = vrcp.pop %v2962
    %v2964 = vmul.f32 1.0, %v2963
    %v2965 = vmul.f32 %v2964, 1.0614054
    %v2966 = vadd.f32 %v2965, -1.4531521
    %v2967 = vmul.f32 %v2964, %v2966
    %v2968 = vadd.f32 %v2967, 1.4214138
    %v2969 = vmul.f32 %v2964, %v2968
    %v2970 = vadd.f32 %v2969, -0.28449672
    %v2971 = vmul.f32 %v2964, %v2970
    %v2972 = vadd.f32 %v2971, 0.2548296
    %v2973 = vmul.f32 %v2964, %v2972
    %v2974 = vsub.f32 0.0, %v2960
    %v2975 = vmul.f32 %v2974, %v2960
    %v2976 = vmul.f32 %v2975, 1.442695
    %v2977 = vpow.pop %v2976
    %v2978 = vmul.f32 %v2973, %v2977
    %v2979 = vsub.f32 1.0, %v2978
    %vm2980 = vcmp.lt.f32.partialorder %v2959, 0.0
    %v2981 = vsub.f32 0.0, %v2979
    %v2982 = vsel %vm2980, %v2981, %v2979
    %v2983 = vmul.f32 %v2958, 0.5
    %v2984 = vadd.f32 %v2982, 1.0
    %v2985 = vmul.f32 %v2983, %v2984
    %v2987 = vsel %vm807, %v2568, 0
    %2989 = vmatprep.subr.mxu0 0.0
    %2990 = vmatpush1.msra.mxu0 %v2985
    %2991 = vmatprep.subr.mxu0 0.0
    %2992 = vmatpush1.msra.mxu0 0.0
    %2993 = vmatprep.subr.mxu0 0.0
    %2994 = vmatpush1.msra.mxu0 0.0
    %2995 = vmatprep.subr.mxu0 0.0
    %2996 = vmatpush1.msra.mxu0 0.0
    %2997 = vmatprep.subr.mxu0 0.0
    %2998 = vmatpush1.msra.mxu0 0.0
    %2999 = vmatprep.subr.mxu0 0.0
    %3000 = vmatpush1.msra.mxu0 0.0
    %3001 = vmatprep.subr.mxu0 0.0
    %3002 = vmatpush1.msra.mxu0 0.0
    %3003 = vmatprep.subr.mxu0 0.0
    %3004 = vmatpush1.msra.mxu0 0.0
    %3005 = vmatprep.subr.mxu0 0.0
    %3006 = vmatpush1.msra.mxu0 0.0
    %3007 = vmatprep.subr.mxu0 0.0
    %3008 = vmatpush1.msra.mxu0 0.0
    %3009 = vmatprep.subr.mxu0 0.0
    %3010 = vmatpush1.msra.mxu0 0.0
    %3011 = vmatprep.subr.mxu0 0.0
    %3012 = vmatpush1.msra.mxu0 0.0
    %3013 = vmatprep.subr.mxu0 0.0
    %3014 = vmatpush1.msra.mxu0 0.0
    %3015 = vmatprep.subr.mxu0 0.0
    %3016 = vmatpush1.msra.mxu0 0.0
    %3017 = vmatprep.subr.mxu0 0.0
    %3018 = vmatpush1.msra.mxu0 0.0
    %3019 = vmatprep.subr.mxu0 0.0
    %3020 = vmatpush1.msra.mxu0 0.0
    %3021 = vmatprep.subr.mxu0 0.0
    %3022 = vmatpush1.msra.mxu0 0.0
    %3023 = vmatprep.subr.mxu0 0.0
    %3024 = vmatpush1.msra.mxu0 0.0
    %3025 = vmatprep.subr.mxu0 0.0
    %3026 = vmatpush1.msra.mxu0 0.0
    %3027 = vmatprep.subr.mxu0 0.0
    %3028 = vmatpush1.msra.mxu0 0.0
    %3029 = vmatprep.subr.mxu0 0.0
    %3030 = vmatpush1.msra.mxu0 0.0
    %3031 = vmatprep.subr.mxu0 0.0
    %3032 = vmatpush1.msra.mxu0 0.0
    %3033 = vmatprep.subr.mxu0 0.0
    %3034 = vmatpush1.msra.mxu0 0.0
    %3035 = vmatprep.subr.mxu0 0.0
    %3036 = vmatpush1.msra.mxu0 0.0
    %3037 = vmatprep.subr.mxu0 0.0
    %3038 = vmatpush1.msra.mxu0 0.0
    %3039 = vmatprep.subr.mxu0 0.0
    %3040 = vmatpush1.msra.mxu0 0.0
    %3041 = vmatprep.subr.mxu0 0.0
    %3042 = vmatpush1.msra.mxu0 0.0
    %3043 = vmatprep.subr.mxu0 0.0
    %3044 = vmatpush1.msra.mxu0 0.0
    %3045 = vmatprep.subr.mxu0 0.0
    %3046 = vmatpush1.msra.mxu0 0.0
    %3047 = vmatprep.subr.mxu0 0.0
    %3048 = vmatpush1.msra.mxu0 0.0
    %3049 = vmatprep.subr.mxu0 0.0
    %3050 = vmatpush1.msra.mxu0 0.0
    %3051 = vmatprep.subr.mxu0 0.0
    %3052 = vmatpush1.msra.mxu0 0.0
    %3053 = vmatprep.mubr.f32.mxu0 0.0
    %3054 = vmatmul.mubr.f32.gmra.mrb[0].mxu0 %v2987
    %v3055 = vpop.f32.mrb[0].mxu0
    %v3056 = vadd.f32 0.0, %v3055
    %v3057 = vpop.f32.mrb[0].mxu0
    %3058 = vdwg.mxu0
    %v3059 = vld [vmem:[%s65] sm:$0xff]
    %v3060 = vld [vmem:[%s65 + $0x8] sm:$0xff]
    %v3061 = vld [vmem:[%s65 + $0x10] sm:$0xff]
    %v3062 = vld [vmem:[%s65 + $0x18] sm:$0xff]
    %v3063 = vld [vmem:[%s67] sm:$0x1]
    %v3065 = vlaneseq
    %v3066 = vshrl.u32 %v3065, 7
    %v3067 = vsub.s32 0, %v3066
    %v3068 = vrot.slane %v3063, %v3067
    %v3071 = vsel %vm275, %v3056, 0
    %3073 = vmatprep.subr.mxu0 0.0
    %3074 = vmatpush1.msra.mxu0 %v3059
    %3075 = vmatprep.subr.mxu0 0.0
    %3076 = vmatpush1.msra.mxu0 %v3060
    %3077 = vmatprep.subr.mxu0 0.0
    %3078 = vmatpush1.msra.mxu0 %v3061
    %3079 = vmatprep.subr.mxu0 0.0
    %3080 = vmatpush1.msra.mxu0 %v3062
    %3081 = vmatprep.subr.mxu0 0.0
    %3082 = vmatpush1.msra.mxu0 0.0
    %3083 = vmatprep.subr.mxu0 0.0
    %3084 = vmatpush1.msra.mxu0 0.0
    %3085 = vmatprep.subr.mxu0 0.0
    %3086 = vmatpush1.msra.mxu0 0.0
    %3087 = vmatprep.subr.mxu0 0.0
    %3088 = vmatpush1.msra.mxu0 0.0
    %3089 = vmatprep.subr.mxu0 0.0
    %3090 = vmatpush1.msra.mxu0 0.0
    %3091 = vmatprep.subr.mxu0 0.0
    %3092 = vmatpush1.msra.mxu0 0.0
    %3093 = vmatprep.subr.mxu0 0.0
    %3094 = vmatpush1.msra.mxu0 0.0
    %3095 = vmatprep.subr.mxu0 0.0
    %3096 = vmatpush1.msra.mxu0 0.0
    %3097 = vmatprep.subr.mxu0 0.0
    %3098 = vmatpush1.msra.mxu0 0.0
    %3099 = vmatprep.subr.mxu0 0.0
    %3100 = vmatpush1.msra.mxu0 0.0
    %3101 = vmatprep.subr.mxu0 0.0
    %3102 = vmatpush1.msra.mxu0 0.0
    %3103 = vmatprep.subr.mxu0 0.0
    %3104 = vmatpush1.msra.mxu0 0.0
    %3105 = vmatprep.subr.mxu0 0.0
    %3106 = vmatpush1.msra.mxu0 0.0
    %3107 = vmatprep.subr.mxu0 0.0
    %3108 = vmatpush1.msra.mxu0 0.0
    %3109 = vmatprep.subr.mxu0 0.0
    %3110 = vmatpush1.msra.mxu0 0.0
    %3111 = vmatprep.subr.mxu0 0.0
    %3112 = vmatpush1.msra.mxu0 0.0
    %3113 = vmatprep.subr.mxu0 0.0
    %3114 = vmatpush1.msra.mxu0 0.0
    %3115 = vmatprep.subr.mxu0 0.0
    %3116 = vmatpush1.msra.mxu0 0.0
    %3117 = vmatprep.subr.mxu0 0.0
    %3118 = vmatpush1.msra.mxu0 0.0
    %3119 = vmatprep.subr.mxu0 0.0
    %3120 = vmatpush1.msra.mxu0 0.0
    %3121 = vmatprep.subr.mxu0 0.0
    %3122 = vmatpush1.msra.mxu0 0.0
    %3123 = vmatprep.subr.mxu0 0.0
    %3124 = vmatpush1.msra.mxu0 0.0
    %3125 = vmatprep.subr.mxu0 0.0
    %3126 = vmatpush1.msra.mxu0 0.0
    %3127 = vmatprep.subr.mxu0 0.0
    %3128 = vmatpush1.msra.mxu0 0.0
    %3129 = vmatprep.subr.mxu0 0.0
    %3130 = vmatpush1.msra.mxu0 0.0
    %3131 = vmatprep.subr.mxu0 0.0
    %3132 = vmatpush1.msra.mxu0 0.0
    %3133 = vmatprep.subr.mxu0 0.0
    %3134 = vmatpush1.msra.mxu0 0.0
    %3135 = vmatprep.subr.mxu0 0.0
    %3136 = vmatpush1.msra.mxu0 0.0
    %3137 = vmatprep.mubr.f32.mxu0 0.0
    %3138 = vmatmul.mubr.f32.gmra.mrb[0].mxu0 %v3071
    %v3139 = vpop.f32.mrb[0].mxu0
    %v3140 = vadd.f32 %v3068, %v3139
    %v3141 = vpop.f32.mrb[0].mxu0
    %3142 = vdwg.mxu0
    %v3143 = vmul.f32 %v3140, 0.70710677
    %v3144 = vand.u32 2147483647, %v3143
    %v3145 = vmul.f32 %v3144, 0.3275911
    %v3146 = vadd.f32 %v3145, 1.0
    %v3147 = vrcp.pop %v3146
    %v3148 = vmul.f32 1.0, %v3147
    %v3149 = vmul.f32 %v3148, 1.0614054
    %v3150 = vadd.f32 %v3149, -1.4531521
    %v3151 = vmul.f32 %v3148, %v3150
    %v3152 = vadd.f32 %v3151, 1.4214138
    %v3153 = vmul.f32 %v3148, %v3152
    %v3154 = vadd.f32 %v3153, -0.28449672
    %v3155 = vmul.f32 %v3148, %v3154
    %v3156 = vadd.f32 %v3155, 0.2548296
    %v3157 = vmul.f32 %v3148, %v3156
    %v3158 = vsub.f32 0.0, %v3144
    %v3159 = vmul.f32 %v3158, %v3144
    %v3160 = vmul.f32 %v3159, 1.442695
    %v3161 = vpow.pop %v3160
    %v3162 = vmul.f32 %v3157, %v3161
    %v3163 = vsub.f32 1.0, %v3162
    %vm3164 = vcmp.lt.f32.partialorder %v3143, 0.0
    %v3165 = vsub.f32 0.0, %v3163
    %v3166 = vsel %vm3164, %v3165, %v3163
    %v3167 = vmul.f32 %v3140, 0.5
    %v3168 = vadd.f32 %v3166, 1.0
    %v3169 = vmul.f32 %v3167, %v3168
    %vm3170 = vcmask 257024
    %3171 = vst.msk [vmem:[#allocation2] sm:$0xf] %vm3170, %v3169
    // Predicated region
    $region138: #{_encode_impl.1} parent=1 // pred_check
      _
    $region139: #{_encode_impl.1} parent=1 // pred_check_branch
      %3173 = sbr.rel (0) target = $region141
    $region140: #{_encode_impl.1} parent=1 // pred_region
      %s3175 = ssub.s32 64, 64
      %3176 = vsyncadd [#allocation3], %s3175
      %s3178 = sshll.u32 [#allocation2], 4
      %s3179 = int_to_ptr.vmem [resolvable:$true] %s3178
      %3181 = dma.vmem_to_hbm [thread:$0]  %s3179, 64, %s69, [#allocation3]
    $region141: #{_encode_impl.1} parent=1 // pred_fallthru
      _
    // Predicated region
    $region142: #{_encode_impl.1} parent=1 // pred_check
      _
    $region143: #{_encode_impl.1} parent=1 // pred_check_branch
      %3183 = sbr.rel (0) target = $region145
    $region144: #{_encode_impl.1} parent=1 // pred_region
      %3184 = dma.done [#allocation3], 64
    $region145: #{_encode_impl.1} parent=1 // pred_fallthru
      _
    %3185 = vsyncpa [#allocation3], 1

</llo_original>
